<compile_context>
chip_gen: v6e
topology: v6e:2x2x1
jax: 0.10.0
libtpu: 0.0.40
codegen_flags: <defaults>
</compile_context>

<pallas_src>
import functools

import numpy as np
import jax
import jax.numpy as jnp
from jax.experimental import pallas as pl
from jax.experimental.pallas import tpu as pltpu


# ----------------------------------------------------------------------------- utilities
def round_up(x, m):
    return (x + m - 1) // m * m


def _apply_act(y, act):
    if act == "relu":
        return jnp.maximum(y, 0.0)
    if act == "silu":
        return y * jax.nn.sigmoid(y)
    if act == "tanh":
        return jnp.tanh(y)
    if act == "sigmoid":
        return jax.nn.sigmoid(y)
    return y


def _mm_tiles(M, K, N):
    Mp = round_up(M, 8)
    tm = 512 if Mp >= 512 else Mp
    Mp = round_up(Mp, tm)
    Kp = round_up(K, 128)
    tk = 256 if Kp >= 256 else Kp
    Kp = round_up(Kp, tk)
    Np = round_up(N, 128)
    tn = 256 if Np >= 256 else Np
    Np = round_up(Np, tn)
    return Mp, Kp, Np, tm, tk, tn


# ------------------------------------------------------------- fused matmul + affine + act
@functools.lru_cache(maxsize=None)
def _mm_call(M, K, N, act):
    Mp, Kp, Np, tm, tk, tn = _mm_tiles(M, K, N)
    grid = (Mp // tm, Np // tn, Kp // tk)

    def kernel(x_ref, w_ref, s_ref, b_ref, o_ref, acc_ref):
        @pl.when(pl.program_id(2) == 0)
        def _():
            acc_ref[...] = jnp.zeros_like(acc_ref)

        acc_ref[...] += jnp.dot(x_ref[...], w_ref[...],
                                preferred_element_type=jnp.float32)

        @pl.when(pl.program_id(2) == pl.num_programs(2) - 1)
        def _():
            y = acc_ref[...] * s_ref[...] + b_ref[...]
            o_ref[...] = _apply_act(y, act)

    call = pl.pallas_call(
        kernel,
        out_shape=jax.ShapeDtypeStruct((Mp, Np), jnp.float32),
        grid_spec=pltpu.PrefetchScalarGridSpec(
            num_scalar_prefetch=0,
            grid=grid,
            in_specs=[
                pl.BlockSpec((tm, tk), lambda i, j, k: (i, k)),
                pl.BlockSpec((tk, tn), lambda i, j, k: (k, j)),
                pl.BlockSpec((1, tn), lambda i, j, k: (0, j)),
                pl.BlockSpec((1, tn), lambda i, j, k: (0, j)),
            ],
            out_specs=pl.BlockSpec((tm, tn), lambda i, j, k: (i, j)),
            scratch_shapes=[pltpu.VMEM((tm, tn), jnp.float32)],
        ),
        compiler_params=pltpu.CompilerParams(
            dimension_semantics=("parallel", "parallel", "arbitrary")),
    )
    return jax.jit(call), (Mp, Kp, Np)


def matmul_affine_act(pat, w2, scale, bias, act="none"):
    M, K = pat.shape
    N = w2.shape[1]
    call, (Mp, Kp, Np) = _mm_call(M, K, N, act)
    xp = pat.astype(jnp.bfloat16)
    if (Mp, Kp) != (M, K):
        xp = jnp.pad(xp, ((0, Mp - M), (0, Kp - K)))
    wp = w2.astype(jnp.bfloat16)
    if (Kp, Np) != (K, N):
        wp = jnp.pad(wp, ((0, Kp - K), (0, Np - N)))
    sp = scale.reshape(1, N).astype(jnp.float32)
    bp = bias.reshape(1, N).astype(jnp.float32)
    if Np != N:
        sp = jnp.pad(sp, ((0, 0), (0, Np - N)))
        bp = jnp.pad(bp, ((0, 0), (0, Np - N)))
    out = call(xp, wp, sp, bp)
    if (Mp, Np) != (M, N):
        out = out[:M, :N]
    return out


# ---------------------------------------------- gated conv matmul (conv+gate+BN+SiLU fused)
@functools.lru_cache(maxsize=None)
def _gated_mm_call(M, K, N):
    Mp, Kp, Np, tm, tk, tn = _mm_tiles(M, K, N)
    grid = (Mp // tm, Np // tn, Kp // tk)

    def kernel(x_ref, wa_ref, wg_ref, ba_ref, bg_ref, s_ref, b_ref, o_ref,
               acc_a, acc_g):
        @pl.when(pl.program_id(2) == 0)
        def _():
            acc_a[...] = jnp.zeros_like(acc_a)
            acc_g[...] = jnp.zeros_like(acc_g)

        x = x_ref[...]
        acc_a[...] += jnp.dot(x, wa_ref[...], preferred_element_type=jnp.float32)
        acc_g[...] += jnp.dot(x, wg_ref[...], preferred_element_type=jnp.float32)

        @pl.when(pl.program_id(2) == pl.num_programs(2) - 1)
        def _():
            a = acc_a[...] + ba_ref[...]
            g = acc_g[...] + bg_ref[...]
            y = (a * jax.nn.sigmoid(g)) * s_ref[...] + b_ref[...]
            o_ref[...] = y * jax.nn.sigmoid(y)   # SiLU

    call = pl.pallas_call(
        kernel,
        out_shape=jax.ShapeDtypeStruct((Mp, Np), jnp.float32),
        grid_spec=pltpu.PrefetchScalarGridSpec(
            num_scalar_prefetch=0,
            grid=grid,
            in_specs=[
                pl.BlockSpec((tm, tk), lambda i, j, k: (i, k)),
                pl.BlockSpec((tk, tn), lambda i, j, k: (k, j)),
                pl.BlockSpec((tk, tn), lambda i, j, k: (k, j)),
                pl.BlockSpec((1, tn), lambda i, j, k: (0, j)),
                pl.BlockSpec((1, tn), lambda i, j, k: (0, j)),
                pl.BlockSpec((1, tn), lambda i, j, k: (0, j)),
                pl.BlockSpec((1, tn), lambda i, j, k: (0, j)),
            ],
            out_specs=pl.BlockSpec((tm, tn), lambda i, j, k: (i, j)),
            scratch_shapes=[pltpu.VMEM((tm, tn), jnp.float32),
                            pltpu.VMEM((tm, tn), jnp.float32)],
        ),
        compiler_params=pltpu.CompilerParams(
            dimension_semantics=("parallel", "parallel", "arbitrary")),
    )
    return jax.jit(call), (Mp, Kp, Np)


def gated_matmul(pat, wa, wg, ba, bg, bn_s, bn_b):
    M, K = pat.shape
    N = wa.shape[1]
    call, (Mp, Kp, Np) = _gated_mm_call(M, K, N)
    xp = pat.astype(jnp.bfloat16)
    if (Mp, Kp) != (M, K):
        xp = jnp.pad(xp, ((0, Mp - M), (0, Kp - K)))

    def prep_w(w):
        w = w.astype(jnp.bfloat16)
        if (Kp, Np) != (K, N):
            w = jnp.pad(w, ((0, Kp - K), (0, Np - N)))
        return w

    def prep_v(v):
        v = v.reshape(1, N).astype(jnp.float32)
        if Np != N:
            v = jnp.pad(v, ((0, 0), (0, Np - N)))
        return v

    out = call(xp, prep_w(wa), prep_w(wg),
               prep_v(ba), prep_v(bg), prep_v(bn_s), prep_v(bn_b))
    if (Mp, Np) != (M, N):
        out = out[:M, :N]
    return out


# --------------------------------------------------------------------- elementwise kernels
@functools.lru_cache(maxsize=None)
def _ew_call(M, C, mode, act):
    tr = 512 if M > 512 else M
    grid = (pl.cdiv(M, tr),)
    row = pl.BlockSpec((tr, C), lambda i: (i, 0))
    vec = pl.BlockSpec((1, C), lambda i: (0, 0))

    if mode == "add":
        def kernel(x_ref, y_ref, o_ref):
            o_ref[...] = _apply_act(x_ref[...] + y_ref[...], act)
        in_specs = [row, row]
    elif mode == "mul":
        def kernel(x_ref, y_ref, o_ref):
            o_ref[...] = _apply_act(x_ref[...] * y_ref[...], act)
        in_specs = [row, row]
    elif mode == "add_affine":
        def kernel(x_ref, y_ref, s_ref, b_ref, o_ref):
            o_ref[...] = _apply_act(
                (x_ref[...] + y_ref[...]) * s_ref[...] + b_ref[...], act)
        in_specs = [row, row, vec, vec]
    elif mode == "scale_res":
        def kernel(x_ref, y_ref, s_ref, o_ref):
            o_ref[...] = _apply_act(x_ref[...] + s_ref[...] * y_ref[...], act)
        in_specs = [row, row, vec]
    elif mode == "fold_res":
        def kernel(x_ref, y_ref, a_ref, b_ref, c_ref, o_ref):
            o_ref[...] = _apply_act(
                x_ref[...] * a_ref[...] + b_ref[...] + c_ref[...] * y_ref[...], act)
        in_specs = [row, row, vec, vec, vec]
    else:
        raise ValueError(mode)

    call = pl.pallas_call(
        kernel,
        out_shape=jax.ShapeDtypeStruct((M, C), jnp.float32),
        grid=grid,
        in_specs=in_specs,
        out_specs=row,
        compiler_params=pltpu.CompilerParams(dimension_semantics=("parallel",)),
    )
    return jax.jit(call)


def elementwise(mode, x, y=None, vecs=(), act="none"):
    shp = x.shape
    C = shp[-1]
    x2 = x.reshape(-1, C)
    M = x2.shape[0]
    args = [x2]
    if y is not None:
        args.append(y.reshape(-1, C))
    for v in vecs:
        args.append(jnp.asarray(v, jnp.float32).reshape(1, C))
    out = _ew_call(M, C, mode, act)(*args)
    return out.reshape(shp)


# ------------------------------------------------------------------- depthwise conv kernel
@functools.lru_cache(maxsize=None)
def _dw_call(B, H, W, C, K, dil, act):
    p = (K - 1) * dil // 2
    Hp, Wp = H + 2 * p, W + 2 * p
    tc = 128 if C % 128 == 0 else C

    def kernel(x_ref, w_ref, b_ref, o_ref):
        x = x_ref[0].astype(jnp.float32)                 # (Hp, Wp, tc)
        acc = x[0:H, 0:W, :] * w_ref[0, 0]
        for i in range(K):
            for j in range(K):
                if i == 0 and j == 0:
                    continue
                acc = acc + x[i * dil:i * dil + H, j * dil:j * dil + W, :] * w_ref[i, j]
        o_ref[0] = _apply_act(acc + b_ref[0, 0], act)

    call = pl.pallas_call(
        kernel,
        out_shape=jax.ShapeDtypeStruct((B, H, W, C), jnp.float32),
        grid=(B, C // tc),
        in_specs=[pl.BlockSpec((1, Hp, Wp, tc), lambda b, c: (b, 0, 0, c)),
                  pl.BlockSpec((K, K, tc), lambda b, c: (0, 0, c)),
                  pl.BlockSpec((1, 1, tc), lambda b, c: (0, 0, c))],
        out_specs=pl.BlockSpec((1, H, W, tc), lambda b, c: (b, 0, 0, c)),
        compiler_params=pltpu.CompilerParams(
            dimension_semantics=("parallel", "parallel")),
    )
    return jax.jit(call)


def depthwise_conv(x, w, b, K, dil=1, act="none"):
    # x: (B,H,W,C), w: (K,K,C), b: (C,)  -- 'same' padding, stride 1
    B, H, W, C = x.shape
    p = (K - 1) * dil // 2
    xp = jnp.pad(x, ((0, 0), (p, p), (p, p), (0, 0))).astype(jnp.bfloat16)
    return _dw_call(B, H, W, C, K, dil, act)(xp, w, b.reshape(1, 1, C))


# ------------------------------------------------------------------- instance norm kernel
@functools.lru_cache(maxsize=None)
def _in_call(B, HW, C, act):
    tc = 128 if C % 128 == 0 else C

    def kernel(x_ref, o_ref):
        x = x_ref[0]
        mean = jnp.mean(x, axis=0, keepdims=True)
        var = jnp.mean((x - mean) ** 2, axis=0, keepdims=True)
        o_ref[0] = _apply_act((x - mean) * jax.lax.rsqrt(var + 1e-5), act)

    call = pl.pallas_call(
        kernel,
        out_shape=jax.ShapeDtypeStruct((B, HW, C), jnp.float32),
        grid=(B, C // tc),
        in_specs=[pl.BlockSpec((1, HW, tc), lambda b, c: (b, 0, c))],
        out_specs=pl.BlockSpec((1, HW, tc), lambda b, c: (b, 0, c)),
        compiler_params=pltpu.CompilerParams(
            dimension_semantics=("parallel", "parallel")),
    )
    return jax.jit(call)


def instance_norm(x, act="none"):
    B, H, W, C = x.shape
    return _in_call(B, H * W, C, act)(x.reshape(B, H * W, C)).reshape(B, H, W, C)


# ---------------------------------------------------------------- conv via im2col + matmul
def _im2col(x, kh, kw, stride, padding, dilation):
    B, H, W, C = x.shape
    if padding > 0:
        x = jnp.pad(x, ((0, 0), (padding,) * 2, (padding,) * 2, (0, 0)))
    Hp, Wp = x.shape[1], x.shape[2]
    Ho = (Hp - dilation * (kh - 1) - 1) // stride + 1
    Wo = (Wp - dilation * (kw - 1) - 1) // stride + 1
    xb = x.astype(jnp.bfloat16)
    if kh == 1 and kw == 1 and stride == 1:
        return xb.reshape(B * Ho * Wo, C), (B, Ho, Wo)
    patches = []
    for i in range(kh):
        for j in range(kw):
            patches.append(jax.lax.slice(
                xb,
                (0, i * dilation, j * dilation, 0),
                (B, i * dilation + (Ho - 1) * stride + 1,
                 j * dilation + (Wo - 1) * stride + 1, C),
                (1, stride, stride, 1)))
    pat = jnp.concatenate(patches, axis=-1).reshape(B * Ho * Wo, kh * kw * C)
    return pat, (B, Ho, Wo)


def conv2d(x, w, bias=None, stride=1, padding=0, dilation=1,
           bn_scale=None, bn_bias=None, act="none"):
    # x: (B,H,W,Cin) NHWC, w: (kh,kw,Cin,Cout). BN + activation fused in matmul epilogue.
    kh, kw, cin, cout = w.shape
    pat, (B, Ho, Wo) = _im2col(x, kh, kw, stride, padding, dilation)
    w2 = w.reshape(kh * kw * cin, cout)
    scale = bn_scale if bn_scale is not None else jnp.ones((cout,), jnp.float32)
    cb = bias if bias is not None else jnp.zeros((cout,), jnp.float32)
    shift = bn_bias if bn_bias is not None else jnp.zeros((cout,), jnp.float32)
    eff_bias = cb * scale + shift
    out = matmul_affine_act(pat, w2, scale, eff_bias, act)
    return out.reshape(B, Ho, Wo, cout)


def conv1x1(x, w2, bias, act="none", bn_scale=None, bn_bias=None):
    B, H, W, C = x.shape
    cout = w2.shape[1]
    scale = bn_scale if bn_scale is not None else jnp.ones((cout,), jnp.float32)
    shift = bn_bias if bn_bias is not None else jnp.zeros((cout,), jnp.float32)
    eff_bias = bias * scale + shift
    out = matmul_affine_act(x.reshape(B * H * W, C).astype(jnp.bfloat16),
                            w2, scale, eff_bias, act)
    return out.reshape(B, H, W, cout)


def _dilate_for_transpose(x, kh, stride, padding, output_padding):
    B, H, W, C = x.shape
    s = stride
    xd = jnp.zeros((B, (H - 1) * s + 1, (W - 1) * s + 1, C), x.dtype)
    xd = xd.at[:, ::s, ::s, :].set(x)
    lo = kh - 1 - padding
    hi = kh - 1 - padding + output_padding
    return jnp.pad(xd, ((0, 0), (lo, hi), (lo, hi), (0, 0)))


def conv_transpose2d(x, w, bias=None, stride=2, padding=1, output_padding=0,
                     bn_scale=None, bn_bias=None, act="none"):
    # TODO(synk): weights are held in equivalent-conv layout; loading real PyTorch
    #             ConvTranspose2d checkpoints would additionally need a spatial flip.
    kh = w.shape[0]
    xp = _dilate_for_transpose(x, kh, stride, padding, output_padding)
    return conv2d(xp, w, bias=bias, stride=1, padding=0,
                  bn_scale=bn_scale, bn_bias=bn_bias, act=act)


# ------------------------------------------------------------------------ parameter setup
class ParamGen:
    def __init__(self, seed=0):
        self._key = jax.random.PRNGKey(seed)

    def _next(self):
        self._key, sub = jax.random.split(self._key)
        return sub

    def conv(self, kh, kw, cin, cout):
        fan_in = kh * kw * cin
        return jax.random.normal(self._next(), (kh, kw, cin, cout),
                                 jnp.float32) * (1.0 / np.sqrt(fan_in))

    def dwconv(self, k, c):
        return jax.random.normal(self._next(), (k, k, c), jnp.float32) * (1.0 / k)

    def bias(self, c):
        return jax.random.normal(self._next(), (c,), jnp.float32) * 0.01

    def bn(self, c):
        # eval-mode BatchNorm folded to per-channel scale/shift (default init)
        return {"scale": jnp.ones((c,), jnp.float32),
                "bias": jnp.zeros((c,), jnp.float32)}


def make_van(pg, dim):
    return {
        "norm1": pg.bn(dim),
        "proj1_w": pg.conv(1, 1, dim, dim), "proj1_b": pg.bias(dim),
        "lka_conv0_w": pg.dwconv(5, dim), "lka_conv0_b": pg.bias(dim),
        "lka_spatial_w": pg.dwconv(7, dim), "lka_spatial_b": pg.bias(dim),
        "lka_conv1_w": pg.conv(1, 1, dim, dim), "lka_conv1_b": pg.bias(dim),
        "proj2_w": pg.conv(1, 1, dim, dim), "proj2_b": pg.bias(dim),
        "ls1": jnp.full((dim,), 1e-2, jnp.float32),
        "norm2": pg.bn(dim),
        "fc1_w": pg.conv(1, 1, dim, 4 * dim), "fc1_b": pg.bias(4 * dim),
        "dw_w": pg.dwconv(3, 4 * dim), "dw_b": pg.bias(4 * dim),
        "fc2_w": pg.conv(1, 1, 4 * dim, dim), "fc2_b": pg.bias(dim),
        "ls2": jnp.full((dim,), 1e-2, jnp.float32),
    }


def make_ffc(pg, dim):
    cg = int(dim * 0.75)
    cl = dim - cg
    half = cg // 2
    return {
        "wl2l": pg.conv(3, 3, cl, cl),
        "wl2g": pg.conv(3, 3, cl, cg),
        "wg2l": pg.conv(3, 3, cg, cl),
        "st": {"w1": pg.conv(1, 1, cg, half), "bn1": pg.bn(half),
               "fu_w": pg.conv(1, 1, 2 * half, 2 * half), "fu_bn": pg.bn(2 * half),
               "w2": pg.conv(1, 1, half, cg)},
        "bn_l": pg.bn(cl), "bn_g": pg.bn(cg),
    }


def make_resblock(pg, dim):
    return {"w1": pg.conv(3, 3, dim, dim), "b1": pg.bias(dim),
            "w2": pg.conv(3, 3, dim, dim), "b2": pg.bias(dim)}


def make_params(seed=0):
    pg = ParamGen(seed)
    P = {}
    P["g1"] = {"w": pg.conv(7, 7, 3, 128), "b": pg.bias(128), "bn": pg.bn(64)}
    P["g2"] = {"w": pg.conv(4, 4, 64, 256), "b": pg.bias(256), "bn": pg.bn(128)}
    P["g3"] = {"w": pg.conv(4, 4, 128, 512), "b": pg.bias(512), "bn": pg.bn(256)}
    P["g4"] = {"w": pg.conv(4, 4, 256, 1024), "b": pg.bias(1024), "bn": pg.bn(512)}
    P["g4_van"] = make_van(pg, 512)
    P["middle2"] = [make_resblock(pg, 512) for _ in range(3)]
    P["gt1"] = {"w": pg.conv(4, 4, 512, 512), "b": pg.bias(512), "bn": pg.bn(256)}
    P["gt2"] = {"w": pg.conv(4, 4, 256, 256), "b": pg.bias(256), "bn": pg.bn(128)}
    P["gt3"] = {"w": pg.conv(4, 4, 128, 128), "b": pg.bias(128), "bn": pg.bn(64)}
    P["e1"] = {"w": pg.conv(7, 7, 7, 64), "b": pg.bias(64), "bn": pg.bn(64)}
    P["e2"] = {"w": pg.conv(3, 3, 64, 128), "b": pg.bias(128), "bn": pg.bn(128),
               "van": make_van(pg, 128)}
    P["e3"] = {"w": pg.conv(3, 3, 128, 256), "b": pg.bias(256), "bn": pg.bn(256),
               "van": make_van(pg, 256)}
    P["e4"] = {"w": pg.conv(3, 3, 256, 512), "b": pg.bias(512), "bn": pg.bn(512),
               "van": make_van(pg, 512)}
    P["middle"] = [{"ffc1": make_ffc(pg, 512), "ffc2": make_ffc(pg, 512)}
                   for _ in range(9)]
    P["d1"] = {"van": make_van(pg, 512), "w": pg.conv(3, 3, 512, 256),
               "b": pg.bias(256), "bn": pg.bn(256)}
    P["d2"] = {"van": make_van(pg, 256), "w": pg.conv(3, 3, 256, 128),
               "b": pg.bias(128), "bn": pg.bn(128)}
    P["d3"] = {"van": make_van(pg, 128), "w": pg.conv(3, 3, 128, 64),
               "b": pg.bias(64), "bn": pg.bn(64)}
    P["d4"] = {"w": pg.conv(7, 7, 64, 3), "b": pg.bias(3)}
    return P


# ------------------------------------------------------------------------ module forwards
def gate_conv(p, x, *, stride, padding, reflect_pad=0, transpose=False,
              output_padding=0):
    # conv -> split [a, g] -> a*sigmoid(g) -> BN -> SiLU, all fused in one Pallas matmul.
    w, b = p["w"], p["b"]
    kh, kw, cin, c2 = w.shape
    cout = c2 // 2
    if reflect_pad:
        x = jnp.pad(x, ((0, 0), (reflect_pad,) * 2, (reflect_pad,) * 2, (0, 0)),
                    mode="reflect")
        padding = 0
    if transpose:
        x = _dilate_for_transpose(x, kh, stride, padding, output_padding)
        pat, (B, Ho, Wo) = _im2col(x, kh, kw, 1, 0, 1)
    else:
        pat, (B, Ho, Wo) = _im2col(x, kh, kw, stride, padding, 1)
    wa = w[..., :cout].reshape(kh * kw * cin, cout)
    wg = w[..., cout:].reshape(kh * kw * cin, cout)
    out = gated_matmul(pat, wa, wg, b[:cout], b[cout:],
                       p["bn"]["scale"], p["bn"]["bias"])
    return out.reshape(B, Ho, Wo, cout)


def van_forward(p, x):
    dim = x.shape[-1]
    # -------- attention branch: norm1 folded into proj1 weights/bias --------
    s1, b1 = p["norm1"]["scale"], p["norm1"]["bias"]
    w1 = p["proj1_w"].reshape(dim, dim)
    y = conv1x1(x, s1[:, None] * w1, b1 @ w1 + p["proj1_b"], act="silu")
    a = depthwise_conv(y, p["lka_conv0_w"], p["lka_conv0_b"], K=5, dil=1)
    a = depthwise_conv(a, p["lka_spatial_w"], p["lka_spatial_b"], K=7, dil=3)
    a = conv1x1(a, p["lka_conv1_w"].reshape(dim, dim), p["lka_conv1_b"])
    y = elementwise("mul", y, a)
    y = conv1x1(y, p["proj2_w"].reshape(dim, dim), p["proj2_b"])
    ls1 = p["ls1"]
    # x + ls1*(y + norm1(x)) == x*(1+ls1*s1) + ls1*b1 + ls1*y   (single fused pass)
    x = elementwise("fold_res", x, y, vecs=(1.0 + ls1 * s1, ls1 * b1, ls1))
    # -------- MLP branch: norm2 folded into fc1 weights/bias --------
    s2, b2 = p["norm2"]["scale"], p["norm2"]["bias"]
    wf1 = p["fc1_w"].reshape(dim, 4 * dim)
    m = conv1x1(x, s2[:, None] * wf1, b2 @ wf1 + p["fc1_b"])
    m = depthwise_conv(m, p["dw_w"], p["dw_b"], K=3, dil=1, act="silu")
    m = conv1x1(m, p["fc2_w"].reshape(4 * dim, dim), p["fc2_b"])
    return elementwise("scale_res", x, m, vecs=(p["ls2"],))


def fourier_unit_forward(p, x):
    B, H, W, C = x.shape
    # TODO(synk): rfft2/irfft2 have no Pallas primitive; FFT runs in jnp.fft,
    #             the 1x1 spectral conv + BN + ReLU runs in the Pallas matmul kernel.
    f = jnp.fft.rfft2(x, axes=(1, 2), norm="ortho")
    fr = jnp.stack([jnp.real(f), jnp.imag(f)], axis=-1).reshape(B, H, W // 2 + 1, 2 * C)
    fr = conv2d(fr, p["fu_w"], bn_scale=p["fu_bn"]["scale"],
                bn_bias=p["fu_bn"]["bias"], act="relu")
    fr = fr.reshape(B, H, W // 2 + 1, C, 2)
    fc = jax.lax.complex(fr[..., 0], fr[..., 1])
    out = jnp.fft.irfft2(fc, s=(H, W), axes=(1, 2), norm="ortho")
    return out.astype(jnp.float32)


def spectral_transform_forward(p, x):
    x1 = conv2d(x, p["w1"], bn_scale=p["bn1"]["scale"],
                bn_bias=p["bn1"]["bias"], act="relu")
    fu = fourier_unit_forward(p, x1)
    s = elementwise("add", x1, fu)
    return conv2d(s, p["w2"])


def ffc_bn_act_forward(p, xl, xg):
    l2l = conv2d(xl, p["wl2l"], padding=1)
    g2l = conv2d(xg, p["wg2l"], padding=1)
    out_l = elementwise("add_affine", l2l, g2l,
                        vecs=(p["bn_l"]["scale"], p["bn_l"]["bias"]), act="relu")
    l2g = conv2d(xl, p["wl2g"], padding=1)
    g2g = spectral_transform_forward(p["st"], xg)
    out_g = elementwise("add_affine", l2g, g2g,
                        vecs=(p["bn_g"]["scale"], p["bn_g"]["bias"]), act="relu")
    return out_l, out_g


def resnet_block_remove_in_forward(p, x):
    C = x.shape[-1]
    cl = C - int(C * 0.75)
    xl, xg = x[..., :cl], x[..., cl:]
    xl, xg = ffc_bn_act_forward(p["ffc1"], xl, xg)
    xl, xg = ffc_bn_act_forward(p["ffc2"], xl, xg)
    out = jnp.concatenate([xl, xg], axis=-1)
    return elementwise("add", x, out)


def resnet_block_forward(p, x, dilation=2):
    y = jnp.pad(x, ((0, 0), (dilation,) * 2, (dilation,) * 2, (0, 0)), mode="reflect")
    y = conv2d(y, p["w1"], bias=p["b1"], dilation=dilation)
    y = instance_norm(y, act="relu")
    y = jnp.pad(y, ((0, 0), (1, 1), (1, 1), (0, 0)), mode="reflect")
    y = conv2d(y, p["w2"], bias=p["b2"])
    y = instance_norm(y)
    return elementwise("add", x, y)


# ------------------------------------------------------------------------- full forward
def base_model_forward(P, FIM_inp, AFEM_inp):
    # public interface matches PyTorch: NCHW in, NCHW out
    fim = jnp.transpose(FIM_inp, (0, 2, 3, 1)).astype(jnp.float32)
    afem = jnp.transpose(AFEM_inp, (0, 2, 3, 1)).astype(jnp.float32)

    fs_list = []
    y = gate_conv(P["g1"], afem, stride=1, padding=0, reflect_pad=3)
    fs_list.append(y)
    y = gate_conv(P["g2"], y, stride=2, padding=1)
    fs_list.append(y)
    y = gate_conv(P["g3"], y, stride=2, padding=1)
    fs_list.append(y)
    y = gate_conv(P["g4"], y, stride=2, padding=1)
    y = van_forward(P["g4_van"], y)
    fs_list.append(y)
    for p in P["middle2"]:
        y = resnet_block_forward(p, y, dilation=2)
    fd_list = [y]
    y = gate_conv(P["gt1"], y, stride=2, padding=1, transpose=True)
    fd_list.append(y)
    y = gate_conv(P["gt2"], y, stride=2, padding=1, transpose=True)
    fd_list.append(y)
    y = gate_conv(P["gt3"], y, stride=2, padding=1, transpose=True)
    fd_list.append(y)
    fd = fd_list[::-1]
    fs = fs_list[::-1]

    x = jnp.pad(fim, ((0, 0), (3, 3), (3, 3), (0, 0)), mode="reflect")
    x = conv2d(x, P["e1"]["w"], bias=P["e1"]["b"],
               bn_scale=P["e1"]["bn"]["scale"], bn_bias=P["e1"]["bn"]["bias"], act="silu")
    x = elementwise("add", x, fd[0])
    x = conv2d(x, P["e2"]["w"], bias=P["e2"]["b"], stride=2, padding=1,
               bn_scale=P["e2"]["bn"]["scale"], bn_bias=P["e2"]["bn"]["bias"], act="silu")
    x = van_forward(P["e2"]["van"], x)
    x = elementwise("add", x, fd[1])
    x = conv2d(x, P["e3"]["w"], bias=P["e3"]["b"], stride=2, padding=1,
               bn_scale=P["e3"]["bn"]["scale"], bn_bias=P["e3"]["bn"]["bias"], act="silu")
    x = van_forward(P["e3"]["van"], x)
    x = elementwise("add", x, fd[2])
    x = conv2d(x, P["e4"]["w"], bias=P["e4"]["b"], stride=2, padding=1,
               bn_scale=P["e4"]["bn"]["scale"], bn_bias=P["e4"]["bn"]["bias"], act="silu")
    x = van_forward(P["e4"]["van"], x)
    x = elementwise("add", x, fd[3])
    for p in P["middle"]:
        x = resnet_block_remove_in_forward(p, x)

    x = van_forward(P["d1"]["van"], x)
    x = elementwise("add", x, fs[0])
    x = conv_transpose2d(x, P["d1"]["w"], bias=P["d1"]["b"], stride=2, padding=1,
                         output_padding=1, bn_scale=P["d1"]["bn"]["scale"],
                         bn_bias=P["d1"]["bn"]["bias"], act="silu")
    x = van_forward(P["d2"]["van"], x)
    x = elementwise("add", x, fs[1])
    x = conv_transpose2d(x, P["d2"]["w"], bias=P["d2"]["b"], stride=2, padding=1,
                         output_padding=1, bn_scale=P["d2"]["bn"]["scale"],
                         bn_bias=P["d2"]["bn"]["bias"], act="silu")
    x = van_forward(P["d3"]["van"], x)
    x = elementwise("add", x, fs[2])
    x = conv_transpose2d(x, P["d3"]["w"], bias=P["d3"]["b"], stride=2, padding=1,
                         output_padding=1, bn_scale=P["d3"]["bn"]["scale"],
                         bn_bias=P["d3"]["bn"]["bias"], act="silu")
    x = elementwise("add", x, fs[3])
    x = jnp.pad(x, ((0, 0), (3, 3), (3, 3), (0, 0)), mode="reflect")
    # final 7x7 conv to 3 channels (lane-sparse output accepted for this tiny layer)
    x = conv2d(x, P["d4"]["w"], bias=P["d4"]["b"], act="tanh")
    return jnp.transpose(x, (0, 3, 1, 2))


# --------------------------------------------------------------------------------- main
if __name__ == "__main__":
    key = jax.random.PRNGKey(0)
    k1, k2 = jax.random.split(key)
    B, S = 1, 32
    FIM_inp = jax.random.normal(k1, (B, 7, S, S), jnp.float32)    # NCHW like torch
    AFEM_inp = jax.random.normal(k2, (B, 3, S, S), jnp.float32)   # NCHW like torch
    params = make_params(0)
    out = base_model_forward(params, FIM_inp, AFEM_inp)
    out = jax.block_until_ready(out)
    assert out.shape == (B, 3, S, S)
    print("KERNEL_OK")
</pallas_src>

<mosaic_0001>
module attributes {stable_mosaic.version = 11 : i64} {
  func.func @kernel(%arg0: i32, %arg1: i32, %arg2: i32, %arg3: memref<512x256xbf16, #tpu.memory_space<vmem>>, %arg4: memref<256x128xbf16, #tpu.memory_space<vmem>>, %arg5: memref<256x128xbf16, #tpu.memory_space<vmem>>, %arg6: memref<1x128xf32, #tpu.memory_space<vmem>>, %arg7: memref<1x128xf32, #tpu.memory_space<vmem>>, %arg8: memref<1x128xf32, #tpu.memory_space<vmem>>, %arg9: memref<1x128xf32, #tpu.memory_space<vmem>>, %arg10: memref<512x128xf32, #tpu.memory_space<vmem>>, %arg11: memref<512x128xf32, #tpu.memory_space<vmem>>, %arg12: memref<512x128xf32, #tpu.memory_space<vmem>>) attributes {dimension_semantics = [#tpu.dimension_semantics<parallel>, #tpu.dimension_semantics<parallel>, #tpu.dimension_semantics<arbitrary>], iteration_bounds = array<i64: 2, 1, 1>, scalar_prefetch = 0 : i64, scratch_operands = 2 : i64, tpu.core_type = #tpu.core_type<tc>, window_params = [{transform_indices = @transform_0, window_bounds = array<i64: 512, 256>}, {transform_indices = @transform_1, window_bounds = array<i64: 256, 128>}, {transform_indices = @transform_2, window_bounds = array<i64: 256, 128>}, {transform_indices = @transform_3, window_bounds = array<i64: 1, 128>}, {transform_indices = @transform_4, window_bounds = array<i64: 1, 128>}, {transform_indices = @transform_5, window_bounds = array<i64: 1, 128>}, {transform_indices = @transform_6, window_bounds = array<i64: 1, 128>}, {transform_indices = @transform_7, window_bounds = array<i64: 512, 128>}]} {
    %c0_i32 = arith.constant 0 : i32
    %0 = arith.cmpi eq, %arg2, %c0_i32 : i32
    %1 = arith.extui %0 : i1 to i32
    %c0_i32_0 = arith.constant 0 : i32
    %2 = arith.cmpi ne, %1, %c0_i32_0 : i32
    scf.if %2 {
      %cst_17 = arith.constant 0.000000e+00 : f32
      %17 = vector.broadcast %cst_17 : f32 to vector<512x128xf32>
      %c0_18 = arith.constant 0 : index
      %c0_19 = arith.constant 0 : index
      %18 = vector.load %arg11[%c0_18, %c0_19] : memref<512x128xf32, #tpu.memory_space<vmem>>, vector<512x128xf32>
      tpu.vector_store %arg11[%c0_18, %c0_19], %17 {strides = array<i32>} : memref<512x128xf32, #tpu.memory_space<vmem>>, vector<512x128xf32>,
      %cst_20 = arith.constant 0.000000e+00 : f32
      %19 = vector.broadcast %cst_20 : f32 to vector<512x128xf32>
      %c0_21 = arith.constant 0 : index
      %c0_22 = arith.constant 0 : index
      %20 = vector.load %arg12[%c0_21, %c0_22] : memref<512x128xf32, #tpu.memory_space<vmem>>, vector<512x128xf32>
      tpu.vector_store %arg12[%c0_21, %c0_22], %19 {strides = array<i32>} : memref<512x128xf32, #tpu.memory_space<vmem>>, vector<512x128xf32>,
    } else {
    }
    %c0 = arith.constant 0 : index
    %c0_1 = arith.constant 0 : index
    %3 = vector.load %arg3[%c0, %c0_1] : memref<512x256xbf16, #tpu.memory_space<vmem>>, vector<512x256xbf16>
    %c0_2 = arith.constant 0 : index
    %c0_3 = arith.constant 0 : index
    %4 = vector.load %arg11[%c0_2, %c0_3] : memref<512x128xf32, #tpu.memory_space<vmem>>, vector<512x128xf32>
    %c0_4 = arith.constant 0 : index
    %c0_5 = arith.constant 0 : index
    %5 = vector.load %arg4[%c0_4, %c0_5] : memref<256x128xbf16, #tpu.memory_space<vmem>>, vector<256x128xbf16>
    %cst = arith.constant dense<0.000000e+00> : vector<512x128xf32>
    %6 = tpu.matmul %3, %5, %cst {dimension_numbers = #tpu.dot_dimension_numbers<[1], [0], [0], [1], [0, 0, 1, 1], [], []>} : vector<512x256xbf16>, vector<256x128xbf16>, vector<512x128xf32> -> vector<512x128xf32>
    %7 = arith.addf %4, %6 : vector<512x128xf32>
    %c0_6 = arith.constant 0 : index
    %c0_7 = arith.constant 0 : index
    %8 = vector.load %arg11[%c0_6, %c0_7] : memref<512x128xf32, #tpu.memory_space<vmem>>, vector<512x128xf32>
    tpu.vector_store %arg11[%c0_6, %c0_7], %7 {strides = array<i32>} : memref<512x128xf32, #tpu.memory_space<vmem>>, vector<512x128xf32>,
    %c0_8 = arith.constant 0 : index
    %c0_9 = arith.constant 0 : index
    %9 = vector.load %arg12[%c0_8, %c0_9] : memref<512x128xf32, #tpu.memory_space<vmem>>, vector<512x128xf32>
    %c0_10 = arith.constant 0 : index
    %c0_11 = arith.constant 0 : index
    %10 = vector.load %arg5[%c0_10, %c0_11] : memref<256x128xbf16, #tpu.memory_space<vmem>>, vector<256x128xbf16>
    %cst_12 = arith.constant dense<0.000000e+00> : vector<512x128xf32>
    %11 = tpu.matmul %3, %10, %cst_12 {dimension_numbers = #tpu.dot_dimension_numbers<[1], [0], [0], [1], [0, 0, 1, 1], [], []>} : vector<512x256xbf16>, vector<256x128xbf16>, vector<512x128xf32> -> vector<512x128xf32>
    %12 = arith.addf %9, %11 : vector<512x128xf32>
    %c0_13 = arith.constant 0 : index
    %c0_14 = arith.constant 0 : index
    %13 = vector.load %arg12[%c0_13, %c0_14] : memref<512x128xf32, #tpu.memory_space<vmem>>, vector<512x128xf32>
    tpu.vector_store %arg12[%c0_13, %c0_14], %12 {strides = array<i32>} : memref<512x128xf32, #tpu.memory_space<vmem>>, vector<512x128xf32>,
    %c0_i32_15 = arith.constant 0 : i32
    %14 = arith.cmpi eq, %arg2, %c0_i32_15 : i32
    %15 = arith.extui %14 : i1 to i32
    %c0_i32_16 = arith.constant 0 : i32
    %16 = arith.cmpi ne, %15, %c0_i32_16 : i32
    scf.if %16 {
      %c0_17 = arith.constant 0 : index
      %c0_18 = arith.constant 0 : index
      %17 = vector.load %arg11[%c0_17, %c0_18] : memref<512x128xf32, #tpu.memory_space<vmem>>, vector<512x128xf32>
      %c0_19 = arith.constant 0 : index
      %c0_20 = arith.constant 0 : index
      %18 = vector.load %arg6[%c0_19, %c0_20] : memref<1x128xf32, #tpu.memory_space<vmem>>, vector<1x128xf32>
      %19 = vector.broadcast %18 : vector<1x128xf32> to vector<512x128xf32>
      %20 = arith.addf %17, %19 : vector<512x128xf32>
      %c0_21 = arith.constant 0 : index
      %c0_22 = arith.constant 0 : index
      %21 = vector.load %arg12[%c0_21, %c0_22] : memref<512x128xf32, #tpu.memory_space<vmem>>, vector<512x128xf32>
      %c0_23 = arith.constant 0 : index
      %c0_24 = arith.constant 0 : index
      %22 = vector.load %arg7[%c0_23, %c0_24] : memref<1x128xf32, #tpu.memory_space<vmem>>, vector<1x128xf32>
      %23 = vector.broadcast %22 : vector<1x128xf32> to vector<512x128xf32>
      %24 = arith.addf %21, %23 : vector<512x128xf32>
      %25 = arith.negf %24 : vector<512x128xf32>
      %26 = math.exp %25 : vector<512x128xf32>
      %cst_25 = arith.constant 1.000000e+00 : f32
      %27 = vector.broadcast %cst_25 : f32 to vector<512x128xf32>
      %28 = arith.addf %27, %26 : vector<512x128xf32>
      %29 = arith.divf %27, %28 : vector<512x128xf32>
      %30 = arith.mulf %20, %29 : vector<512x128xf32>
      %c0_26 = arith.constant 0 : index
      %c0_27 = arith.constant 0 : index
      %31 = vector.load %arg8[%c0_26, %c0_27] : memref<1x128xf32, #tpu.memory_space<vmem>>, vector<1x128xf32>
      %32 = vector.broadcast %31 : vector<1x128xf32> to vector<512x128xf32>
      %33 = arith.mulf %30, %32 : vector<512x128xf32>
      %c0_28 = arith.constant 0 : index
      %c0_29 = arith.constant 0 : index
      %34 = vector.load %arg9[%c0_28, %c0_29] : memref<1x128xf32, #tpu.memory_space<vmem>>, vector<1x128xf32>
      %35 = vector.broadcast %34 : vector<1x128xf32> to vector<512x128xf32>
      %36 = arith.addf %33, %35 : vector<512x128xf32>
      %37 = arith.negf %36 : vector<512x128xf32>
      %38 = math.exp %37 : vector<512x128xf32>
      %cst_30 = arith.constant 1.000000e+00 : f32
      %39 = vector.broadcast %cst_30 : f32 to vector<512x128xf32>
      %40 = arith.addf %39, %38 : vector<512x128xf32>
      %41 = arith.divf %39, %40 : vector<512x128xf32>
      %42 = arith.mulf %36, %41 : vector<512x128xf32>
      %c0_31 = arith.constant 0 : index
      %c0_32 = arith.constant 0 : index
      %43 = vector.load %arg10[%c0_31, %c0_32] : memref<512x128xf32, #tpu.memory_space<vmem>>, vector<512x128xf32>
      tpu.vector_store %arg10[%c0_31, %c0_32], %42 {strides = array<i32>} : memref<512x128xf32, #tpu.memory_space<vmem>>, vector<512x128xf32>,
    } else {
    }
    return
  }
  func.func @transform_0(%arg0: i32, %arg1: i32, %arg2: i32) -> (i32, i32) {
    %c0_i32 = arith.constant 0 : i32
    return %arg0, %arg2 : i32, i32
  }
  func.func @transform_1(%arg0: i32, %arg1: i32, %arg2: i32) -> (i32, i32) {
    %c0_i32 = arith.constant 0 : i32
    return %arg2, %arg1 : i32, i32
  }
  func.func @transform_2(%arg0: i32, %arg1: i32, %arg2: i32) -> (i32, i32) {
    %c0_i32 = arith.constant 0 : i32
    return %arg2, %arg1 : i32, i32
  }
  func.func @transform_3(%arg0: i32, %arg1: i32, %arg2: i32) -> (i32, i32) {
    %c0_i32 = arith.constant 0 : i32
    %c0_i32_0 = arith.constant 0 : i32
    return %c0_i32, %arg1 : i32, i32
  }
  func.func @transform_4(%arg0: i32, %arg1: i32, %arg2: i32) -> (i32, i32) {
    %c0_i32 = arith.constant 0 : i32
    %c0_i32_0 = arith.constant 0 : i32
    return %c0_i32, %arg1 : i32, i32
  }
  func.func @transform_5(%arg0: i32, %arg1: i32, %arg2: i32) -> (i32, i32) {
    %c0_i32 = arith.constant 0 : i32
    %c0_i32_0 = arith.constant 0 : i32
    return %c0_i32, %arg1 : i32, i32
  }
  func.func @transform_6(%arg0: i32, %arg1: i32, %arg2: i32) -> (i32, i32) {
    %c0_i32 = arith.constant 0 : i32
    %c0_i32_0 = arith.constant 0 : i32
    return %c0_i32, %arg1 : i32, i32
  }
  func.func @transform_7(%arg0: i32, %arg1: i32, %arg2: i32) -> (i32, i32) {
    %c0_i32 = arith.constant 0 : i32
    return %arg0, %arg1 : i32, i32
  }
}

</mosaic_0001>

<llo_original>
// kernel: tpu_custom_call.1
$region0: #{tpu_custom_call.1}
  #allocation0 [shape = 'u32[]', space=smem, size = 0x4, offset = 0x4, fixed_abs, tag = 'smem constant byte address 0x4 - core index']
  #allocation1 [shape = 'u32[144,128]{1,0:T(1,128)}', space=vmem, size = 0x12000, scoped, tag = 'internal scratch']
  #allocation2 [shape = 'f32[512,128]{1,0:T(8,128)}', space=vmem, size = 0x40000, scoped, tag = 'scratch operand']
  #allocation3 [shape = 'f32[512,128]{1,0:T(8,128)}', space=vmem, size = 0x40000, scoped, tag = 'scratch operand']
  %s0 = inlined_call_operand.hbm [shape: bf16[1024,256], index: 0, kind: input, shape index: {}]
  %s1 = inlined_call_operand.hbm [shape: bf16[256,128], index: 1, kind: input, shape index: {}]
  %s2 = inlined_call_operand.hbm [shape: bf16[256,128], index: 2, kind: input, shape index: {}]
  %s3 = inlined_call_operand.vmem [shape: f32[1,128], index: 3, kind: input, shape index: {}]
  %s4 = inlined_call_operand.vmem [shape: f32[1,128], index: 4, kind: input, shape index: {}]
  %s5 = inlined_call_operand.vmem [shape: f32[1,128], index: 5, kind: input, shape index: {}]
  %s6 = inlined_call_operand.vmem [shape: f32[1,128], index: 6, kind: input, shape index: {}]
  %s7 = inlined_call_operand.hbm [shape: f32[1024,128], index: 7, kind: output, shape index: {}]
  %s8 = sld [smem:[#allocation0]]
  $region81: #{tpu_custom_call.1} parent=0
    _
  %s10 = ssub.s32 1, %s8
  %s11 = scalar_select 0, %s10, %s8
  $region1: #{tpu_custom_call.1} parent=0
    #allocation4 [shape = 'u8[524288]{0}', space=vmem, size = 0x80000, scoped, tag = 'input window, operand 0']
    #allocation5 [shape = 's32[2]{0}', space=sflag, size = 0x8, scoped, tag = 'scoped memory for tpu_custom_call.1']
    #allocation6 [shape = 's32[2]{0}', space=sflag, size = 0x8, scoped, tag = 'scoped memory for tpu_custom_call.1']
    #allocation7 [shape = 'u8[65536]{0}', space=vmem, size = 0x10000, scoped, tag = 'input window, operand 1, single buffered']
    #allocation8 [shape = 's32[1]{0}', space=sflag, size = 0x4, scoped, tag = 'scoped memory for tpu_custom_call.1']
    #allocation9 [shape = 'u8[65536]{0}', space=vmem, size = 0x10000, scoped, tag = 'input window, operand 2, single buffered']
    #allocation10 [shape = 'u8[524288]{0}', space=vmem, size = 0x80000, scoped, tag = 'output window, operand 0']
    %12 = vsyncpa [#allocation5], 0
    %s13 = scalar_lea.sflag [#allocation5], 1
    %14 = vsyncpa %s13, 0
    %15 = vsyncpa [#allocation8], 0
    %16 = vsyncpa [#allocation6], 0
    %s17 = scalar_lea.sflag [#allocation6], 1
    %18 = vsyncpa %s17, 0
    loop: start=0, step=1, limit=4
    $region2: #{tpu_custom_call.1} parent=1 // loop_pre_header
      _
    $region3: #{tpu_custom_call.1} parent=1 // loop_header
      %s20 = sphi 0, %s24
      %p21 = scmp.ge.s32.totalorder %s20, 4
      %s27 = sphi 0, %s46
      %s28 = sphi 0, %s42
      %s29 = sphi 0, %s38
      %s30 = sphi 0, %s27
      %s31 = sphi 0, %s28
      %s32 = sphi 0, %s29
      %s33 = sphi 0, %s30
      %s34 = sphi 0, %s31
      %s35 = sphi 0, %s32
      %s51 = sphi 0, %s53
      %s54 = sphi 0, %s51
      %s55 = sphi 0, %s54
      %s71 = sphi 0, %s55
      %s79 = sphi 0, %s81
      %s82 = sphi 0, %s79
      %s83 = sphi 0, %s82
      %s99 = sphi 0, %s83
      %s107 = sphi 0, %s109
      %s110 = sphi 0, %s107
      %s111 = sphi 0, %s110
      %s127 = sphi 0, %s111
      %s133 = sphi 0, %s135
      %s136 = sphi 0, %s133
      %s137 = sphi 0, %s136
      %s153 = sphi 0, %s137
      %s159 = sphi 0, %s161
      %s162 = sphi 0, %s159
      %s163 = sphi 0, %s162
      %s179 = sphi 0, %s163
      %s185 = sphi 0, %s187
      %s188 = sphi 0, %s185
      %s189 = sphi 0, %s188
      %s205 = sphi 0, %s189
      %s211 = sphi 0, %s213
      %s214 = sphi 0, %s211
      %s215 = sphi 0, %s214
      %s231 = sphi 0, %s215
      %s239 = sphi 0, %s241
      %s242 = sphi 0, %s239
      %s243 = sphi 0, %s242
      %s259 = sphi 0, %s243
    $region4: #{tpu_custom_call.1} parent=1 // loop_header_branch
      %23 = sbr.rel (%p21) target = $region8
    $region5: #{tpu_custom_call.1} parent=1 // loop_body
      %s25 = ssub.s32 %s20, 1
      %s26 = ssub.s32 %s20, 2
      %s36 = sadd.s32 1, %s29
      %p37 = scmp.ge.s32.totalorder %s36, 1
      %s38 = scalar_select %p37, 0, %s36
      %s39 = sadd.s32 1, %s28
      %s40 = scalar_select %p37, %s39, %s28
      %p41 = scmp.ge.s32.totalorder %s40, 1
      %s42 = scalar_select %p41, 0, %s40
      %s43 = sadd.s32 1, %s27
      %s44 = scalar_select %p41, %s43, %s27
      %p45 = scmp.ge.s32.totalorder %s44, 2
      %s46 = scalar_select %p45, 0, %s44
      %s47 = ssub.s32 %s27, %s46
      %s48 = ssub.s32 %s29, %s38
      %s49 = sor.u32 %s47, %s48
      %p50 = scmp.eq.s32.totalorder %s49, 0
      %s52 = sadd.s32 %s51, 1
      %s53 = scalar_select %p50, %s51, %s52
      %p56 = pneg %p50
      %p57 = scmp.eq.s32.totalorder %s20, 1
      %p58 = por %p56, %p57
      %p59 = scmp.ne.s32.totalorder %s51, %s54
      %p60 = scmp.eq.s32.totalorder %s20, 0
      %p61 = por %p59, %p60
      %p62 = scmp.ne.s32.totalorder %s51, %s54
      %p63 = scmp.eq.s32.totalorder %s25, 1
      %p64 = por %p62, %p63
      %p65 = scmp.ne.s32.totalorder %s54, %s55
      %p66 = scmp.eq.s32.totalorder %s25, 0
      %p67 = por %p65, %p66
      %p68 = scmp.ne.s32.totalorder %s54, %s55
      %p69 = scmp.eq.s32.totalorder %s26, 1
      %p70 = por %p68, %p69
      %p72 = scmp.ne.s32.totalorder %s55, %s71
      %p73 = scmp.eq.s32.totalorder %s26, 0
      %p74 = por %p72, %p73
      %s75 = ssub.s32 %s29, %s38
      %s76 = ssub.s32 %s28, %s42
      %s77 = sor.u32 %s75, %s76
      %p78 = scmp.eq.s32.totalorder %s77, 0
      %s80 = sadd.s32 %s79, 1
      %s81 = scalar_select %p78, %s79, %s80
      %p84 = pneg %p78
      %p85 = scmp.eq.s32.totalorder %s20, 1
      %p86 = por %p84, %p85
      %p87 = scmp.ne.s32.totalorder %s79, %s82
      %p88 = scmp.eq.s32.totalorder %s20, 0
      %p89 = por %p87, %p88
      %p90 = scmp.ne.s32.totalorder %s79, %s82
      %p91 = scmp.eq.s32.totalorder %s25, 1
      %p92 = por %p90, %p91
      %p93 = scmp.ne.s32.totalorder %s82, %s83
      %p94 = scmp.eq.s32.totalorder %s25, 0
      %p95 = por %p93, %p94
      %p96 = scmp.ne.s32.totalorder %s82, %s83
      %p97 = scmp.eq.s32.totalorder %s26, 1
      %p98 = por %p96, %p97
      %p100 = scmp.ne.s32.totalorder %s83, %s99
      %p101 = scmp.eq.s32.totalorder %s26, 0
      %p102 = por %p100, %p101
      %s103 = ssub.s32 %s29, %s38
      %s104 = ssub.s32 %s28, %s42
      %s105 = sor.u32 %s103, %s104
      %p106 = scmp.eq.s32.totalorder %s105, 0
      %s108 = sadd.s32 %s107, 1
      %s109 = scalar_select %p106, %s107, %s108
      %p112 = pneg %p106
      %p113 = scmp.eq.s32.totalorder %s20, 1
      %p114 = por %p112, %p113
      %p115 = scmp.ne.s32.totalorder %s107, %s110
      %p116 = scmp.eq.s32.totalorder %s20, 0
      %p117 = por %p115, %p116
      %p118 = scmp.ne.s32.totalorder %s107, %s110
      %p119 = scmp.eq.s32.totalorder %s25, 1
      %p120 = por %p118, %p119
      %p121 = scmp.ne.s32.totalorder %s110, %s111
      %p122 = scmp.eq.s32.totalorder %s25, 0
      %p123 = por %p121, %p122
      %p124 = scmp.ne.s32.totalorder %s110, %s111
      %p125 = scmp.eq.s32.totalorder %s26, 1
      %p126 = por %p124, %p125
      %p128 = scmp.ne.s32.totalorder %s111, %s127
      %p129 = scmp.eq.s32.totalorder %s26, 0
      %p130 = por %p128, %p129
      %s131 = ssub.s32 %s28, %s42
      %p132 = scmp.eq.s32.totalorder %s131, 0
      %s134 = sadd.s32 %s133, 1
      %s135 = scalar_select %p132, %s133, %s134
      %p138 = pneg %p132
      %p139 = scmp.eq.s32.totalorder %s20, 1
      %p140 = por %p138, %p139
      %p141 = scmp.ne.s32.totalorder %s133, %s136
      %p142 = scmp.eq.s32.totalorder %s20, 0
      %p143 = por %p141, %p142
      %p144 = scmp.ne.s32.totalorder %s133, %s136
      %p145 = scmp.eq.s32.totalorder %s25, 1
      %p146 = por %p144, %p145
      %p147 = scmp.ne.s32.totalorder %s136, %s137
      %p148 = scmp.eq.s32.totalorder %s25, 0
      %p149 = por %p147, %p148
      %p150 = scmp.ne.s32.totalorder %s136, %s137
      %p151 = scmp.eq.s32.totalorder %s26, 1
      %p152 = por %p150, %p151
      %p154 = scmp.ne.s32.totalorder %s137, %s153
      %p155 = scmp.eq.s32.totalorder %s26, 0
      %p156 = por %p154, %p155
      %s157 = ssub.s32 %s28, %s42
      %p158 = scmp.eq.s32.totalorder %s157, 0
      %s160 = sadd.s32 %s159, 1
      %s161 = scalar_select %p158, %s159, %s160
      %p164 = pneg %p158
      %p165 = scmp.eq.s32.totalorder %s20, 1
      %p166 = por %p164, %p165
      %p167 = scmp.ne.s32.totalorder %s159, %s162
      %p168 = scmp.eq.s32.totalorder %s20, 0
      %p169 = por %p167, %p168
      %p170 = scmp.ne.s32.totalorder %s159, %s162
      %p171 = scmp.eq.s32.totalorder %s25, 1
      %p172 = por %p170, %p171
      %p173 = scmp.ne.s32.totalorder %s162, %s163
      %p174 = scmp.eq.s32.totalorder %s25, 0
      %p175 = por %p173, %p174
      %p176 = scmp.ne.s32.totalorder %s162, %s163
      %p177 = scmp.eq.s32.totalorder %s26, 1
      %p178 = por %p176, %p177
      %p180 = scmp.ne.s32.totalorder %s163, %s179
      %p181 = scmp.eq.s32.totalorder %s26, 0
      %p182 = por %p180, %p181
      %s183 = ssub.s32 %s28, %s42
      %p184 = scmp.eq.s32.totalorder %s183, 0
      %s186 = sadd.s32 %s185, 1
      %s187 = scalar_select %p184, %s185, %s186
      %p190 = pneg %p184
      %p191 = scmp.eq.s32.totalorder %s20, 1
      %p192 = por %p190, %p191
      %p193 = scmp.ne.s32.totalorder %s185, %s188
      %p194 = scmp.eq.s32.totalorder %s20, 0
      %p195 = por %p193, %p194
      %p196 = scmp.ne.s32.totalorder %s185, %s188
      %p197 = scmp.eq.s32.totalorder %s25, 1
      %p198 = por %p196, %p197
      %p199 = scmp.ne.s32.totalorder %s188, %s189
      %p200 = scmp.eq.s32.totalorder %s25, 0
      %p201 = por %p199, %p200
      %p202 = scmp.ne.s32.totalorder %s188, %s189
      %p203 = scmp.eq.s32.totalorder %s26, 1
      %p204 = por %p202, %p203
      %p206 = scmp.ne.s32.totalorder %s189, %s205
      %p207 = scmp.eq.s32.totalorder %s26, 0
      %p208 = por %p206, %p207
      %s209 = ssub.s32 %s28, %s42
      %p210 = scmp.eq.s32.totalorder %s209, 0
      %s212 = sadd.s32 %s211, 1
      %s213 = scalar_select %p210, %s211, %s212
      %p216 = pneg %p210
      %p217 = scmp.eq.s32.totalorder %s20, 1
      %p218 = por %p216, %p217
      %p219 = scmp.ne.s32.totalorder %s211, %s214
      %p220 = scmp.eq.s32.totalorder %s20, 0
      %p221 = por %p219, %p220
      %p222 = scmp.ne.s32.totalorder %s211, %s214
      %p223 = scmp.eq.s32.totalorder %s25, 1
      %p224 = por %p222, %p223
      %p225 = scmp.ne.s32.totalorder %s214, %s215
      %p226 = scmp.eq.s32.totalorder %s25, 0
      %p227 = por %p225, %p226
      %p228 = scmp.ne.s32.totalorder %s214, %s215
      %p229 = scmp.eq.s32.totalorder %s26, 1
      %p230 = por %p228, %p229
      %p232 = scmp.ne.s32.totalorder %s215, %s231
      %p233 = scmp.eq.s32.totalorder %s26, 0
      %p234 = por %p232, %p233
      %s235 = ssub.s32 %s27, %s46
      %s236 = ssub.s32 %s28, %s42
      %s237 = sor.u32 %s235, %s236
      %p238 = scmp.eq.s32.totalorder %s237, 0
      %s240 = sadd.s32 %s239, 1
      %s241 = scalar_select %p238, %s239, %s240
      %p244 = pneg %p238
      %p245 = scmp.eq.s32.totalorder %s20, 1
      %p246 = por %p244, %p245
      %p247 = scmp.ne.s32.totalorder %s239, %s242
      %p248 = scmp.eq.s32.totalorder %s20, 0
      %p249 = por %p247, %p248
      %p250 = scmp.ne.s32.totalorder %s239, %s242
      %p251 = scmp.eq.s32.totalorder %s25, 1
      %p252 = por %p250, %p251
      %p253 = scmp.ne.s32.totalorder %s242, %s243
      %p254 = scmp.eq.s32.totalorder %s25, 0
      %p255 = por %p253, %p254
      %p256 = scmp.ne.s32.totalorder %s242, %s243
      %p257 = scmp.eq.s32.totalorder %s26, 1
      %p258 = por %p256, %p257
      %p260 = scmp.ne.s32.totalorder %s243, %s259
      %p261 = scmp.eq.s32.totalorder %s26, 0
      %p262 = por %p260, %p261
      %p263 = scmp.le.s32.totalorder 1, %s20
      %p264 = scmp.lt.s32.totalorder %s20, 3
      %p265 = pnand %p263, %p264
      %p266 = pneg %p265
      // Predicated region
      $region9: #{tpu_custom_call.1} parent=5 // pred_check
        _
      $region10: #{tpu_custom_call.1} parent=5 // pred_check_branch
        %268 = sbr.rel (%p265) target = $region12
      $region11: #{tpu_custom_call.1} parent=5 // pred_region
        %s269 = ssub.s32 %s20, 1
        // Predicated region
        $region13: #{tpu_custom_call.1} parent=11 // pred_check
          %p270 = pneg %p95
        $region14: #{tpu_custom_call.1} parent=11 // pred_check_branch
          %272 = sbr.rel (%p270) target = $region16
        $region15: #{tpu_custom_call.1} parent=11 // pred_region
          %s273 = smul.u32 32, %s32
          %s275 = ssub.s32 2048, 2048
          %276 = vsyncadd [#allocation8], %s275
          %s277 = sadd.s32 %s31, %s273
          %s278 = smul.addr %s277, 64
          %s279 = scalar_lea.hbm %s1, %s278
          %s280 = sshll.u32 [#allocation7], 4
          %s281 = int_to_ptr.vmem [resolvable:$true] %s280
          %286 = dma.hbm_to_vmem [thread:$0]  %s279, 2048, %s281, [#allocation8], 64, 64, 4
        $region16: #{tpu_custom_call.1} parent=11 // pred_fallthru
          _
        // Predicated region
        $region17: #{tpu_custom_call.1} parent=11 // pred_check
          %p287 = pneg %p123
        $region18: #{tpu_custom_call.1} parent=11 // pred_check_branch
          %289 = sbr.rel (%p287) target = $region20
        $region19: #{tpu_custom_call.1} parent=11 // pred_region
          %s290 = smul.u32 32, %s32
          %s292 = ssub.s32 2048, 2048
          %293 = vsyncadd [#allocation8], %s292
          %s294 = sadd.s32 %s31, %s290
          %s295 = smul.addr %s294, 64
          %s296 = scalar_lea.hbm %s2, %s295
          %s297 = sshll.u32 [#allocation9], 4
          %s298 = int_to_ptr.vmem [resolvable:$true] %s297
          %303 = dma.hbm_to_vmem [thread:$0]  %s296, 2048, %s298, [#allocation8], 64, 64, 4
        $region20: #{tpu_custom_call.1} parent=11 // pred_fallthru
          _
        // Predicated region
        $region21: #{tpu_custom_call.1} parent=11 // pred_check
          %p304 = pneg %p149
        $region22: #{tpu_custom_call.1} parent=11 // pred_check_branch
          %306 = sbr.rel (%p304) target = $region24
        $region23: #{tpu_custom_call.1} parent=11 // pred_region
          %p307 = scmp.lt.s32.totalorder %s31, 0
          %s308 = scalar_select %p307, %s31, 0
          %s309 = scalar_lea.vmem %s3, %s308
        $region24: #{tpu_custom_call.1} parent=11 // pred_fallthru
          _
        // Predicated region
        $region25: #{tpu_custom_call.1} parent=11 // pred_check
          %p310 = pneg %p175
        $region26: #{tpu_custom_call.1} parent=11 // pred_check_branch
          %312 = sbr.rel (%p310) target = $region28
        $region27: #{tpu_custom_call.1} parent=11 // pred_region
          %p313 = scmp.lt.s32.totalorder %s31, 0
          %s314 = scalar_select %p313, %s31, 0
          %s315 = scalar_lea.vmem %s4, %s314
        $region28: #{tpu_custom_call.1} parent=11 // pred_fallthru
          _
        // Predicated region
        $region29: #{tpu_custom_call.1} parent=11 // pred_check
          %p316 = pneg %p201
        $region30: #{tpu_custom_call.1} parent=11 // pred_check_branch
          %318 = sbr.rel (%p316) target = $region32
        $region31: #{tpu_custom_call.1} parent=11 // pred_region
          %p319 = scmp.lt.s32.totalorder %s31, 0
          %s320 = scalar_select %p319, %s31, 0
          %s321 = scalar_lea.vmem %s5, %s320
        $region32: #{tpu_custom_call.1} parent=11 // pred_fallthru
          _
        // Predicated region
        $region33: #{tpu_custom_call.1} parent=11 // pred_check
          %p322 = pneg %p227
        $region34: #{tpu_custom_call.1} parent=11 // pred_check_branch
          %324 = sbr.rel (%p322) target = $region36
        $region35: #{tpu_custom_call.1} parent=11 // pred_region
          %p325 = scmp.lt.s32.totalorder %s31, 0
          %s326 = scalar_select %p325, %s31, 0
          %s327 = scalar_lea.vmem %s6, %s326
        $region36: #{tpu_custom_call.1} parent=11 // pred_fallthru
          _
      $region12: #{tpu_custom_call.1} parent=5 // pred_fallthru
        _
      %p328 = scmp.lt.s32.totalorder %s20, 2
      // Predicated region
      $region37: #{tpu_custom_call.1} parent=5 // pred_check
        %p329 = pneg %p328
      $region38: #{tpu_custom_call.1} parent=5 // pred_check_branch
        %331 = sbr.rel (%p329) target = $region40
      $region39: #{tpu_custom_call.1} parent=5 // pred_region
        // Predicated region
        $region41: #{tpu_custom_call.1} parent=39 // pred_check
          %p332 = pneg %p61
        $region42: #{tpu_custom_call.1} parent=39 // pred_check_branch
          %334 = sbr.rel (%p332) target = $region44
        $region43: #{tpu_custom_call.1} parent=39 // pred_region
          %s335 = sand.u32 %s51, 1
          %s336 = scalar_lea.sflag [#allocation5], %s335
          %s337 = sand.u32 %s51, 1
          %s338 = smul.addr %s337, 512
          %s339 = scalar_lea.vmem [#allocation4], %s338
          %s340 = smul.u32 64, %s27
          %s341 = smul.u32 2, %s29
          %s343 = ssub.s32 8192, 8192
          %344 = vsyncadd %s336, %s343
          %s345 = smul.addr %s340, 2
          %s346 = sadd.s32 %s341, %s345
          %s347 = smul.addr %s346, 64
          %s348 = scalar_lea.hbm %s0, %s347
          %s349 = sshll.u32 %s339, 4
          %s350 = int_to_ptr.vmem [resolvable:$true] %s349
          %355 = dma.hbm_to_vmem [thread:$0]  %s348, 8192, %s350, %s336, 128, 128, 8
        $region44: #{tpu_custom_call.1} parent=39 // pred_fallthru
          _
      $region40: #{tpu_custom_call.1} parent=5 // pred_fallthru
        _
      %p356 = scmp.le.s32.totalorder 1, %s20
      %p357 = scmp.lt.s32.totalorder %s20, 3
      %p358 = pnand %p356, %p357
      %p359 = pneg %p358
      // Predicated region
      $region45: #{tpu_custom_call.1} parent=5 // pred_check
        _
      $region46: #{tpu_custom_call.1} parent=5 // pred_check_branch
        %361 = sbr.rel (%p358) target = $region48
      $region47: #{tpu_custom_call.1} parent=5 // pred_region
        %s362 = ssub.s32 %s20, 1
        %s363 = sand.u32 %s54, 1
        %s364 = scalar_lea.sflag [#allocation5], %s363
        %s365 = sand.u32 %s54, 1
        %s366 = smul.addr %s365, 512
        %s367 = scalar_lea.vmem [#allocation4], %s366
        // Predicated region
        $region49: #{tpu_custom_call.1} parent=47 // pred_check
          %p368 = pneg %p67
        $region50: #{tpu_custom_call.1} parent=47 // pred_check_branch
          %370 = sbr.rel (%p368) target = $region52
        $region51: #{tpu_custom_call.1} parent=47 // pred_region
          %371 = dma.done %s364, 8192
        $region52: #{tpu_custom_call.1} parent=47 // pred_fallthru
          _
        // Predicated region
        $region53: #{tpu_custom_call.1} parent=47 // pred_check
          %p372 = pneg %p95
        $region54: #{tpu_custom_call.1} parent=47 // pred_check_branch
          %374 = sbr.rel (%p372) target = $region56
        $region55: #{tpu_custom_call.1} parent=47 // pred_region
          %375 = dma.done [#allocation8], 2048
        $region56: #{tpu_custom_call.1} parent=47 // pred_fallthru
          _
        // Predicated region
        $region57: #{tpu_custom_call.1} parent=47 // pred_check
          %p376 = pneg %p123
        $region58: #{tpu_custom_call.1} parent=47 // pred_check_branch
          %378 = sbr.rel (%p376) target = $region60
        $region59: #{tpu_custom_call.1} parent=47 // pred_region
          %379 = dma.done [#allocation8], 2048
        $region60: #{tpu_custom_call.1} parent=47 // pred_fallthru
          _
        %s380 = sand.u32 %s54, 1
        %s381 = scalar_lea.sflag [#allocation5], %s380
        %s382 = sand.u32 %s54, 1
        %s383 = smul.addr %s382, 512
        %s384 = scalar_lea.vmem [#allocation4], %s383
        %p385 = pneg %p67
        %p386 = pneg %p64
        %p387 = pneg %p95
        %p388 = pneg %p92
        %p389 = pneg %p123
        %p390 = pneg %p120
        %p391 = scmp.lt.s32.totalorder %s31, 0
        %s392 = scalar_select %p391, %s31, 0
        %s393 = scalar_lea.vmem %s3, %s392
        %p394 = pneg %p149
        %p395 = pneg %p146
        %p396 = scmp.lt.s32.totalorder %s31, 0
        %s397 = scalar_select %p396, %s31, 0
        %s398 = scalar_lea.vmem %s4, %s397
        %p399 = pneg %p175
        %p400 = pneg %p172
        %p401 = scmp.lt.s32.totalorder %s31, 0
        %s402 = scalar_select %p401, %s31, 0
        %s403 = scalar_lea.vmem %s5, %s402
        %p404 = pneg %p201
        %p405 = pneg %p198
        %p406 = scmp.lt.s32.totalorder %s31, 0
        %s407 = scalar_select %p406, %s31, 0
        %s408 = scalar_lea.vmem %s6, %s407
        %p409 = pneg %p227
        %p410 = pneg %p224
        %p411 = pneg %p255
        %p412 = pneg %p252
        %s413 = sand.u32 %s242, 1
        %s414 = scalar_lea.sflag [#allocation6], %s413
        %s415 = sand.u32 %s242, 1
        %s416 = smul.addr %s415, 512
        %s417 = scalar_lea.vmem [#allocation10], %s416
        %s418 = smul.u32 64, %s30
        %s419 = smul.u32 2, %s32
        %s420 = smul.u32 32, %s32
        %s421 = smul.u32 32, %s32
        %p422 = scmp.lt.s32.totalorder %s31, 0
        %s423 = scalar_select %p422, %s31, 0
        %s424 = scalar_lea.vmem %s3, %s423
        %p425 = scmp.lt.s32.totalorder %s31, 0
        %s426 = scalar_select %p425, %s31, 0
        %s427 = scalar_lea.vmem %s4, %s426
        %p428 = scmp.lt.s32.totalorder %s31, 0
        %s429 = scalar_select %p428, %s31, 0
        %s430 = scalar_lea.vmem %s5, %s429
        %p431 = scmp.lt.s32.totalorder %s31, 0
        %s432 = scalar_select %p431, %s31, 0
        %s433 = scalar_lea.vmem %s6, %s432
        %s434 = smul.u32 64, %s30
        %p436 = scmp.eq.s32.totalorder %s32, 0
        // Predicated region
        $region61: #{tpu_custom_call.1} parent=47 // pred_check
          %p437 = pneg %p436
        $region62: #{tpu_custom_call.1} parent=47 // pred_check_branch
          %439 = sbr.rel (%p437) target = $region64
        $region63: #{tpu_custom_call.1} parent=47 // pred_region
          %440 = vst [vmem:[#allocation2] sm:$0xff] 0.0
          %441 = vst [vmem:[#allocation2 + $0x8] sm:$0xff] 0.0
          %442 = vst [vmem:[#allocation2 + $0x10] sm:$0xff] 0.0
          %443 = vst [vmem:[#allocation2 + $0x18] sm:$0xff] 0.0
          %444 = vst [vmem:[#allocation2 + $0x20] sm:$0xff] 0.0
          %445 = vst [vmem:[#allocation2 + $0x28] sm:$0xff] 0.0
          %446 = vst [vmem:[#allocation2 + $0x30] sm:$0xff] 0.0
          %447 = vst [vmem:[#allocation2 + $0x38] sm:$0xff] 0.0
          %448 = vst [vmem:[#allocation2 + $0x40] sm:$0xff] 0.0
          %449 = vst [vmem:[#allocation2 + $0x48] sm:$0xff] 0.0
          %450 = vst [vmem:[#allocation2 + $0x50] sm:$0xff] 0.0
          %451 = vst [vmem:[#allocation2 + $0x58] sm:$0xff] 0.0
          %452 = vst [vmem:[#allocation2 + $0x60] sm:$0xff] 0.0
          %453 = vst [vmem:[#allocation2 + $0x68] sm:$0xff] 0.0
          %454 = vst [vmem:[#allocation2 + $0x70] sm:$0xff] 0.0
          %455 = vst [vmem:[#allocation2 + $0x78] sm:$0xff] 0.0
          %456 = vst [vmem:[#allocation2 + $0x80] sm:$0xff] 0.0
          %457 = vst [vmem:[#allocation2 + $0x88] sm:$0xff] 0.0
          %458 = vst [vmem:[#allocation2 + $0x90] sm:$0xff] 0.0
          %459 = vst [vmem:[#allocation2 + $0x98] sm:$0xff] 0.0
          %460 = vst [vmem:[#allocation2 + $0xa0] sm:$0xff] 0.0
          %461 = vst [vmem:[#allocation2 + $0xa8] sm:$0xff] 0.0
          %462 = vst [vmem:[#allocation2 + $0xb0] sm:$0xff] 0.0
          %463 = vst [vmem:[#allocation2 + $0xb8] sm:$0xff] 0.0
          %464 = vst [vmem:[#allocation2 + $0xc0] sm:$0xff] 0.0
          %465 = vst [vmem:[#allocation2 + $0xc8] sm:$0xff] 0.0
          %466 = vst [vmem:[#allocation2 + $0xd0] sm:$0xff] 0.0
          %467 = vst [vmem:[#allocation2 + $0xd8] sm:$0xff] 0.0
          %468 = vst [vmem:[#allocation2 + $0xe0] sm:$0xff] 0.0
          %469 = vst [vmem:[#allocation2 + $0xe8] sm:$0xff] 0.0
          %470 = vst [vmem:[#allocation2 + $0xf0] sm:$0xff] 0.0
          %471 = vst [vmem:[#allocation2 + $0xf8] sm:$0xff] 0.0
          %472 = vst [vmem:[#allocation2 + $0x100] sm:$0xff] 0.0
          %473 = vst [vmem:[#allocation2 + $0x108] sm:$0xff] 0.0
          %474 = vst [vmem:[#allocation2 + $0x110] sm:$0xff] 0.0
          %475 = vst [vmem:[#allocation2 + $0x118] sm:$0xff] 0.0
          %476 = vst [vmem:[#allocation2 + $0x120] sm:$0xff] 0.0
          %477 = vst [vmem:[#allocation2 + $0x128] sm:$0xff] 0.0
          %478 = vst [vmem:[#allocation2 + $0x130] sm:$0xff] 0.0
          %479 = vst [vmem:[#allocation2 + $0x138] sm:$0xff] 0.0
          %480 = vst [vmem:[#allocation2 + $0x140] sm:$0xff] 0.0
          %481 = vst [vmem:[#allocation2 + $0x148] sm:$0xff] 0.0
          %482 = vst [vmem:[#allocation2 + $0x150] sm:$0xff] 0.0
          %483 = vst [vmem:[#allocation2 + $0x158] sm:$0xff] 0.0
          %484 = vst [vmem:[#allocation2 + $0x160] sm:$0xff] 0.0
          %485 = vst [vmem:[#allocation2 + $0x168] sm:$0xff] 0.0
          %486 = vst [vmem:[#allocation2 + $0x170] sm:$0xff] 0.0
          %487 = vst [vmem:[#allocation2 + $0x178] sm:$0xff] 0.0
          %488 = vst [vmem:[#allocation2 + $0x180] sm:$0xff] 0.0
          %489 = vst [vmem:[#allocation2 + $0x188] sm:$0xff] 0.0
          %490 = vst [vmem:[#allocation2 + $0x190] sm:$0xff] 0.0
          %491 = vst [vmem:[#allocation2 + $0x198] sm:$0xff] 0.0
          %492 = vst [vmem:[#allocation2 + $0x1a0] sm:$0xff] 0.0
          %493 = vst [vmem:[#allocation2 + $0x1a8] sm:$0xff] 0.0
          %494 = vst [vmem:[#allocation2 + $0x1b0] sm:$0xff] 0.0
          %495 = vst [vmem:[#allocation2 + $0x1b8] sm:$0xff] 0.0
          %496 = vst [vmem:[#allocation2 + $0x1c0] sm:$0xff] 0.0
          %497 = vst [vmem:[#allocation2 + $0x1c8] sm:$0xff] 0.0
          %498 = vst [vmem:[#allocation2 + $0x1d0] sm:$0xff] 0.0
          %499 = vst [vmem:[#allocation2 + $0x1d8] sm:$0xff] 0.0
          %500 = vst [vmem:[#allocation2 + $0x1e0] sm:$0xff] 0.0
          %501 = vst [vmem:[#allocation2 + $0x1e8] sm:$0xff] 0.0
          %502 = vst [vmem:[#allocation2 + $0x1f0] sm:$0xff] 0.0
          %503 = vst [vmem:[#allocation2 + $0x1f8] sm:$0xff] 0.0
          %504 = vst [vmem:[#allocation3] sm:$0xff] 0.0
          %505 = vst [vmem:[#allocation3 + $0x8] sm:$0xff] 0.0
          %506 = vst [vmem:[#allocation3 + $0x10] sm:$0xff] 0.0
          %507 = vst [vmem:[#allocation3 + $0x18] sm:$0xff] 0.0
          %508 = vst [vmem:[#allocation3 + $0x20] sm:$0xff] 0.0
          %509 = vst [vmem:[#allocation3 + $0x28] sm:$0xff] 0.0
          %510 = vst [vmem:[#allocation3 + $0x30] sm:$0xff] 0.0
          %511 = vst [vmem:[#allocation3 + $0x38] sm:$0xff] 0.0
          %512 = vst [vmem:[#allocation3 + $0x40] sm:$0xff] 0.0
          %513 = vst [vmem:[#allocation3 + $0x48] sm:$0xff] 0.0
          %514 = vst [vmem:[#allocation3 + $0x50] sm:$0xff] 0.0
          %515 = vst [vmem:[#allocation3 + $0x58] sm:$0xff] 0.0
          %516 = vst [vmem:[#allocation3 + $0x60] sm:$0xff] 0.0
          %517 = vst [vmem:[#allocation3 + $0x68] sm:$0xff] 0.0
          %518 = vst [vmem:[#allocation3 + $0x70] sm:$0xff] 0.0
          %519 = vst [vmem:[#allocation3 + $0x78] sm:$0xff] 0.0
          %520 = vst [vmem:[#allocation3 + $0x80] sm:$0xff] 0.0
          %521 = vst [vmem:[#allocation3 + $0x88] sm:$0xff] 0.0
          %522 = vst [vmem:[#allocation3 + $0x90] sm:$0xff] 0.0
          %523 = vst [vmem:[#allocation3 + $0x98] sm:$0xff] 0.0
          %524 = vst [vmem:[#allocation3 + $0xa0] sm:$0xff] 0.0
          %525 = vst [vmem:[#allocation3 + $0xa8] sm:$0xff] 0.0
          %526 = vst [vmem:[#allocation3 + $0xb0] sm:$0xff] 0.0
          %527 = vst [vmem:[#allocation3 + $0xb8] sm:$0xff] 0.0
          %528 = vst [vmem:[#allocation3 + $0xc0] sm:$0xff] 0.0
          %529 = vst [vmem:[#allocation3 + $0xc8] sm:$0xff] 0.0
          %530 = vst [vmem:[#allocation3 + $0xd0] sm:$0xff] 0.0
          %531 = vst [vmem:[#allocation3 + $0xd8] sm:$0xff] 0.0
          %532 = vst [vmem:[#allocation3 + $0xe0] sm:$0xff] 0.0
          %533 = vst [vmem:[#allocation3 + $0xe8] sm:$0xff] 0.0
          %534 = vst [vmem:[#allocation3 + $0xf0] sm:$0xff] 0.0
          %535 = vst [vmem:[#allocation3 + $0xf8] sm:$0xff] 0.0
          %536 = vst [vmem:[#allocation3 + $0x100] sm:$0xff] 0.0
          %537 = vst [vmem:[#allocation3 + $0x108] sm:$0xff] 0.0
          %538 = vst [vmem:[#allocation3 + $0x110] sm:$0xff] 0.0
          %539 = vst [vmem:[#allocation3 + $0x118] sm:$0xff] 0.0
          %540 = vst [vmem:[#allocation3 + $0x120] sm:$0xff] 0.0
          %541 = vst [vmem:[#allocation3 + $0x128] sm:$0xff] 0.0
          %542 = vst [vmem:[#allocation3 + $0x130] sm:$0xff] 0.0
          %543 = vst [vmem:[#allocation3 + $0x138] sm:$0xff] 0.0
          %544 = vst [vmem:[#allocation3 + $0x140] sm:$0xff] 0.0
          %545 = vst [vmem:[#allocation3 + $0x148] sm:$0xff] 0.0
          %546 = vst [vmem:[#allocation3 + $0x150] sm:$0xff] 0.0
          %547 = vst [vmem:[#allocation3 + $0x158] sm:$0xff] 0.0
          %548 = vst [vmem:[#allocation3 + $0x160] sm:$0xff] 0.0
          %549 = vst [vmem:[#allocation3 + $0x168] sm:$0xff] 0.0
          %550 = vst [vmem:[#allocation3 + $0x170] sm:$0xff] 0.0
          %551 = vst [vmem:[#allocation3 + $0x178] sm:$0xff] 0.0
          %552 = vst [vmem:[#allocation3 + $0x180] sm:$0xff] 0.0
          %553 = vst [vmem:[#allocation3 + $0x188] sm:$0xff] 0.0
          %554 = vst [vmem:[#allocation3 + $0x190] sm:$0xff] 0.0
          %555 = vst [vmem:[#allocation3 + $0x198] sm:$0xff] 0.0
          %556 = vst [vmem:[#allocation3 + $0x1a0] sm:$0xff] 0.0
          %557 = vst [vmem:[#allocation3 + $0x1a8] sm:$0xff] 0.0
          %558 = vst [vmem:[#allocation3 + $0x1b0] sm:$0xff] 0.0
          %559 = vst [vmem:[#allocation3 + $0x1b8] sm:$0xff] 0.0
          %560 = vst [vmem:[#allocation3 + $0x1c0] sm:$0xff] 0.0
          %561 = vst [vmem:[#allocation3 + $0x1c8] sm:$0xff] 0.0
          %562 = vst [vmem:[#allocation3 + $0x1d0] sm:$0xff] 0.0
          %563 = vst [vmem:[#allocation3 + $0x1d8] sm:$0xff] 0.0
          %564 = vst [vmem:[#allocation3 + $0x1e0] sm:$0xff] 0.0
          %565 = vst [vmem:[#allocation3 + $0x1e8] sm:$0xff] 0.0
          %566 = vst [vmem:[#allocation3 + $0x1f0] sm:$0xff] 0.0
          %567 = vst [vmem:[#allocation3 + $0x1f8] sm:$0xff] 0.0
        $region64: #{tpu_custom_call.1} parent=47 // pred_fallthru
          _
        %v568 = vld [vmem:[%s367] sm:$0xff]
        %v569 = vld [vmem:[%s367 + $0x8] sm:$0xff]
        %v570 = vld [vmem:[%s367 + $0x10] sm:$0xff]
        %v571 = vld [vmem:[%s367 + $0x18] sm:$0xff]
        %v572 = vld [vmem:[%s367 + $0x20] sm:$0xff]
        %v573 = vld [vmem:[%s367 + $0x28] sm:$0xff]
        %v574 = vld [vmem:[%s367 + $0x30] sm:$0xff]
        %v575 = vld [vmem:[%s367 + $0x38] sm:$0xff]
        %v576 = vld [vmem:[%s367 + $0x40] sm:$0xff]
        %v577 = vld [vmem:[%s367 + $0x48] sm:$0xff]
        %v578 = vld [vmem:[%s367 + $0x50] sm:$0xff]
        %v579 = vld [vmem:[%s367 + $0x58] sm:$0xff]
        %v580 = vld [vmem:[%s367 + $0x60] sm:$0xff]
        %v581 = vld [vmem:[%s367 + $0x68] sm:$0xff]
        %v582 = vld [vmem:[%s367 + $0x70] sm:$0xff]
        %v583 = vld [vmem:[%s367 + $0x78] sm:$0xff]
        %v584 = vld [vmem:[%s367 + $0x80] sm:$0xff]
        %v585 = vld [vmem:[%s367 + $0x88] sm:$0xff]
        %v586 = vld [vmem:[%s367 + $0x90] sm:$0xff]
        %v587 = vld [vmem:[%s367 + $0x98] sm:$0xff]
        %v588 = vld [vmem:[%s367 + $0xa0] sm:$0xff]
        %v589 = vld [vmem:[%s367 + $0xa8] sm:$0xff]
        %v590 = vld [vmem:[%s367 + $0xb0] sm:$0xff]
        %v591 = vld [vmem:[%s367 + $0xb8] sm:$0xff]
        %v592 = vld [vmem:[%s367 + $0xc0] sm:$0xff]
        %v593 = vld [vmem:[%s367 + $0xc8] sm:$0xff]
        %v594 = vld [vmem:[%s367 + $0xd0] sm:$0xff]
        %v595 = vld [vmem:[%s367 + $0xd8] sm:$0xff]
        %v596 = vld [vmem:[%s367 + $0xe0] sm:$0xff]
        %v597 = vld [vmem:[%s367 + $0xe8] sm:$0xff]
        %v598 = vld [vmem:[%s367 + $0xf0] sm:$0xff]
        %v599 = vld [vmem:[%s367 + $0xf8] sm:$0xff]
        %v600 = vld [vmem:[%s367 + $0x100] sm:$0xff]
        %v601 = vld [vmem:[%s367 + $0x108] sm:$0xff]
        %v602 = vld [vmem:[%s367 + $0x110] sm:$0xff]
        %v603 = vld [vmem:[%s367 + $0x118] sm:$0xff]
        %v604 = vld [vmem:[%s367 + $0x120] sm:$0xff]
        %v605 = vld [vmem:[%s367 + $0x128] sm:$0xff]
        %v606 = vld [vmem:[%s367 + $0x130] sm:$0xff]
        %v607 = vld [vmem:[%s367 + $0x138] sm:$0xff]
        %v608 = vld [vmem:[%s367 + $0x140] sm:$0xff]
        %v609 = vld [vmem:[%s367 + $0x148] sm:$0xff]
        %v610 = vld [vmem:[%s367 + $0x150] sm:$0xff]
        %v611 = vld [vmem:[%s367 + $0x158] sm:$0xff]
        %v612 = vld [vmem:[%s367 + $0x160] sm:$0xff]
        %v613 = vld [vmem:[%s367 + $0x168] sm:$0xff]
        %v614 = vld [vmem:[%s367 + $0x170] sm:$0xff]
        %v615 = vld [vmem:[%s367 + $0x178] sm:$0xff]
        %v616 = vld [vmem:[%s367 + $0x180] sm:$0xff]
        %v617 = vld [vmem:[%s367 + $0x188] sm:$0xff]
        %v618 = vld [vmem:[%s367 + $0x190] sm:$0xff]
        %v619 = vld [vmem:[%s367 + $0x198] sm:$0xff]
        %v620 = vld [vmem:[%s367 + $0x1a0] sm:$0xff]
        %v621 = vld [vmem:[%s367 + $0x1a8] sm:$0xff]
        %v622 = vld [vmem:[%s367 + $0x1b0] sm:$0xff]
        %v623 = vld [vmem:[%s367 + $0x1b8] sm:$0xff]
        %v624 = vld [vmem:[%s367 + $0x1c0] sm:$0xff]
        %v625 = vld [vmem:[%s367 + $0x1c8] sm:$0xff]
        %v626 = vld [vmem:[%s367 + $0x1d0] sm:$0xff]
        %v627 = vld [vmem:[%s367 + $0x1d8] sm:$0xff]
        %v628 = vld [vmem:[%s367 + $0x1e0] sm:$0xff]
        %v629 = vld [vmem:[%s367 + $0x1e8] sm:$0xff]
        %v630 = vld [vmem:[%s367 + $0x1f0] sm:$0xff]
        %v631 = vld [vmem:[%s367 + $0x1f8] sm:$0xff]
        %v632 = vld [vmem:[#allocation2] sm:$0xff]
        %v633 = vld [vmem:[#allocation2 + $0x8] sm:$0xff]
        %v634 = vld [vmem:[#allocation2 + $0x10] sm:$0xff]
        %v635 = vld [vmem:[#allocation2 + $0x18] sm:$0xff]
        %v636 = vld [vmem:[#allocation2 + $0x20] sm:$0xff]
        %v637 = vld [vmem:[#allocation2 + $0x28] sm:$0xff]
        %v638 = vld [vmem:[#allocation2 + $0x30] sm:$0xff]
        %v639 = vld [vmem:[#allocation2 + $0x38] sm:$0xff]
        %v640 = vld [vmem:[#allocation2 + $0x40] sm:$0xff]
        %v641 = vld [vmem:[#allocation2 + $0x48] sm:$0xff]
        %v642 = vld [vmem:[#allocation2 + $0x50] sm:$0xff]
        %v643 = vld [vmem:[#allocation2 + $0x58] sm:$0xff]
        %v644 = vld [vmem:[#allocation2 + $0x60] sm:$0xff]
        %v645 = vld [vmem:[#allocation2 + $0x68] sm:$0xff]
        %v646 = vld [vmem:[#allocation2 + $0x70] sm:$0xff]
        %v647 = vld [vmem:[#allocation2 + $0x78] sm:$0xff]
        %v648 = vld [vmem:[#allocation2 + $0x80] sm:$0xff]
        %v649 = vld [vmem:[#allocation2 + $0x88] sm:$0xff]
        %v650 = vld [vmem:[#allocation2 + $0x90] sm:$0xff]
        %v651 = vld [vmem:[#allocation2 + $0x98] sm:$0xff]
        %v652 = vld [vmem:[#allocation2 + $0xa0] sm:$0xff]
        %v653 = vld [vmem:[#allocation2 + $0xa8] sm:$0xff]
        %v654 = vld [vmem:[#allocation2 + $0xb0] sm:$0xff]
        %v655 = vld [vmem:[#allocation2 + $0xb8] sm:$0xff]
        %v656 = vld [vmem:[#allocation2 + $0xc0] sm:$0xff]
        %v657 = vld [vmem:[#allocation2 + $0xc8] sm:$0xff]
        %v658 = vld [vmem:[#allocation2 + $0xd0] sm:$0xff]
        %v659 = vld [vmem:[#allocation2 + $0xd8] sm:$0xff]
        %v660 = vld [vmem:[#allocation2 + $0xe0] sm:$0xff]
        %v661 = vld [vmem:[#allocation2 + $0xe8] sm:$0xff]
        %v662 = vld [vmem:[#allocation2 + $0xf0] sm:$0xff]
        %v663 = vld [vmem:[#allocation2 + $0xf8] sm:$0xff]
        %v664 = vld [vmem:[#allocation2 + $0x100] sm:$0xff]
        %v665 = vld [vmem:[#allocation2 + $0x108] sm:$0xff]
        %v666 = vld [vmem:[#allocation2 + $0x110] sm:$0xff]
        %v667 = vld [vmem:[#allocation2 + $0x118] sm:$0xff]
        %v668 = vld [vmem:[#allocation2 + $0x120] sm:$0xff]
        %v669 = vld [vmem:[#allocation2 + $0x128] sm:$0xff]
        %v670 = vld [vmem:[#allocation2 + $0x130] sm:$0xff]
        %v671 = vld [vmem:[#allocation2 + $0x138] sm:$0xff]
        %v672 = vld [vmem:[#allocation2 + $0x140] sm:$0xff]
        %v673 = vld [vmem:[#allocation2 + $0x148] sm:$0xff]
        %v674 = vld [vmem:[#allocation2 + $0x150] sm:$0xff]
        %v675 = vld [vmem:[#allocation2 + $0x158] sm:$0xff]
        %v676 = vld [vmem:[#allocation2 + $0x160] sm:$0xff]
        %v677 = vld [vmem:[#allocation2 + $0x168] sm:$0xff]
        %v678 = vld [vmem:[#allocation2 + $0x170] sm:$0xff]
        %v679 = vld [vmem:[#allocation2 + $0x178] sm:$0xff]
        %v680 = vld [vmem:[#allocation2 + $0x180] sm:$0xff]
        %v681 = vld [vmem:[#allocation2 + $0x188] sm:$0xff]
        %v682 = vld [vmem:[#allocation2 + $0x190] sm:$0xff]
        %v683 = vld [vmem:[#allocation2 + $0x198] sm:$0xff]
        %v684 = vld [vmem:[#allocation2 + $0x1a0] sm:$0xff]
        %v685 = vld [vmem:[#allocation2 + $0x1a8] sm:$0xff]
        %v686 = vld [vmem:[#allocation2 + $0x1b0] sm:$0xff]
        %v687 = vld [vmem:[#allocation2 + $0x1b8] sm:$0xff]
        %v688 = vld [vmem:[#allocation2 + $0x1c0] sm:$0xff]
        %v689 = vld [vmem:[#allocation2 + $0x1c8] sm:$0xff]
        %v690 = vld [vmem:[#allocation2 + $0x1d0] sm:$0xff]
        %v691 = vld [vmem:[#allocation2 + $0x1d8] sm:$0xff]
        %v692 = vld [vmem:[#allocation2 + $0x1e0] sm:$0xff]
        %v693 = vld [vmem:[#allocation2 + $0x1e8] sm:$0xff]
        %v694 = vld [vmem:[#allocation2 + $0x1f0] sm:$0xff]
        %v695 = vld [vmem:[#allocation2 + $0x1f8] sm:$0xff]
        %v696 = vld [vmem:[#allocation7] sm:$0xf]
        %v697 = vld [vmem:[#allocation7 + $0x4] sm:$0xf]
        %v698 = vld [vmem:[#allocation7 + $0x8] sm:$0xf]
        %v699 = vld [vmem:[#allocation7 + $0xc] sm:$0xf]
        %v700 = vld [vmem:[#allocation7 + $0x10] sm:$0xf]
        %v701 = vld [vmem:[#allocation7 + $0x14] sm:$0xf]
        %v702 = vld [vmem:[#allocation7 + $0x18] sm:$0xf]
        %v703 = vld [vmem:[#allocation7 + $0x1c] sm:$0xf]
        %v704 = vld [vmem:[#allocation7 + $0x20] sm:$0xf]
        %v705 = vld [vmem:[#allocation7 + $0x24] sm:$0xf]
        %v706 = vld [vmem:[#allocation7 + $0x28] sm:$0xf]
        %v707 = vld [vmem:[#allocation7 + $0x2c] sm:$0xf]
        %v708 = vld [vmem:[#allocation7 + $0x30] sm:$0xf]
        %v709 = vld [vmem:[#allocation7 + $0x34] sm:$0xf]
        %v710 = vld [vmem:[#allocation7 + $0x38] sm:$0xf]
        %v711 = vld [vmem:[#allocation7 + $0x3c] sm:$0xf]
        %v712 = vld [vmem:[#allocation7 + $0x40] sm:$0xf]
        %v713 = vld [vmem:[#allocation7 + $0x44] sm:$0xf]
        %v714 = vld [vmem:[#allocation7 + $0x48] sm:$0xf]
        %v715 = vld [vmem:[#allocation7 + $0x4c] sm:$0xf]
        %v716 = vld [vmem:[#allocation7 + $0x50] sm:$0xf]
        %v717 = vld [vmem:[#allocation7 + $0x54] sm:$0xf]
        %v718 = vld [vmem:[#allocation7 + $0x58] sm:$0xf]
        %v719 = vld [vmem:[#allocation7 + $0x5c] sm:$0xf]
        %v720 = vld [vmem:[#allocation7 + $0x60] sm:$0xf]
        %v721 = vld [vmem:[#allocation7 + $0x64] sm:$0xf]
        %v722 = vld [vmem:[#allocation7 + $0x68] sm:$0xf]
        %v723 = vld [vmem:[#allocation7 + $0x6c] sm:$0xf]
        %v724 = vld [vmem:[#allocation7 + $0x70] sm:$0xf]
        %v725 = vld [vmem:[#allocation7 + $0x74] sm:$0xf]
        %v726 = vld [vmem:[#allocation7 + $0x78] sm:$0xf]
        %v727 = vld [vmem:[#allocation7 + $0x7c] sm:$0xf]
        %v792 = vunpack.c.l.b16 %v568
        %v793 = vunpack.c.h.b16 %v568
        %v794 = vunpack.c.l.b16 %v569
        %v795 = vunpack.c.h.b16 %v569
        %v796 = vunpack.c.l.b16 %v570
        %v797 = vunpack.c.h.b16 %v570
        %v798 = vunpack.c.l.b16 %v571
        %v799 = vunpack.c.h.b16 %v571
        %v800 = vunpack.c.l.b16 %v572
        %v801 = vunpack.c.h.b16 %v572
        %v802 = vunpack.c.l.b16 %v573
        %v803 = vunpack.c.h.b16 %v573
        %v804 = vunpack.c.l.b16 %v574
        %v805 = vunpack.c.h.b16 %v574
        %v806 = vunpack.c.l.b16 %v575
        %v807 = vunpack.c.h.b16 %v575
        %v808 = vunpack.c.l.b16 %v576
        %v809 = vunpack.c.h.b16 %v576
        %v810 = vunpack.c.l.b16 %v577
        %v811 = vunpack.c.h.b16 %v577
        %v812 = vunpack.c.l.b16 %v578
        %v813 = vunpack.c.h.b16 %v578
        %v814 = vunpack.c.l.b16 %v579
        %v815 = vunpack.c.h.b16 %v579
        %v816 = vunpack.c.l.b16 %v580
        %v817 = vunpack.c.h.b16 %v580
        %v818 = vunpack.c.l.b16 %v581
        %v819 = vunpack.c.h.b16 %v581
        %v820 = vunpack.c.l.b16 %v582
        %v821 = vunpack.c.h.b16 %v582
        %v822 = vunpack.c.l.b16 %v583
        %v823 = vunpack.c.h.b16 %v583
        %v824 = vunpack.c.l.b16 %v584
        %v825 = vunpack.c.h.b16 %v584
        %v826 = vunpack.c.l.b16 %v585
        %v827 = vunpack.c.h.b16 %v585
        %v828 = vunpack.c.l.b16 %v586
        %v829 = vunpack.c.h.b16 %v586
        %v830 = vunpack.c.l.b16 %v587
        %v831 = vunpack.c.h.b16 %v587
        %v832 = vunpack.c.l.b16 %v588
        %v833 = vunpack.c.h.b16 %v588
        %v834 = vunpack.c.l.b16 %v589
        %v835 = vunpack.c.h.b16 %v589
        %v836 = vunpack.c.l.b16 %v590
        %v837 = vunpack.c.h.b16 %v590
        %v838 = vunpack.c.l.b16 %v591
        %v839 = vunpack.c.h.b16 %v591
        %v840 = vunpack.c.l.b16 %v592
        %v841 = vunpack.c.h.b16 %v592
        %v842 = vunpack.c.l.b16 %v593
        %v843 = vunpack.c.h.b16 %v593
        %v844 = vunpack.c.l.b16 %v594
        %v845 = vunpack.c.h.b16 %v594
        %v846 = vunpack.c.l.b16 %v595
        %v847 = vunpack.c.h.b16 %v595
        %v848 = vunpack.c.l.b16 %v596
        %v849 = vunpack.c.h.b16 %v596
        %v850 = vunpack.c.l.b16 %v597
        %v851 = vunpack.c.h.b16 %v597
        %v852 = vunpack.c.l.b16 %v598
        %v853 = vunpack.c.h.b16 %v598
        %v854 = vunpack.c.l.b16 %v599
        %v855 = vunpack.c.h.b16 %v599
        %v856 = vunpack.c.l.b16 %v600
        %v857 = vunpack.c.h.b16 %v600
        %v858 = vunpack.c.l.b16 %v601
        %v859 = vunpack.c.h.b16 %v601
        %v860 = vunpack.c.l.b16 %v602
        %v861 = vunpack.c.h.b16 %v602
        %v862 = vunpack.c.l.b16 %v603
        %v863 = vunpack.c.h.b16 %v603
        %v864 = vunpack.c.l.b16 %v604
        %v865 = vunpack.c.h.b16 %v604
        %v866 = vunpack.c.l.b16 %v605
        %v867 = vunpack.c.h.b16 %v605
        %v868 = vunpack.c.l.b16 %v606
        %v869 = vunpack.c.h.b16 %v606
        %v870 = vunpack.c.l.b16 %v607
        %v871 = vunpack.c.h.b16 %v607
        %v872 = vunpack.c.l.b16 %v608
        %v873 = vunpack.c.h.b16 %v608
        %v874 = vunpack.c.l.b16 %v609
        %v875 = vunpack.c.h.b16 %v609
        %v876 = vunpack.c.l.b16 %v610
        %v877 = vunpack.c.h.b16 %v610
        %v878 = vunpack.c.l.b16 %v611
        %v879 = vunpack.c.h.b16 %v611
        %v880 = vunpack.c.l.b16 %v612
        %v881 = vunpack.c.h.b16 %v612
        %v882 = vunpack.c.l.b16 %v613
        %v883 = vunpack.c.h.b16 %v613
        %v884 = vunpack.c.l.b16 %v614
        %v885 = vunpack.c.h.b16 %v614
        %v886 = vunpack.c.l.b16 %v615
        %v887 = vunpack.c.h.b16 %v615
        %v888 = vunpack.c.l.b16 %v616
        %v889 = vunpack.c.h.b16 %v616
        %v890 = vunpack.c.l.b16 %v617
        %v891 = vunpack.c.h.b16 %v617
        %v892 = vunpack.c.l.b16 %v618
        %v893 = vunpack.c.h.b16 %v618
        %v894 = vunpack.c.l.b16 %v619
        %v895 = vunpack.c.h.b16 %v619
        %v896 = vunpack.c.l.b16 %v620
        %v897 = vunpack.c.h.b16 %v620
        %v898 = vunpack.c.l.b16 %v621
        %v899 = vunpack.c.h.b16 %v621
        %v900 = vunpack.c.l.b16 %v622
        %v901 = vunpack.c.h.b16 %v622
        %v902 = vunpack.c.l.b16 %v623
        %v903 = vunpack.c.h.b16 %v623
        %v904 = vunpack.c.l.b16 %v624
        %v905 = vunpack.c.h.b16 %v624
        %v906 = vunpack.c.l.b16 %v625
        %v907 = vunpack.c.h.b16 %v625
        %v908 = vunpack.c.l.b16 %v626
        %v909 = vunpack.c.h.b16 %v626
        %v910 = vunpack.c.l.b16 %v627
        %v911 = vunpack.c.h.b16 %v627
        %v912 = vunpack.c.l.b16 %v628
        %v913 = vunpack.c.h.b16 %v628
        %v914 = vunpack.c.l.b16 %v629
        %v915 = vunpack.c.h.b16 %v629
        %v916 = vunpack.c.l.b16 %v630
        %v917 = vunpack.c.h.b16 %v630
        %v918 = vunpack.c.l.b16 %v631
        %v919 = vunpack.c.h.b16 %v631
        %v920 = vpack.c.b16 %v794, %v792
        %v921 = vpack.c.b16 %v795, %v793
        %v922 = vpack.c.b16 %v798, %v796
        %v923 = vpack.c.b16 %v799, %v797
        %v924 = vpack.c.b16 %v802, %v800
        %v925 = vpack.c.b16 %v803, %v801
        %v926 = vpack.c.b16 %v806, %v804
        %v927 = vpack.c.b16 %v807, %v805
        %v928 = vpack.c.b16 %v810, %v808
        %v929 = vpack.c.b16 %v811, %v809
        %v930 = vpack.c.b16 %v814, %v812
        %v931 = vpack.c.b16 %v815, %v813
        %v932 = vpack.c.b16 %v818, %v816
        %v933 = vpack.c.b16 %v819, %v817
        %v934 = vpack.c.b16 %v822, %v820
        %v935 = vpack.c.b16 %v823, %v821
        %v936 = vpack.c.b16 %v826, %v824
        %v937 = vpack.c.b16 %v827, %v825
        %v938 = vpack.c.b16 %v830, %v828
        %v939 = vpack.c.b16 %v831, %v829
        %v940 = vpack.c.b16 %v834, %v832
        %v941 = vpack.c.b16 %v835, %v833
        %v942 = vpack.c.b16 %v838, %v836
        %v943 = vpack.c.b16 %v839, %v837
        %v944 = vpack.c.b16 %v842, %v840
        %v945 = vpack.c.b16 %v843, %v841
        %v946 = vpack.c.b16 %v846, %v844
        %v947 = vpack.c.b16 %v847, %v845
        %v948 = vpack.c.b16 %v850, %v848
        %v949 = vpack.c.b16 %v851, %v849
        %v950 = vpack.c.b16 %v854, %v852
        %v951 = vpack.c.b16 %v855, %v853
        %v952 = vpack.c.b16 %v858, %v856
        %v953 = vpack.c.b16 %v859, %v857
        %v954 = vpack.c.b16 %v862, %v860
        %v955 = vpack.c.b16 %v863, %v861
        %v956 = vpack.c.b16 %v866, %v864
        %v957 = vpack.c.b16 %v867, %v865
        %v958 = vpack.c.b16 %v870, %v868
        %v959 = vpack.c.b16 %v871, %v869
        %v960 = vpack.c.b16 %v874, %v872
        %v961 = vpack.c.b16 %v875, %v873
        %v962 = vpack.c.b16 %v878, %v876
        %v963 = vpack.c.b16 %v879, %v877
        %v964 = vpack.c.b16 %v882, %v880
        %v965 = vpack.c.b16 %v883, %v881
        %v966 = vpack.c.b16 %v886, %v884
        %v967 = vpack.c.b16 %v887, %v885
        %v968 = vpack.c.b16 %v890, %v888
        %v969 = vpack.c.b16 %v891, %v889
        %v970 = vpack.c.b16 %v894, %v892
        %v971 = vpack.c.b16 %v895, %v893
        %v972 = vpack.c.b16 %v898, %v896
        %v973 = vpack.c.b16 %v899, %v897
        %v974 = vpack.c.b16 %v902, %v900
        %v975 = vpack.c.b16 %v903, %v901
        %v976 = vpack.c.b16 %v906, %v904
        %v977 = vpack.c.b16 %v907, %v905
        %v978 = vpack.c.b16 %v910, %v908
        %v979 = vpack.c.b16 %v911, %v909
        %v980 = vpack.c.b16 %v914, %v912
        %v981 = vpack.c.b16 %v915, %v913
        %v982 = vpack.c.b16 %v918, %v916
        %v983 = vpack.c.b16 %v919, %v917
        %v1080 = vunpack.c.l.b16 %v696
        %v1081 = vunpack.c.l.b16 %v697
        %v1082 = vunpack.c.l.b16 %v698
        %v1083 = vunpack.c.l.b16 %v699
        %v1084 = vunpack.c.l.b16 %v700
        %v1085 = vunpack.c.l.b16 %v701
        %v1086 = vunpack.c.l.b16 %v702
        %v1087 = vunpack.c.l.b16 %v703
        %v1088 = vunpack.c.l.b16 %v704
        %v1089 = vunpack.c.l.b16 %v705
        %v1090 = vunpack.c.l.b16 %v706
        %v1091 = vunpack.c.l.b16 %v707
        %v1092 = vunpack.c.l.b16 %v708
        %v1093 = vunpack.c.l.b16 %v709
        %v1094 = vunpack.c.l.b16 %v710
        %v1095 = vunpack.c.l.b16 %v711
        %v1096 = vunpack.c.l.b16 %v712
        %v1097 = vunpack.c.l.b16 %v713
        %v1098 = vunpack.c.l.b16 %v714
        %v1099 = vunpack.c.l.b16 %v715
        %v1100 = vunpack.c.l.b16 %v716
        %v1101 = vunpack.c.l.b16 %v717
        %v1102 = vunpack.c.l.b16 %v718
        %v1103 = vunpack.c.l.b16 %v719
        %v1104 = vunpack.c.l.b16 %v720
        %v1105 = vunpack.c.l.b16 %v721
        %v1106 = vunpack.c.l.b16 %v722
        %v1107 = vunpack.c.l.b16 %v723
        %v1108 = vunpack.c.l.b16 %v724
        %v1109 = vunpack.c.l.b16 %v725
        %v1110 = vunpack.c.l.b16 %v726
        %v1111 = vunpack.c.l.b16 %v727
        %v1112 = vpack.c.b16 %v1081, %v1080
        %v1113 = vpack.c.b16 %v1083, %v1082
        %v1114 = vpack.c.b16 %v1085, %v1084
        %v1115 = vpack.c.b16 %v1087, %v1086
        %v1116 = vpack.c.b16 %v1089, %v1088
        %v1117 = vpack.c.b16 %v1091, %v1090
        %v1118 = vpack.c.b16 %v1093, %v1092
        %v1119 = vpack.c.b16 %v1095, %v1094
        %v1120 = vpack.c.b16 %v1097, %v1096
        %v1121 = vpack.c.b16 %v1099, %v1098
        %v1122 = vpack.c.b16 %v1101, %v1100
        %v1123 = vpack.c.b16 %v1103, %v1102
        %v1124 = vpack.c.b16 %v1105, %v1104
        %v1125 = vpack.c.b16 %v1107, %v1106
        %v1126 = vpack.c.b16 %v1109, %v1108
        %v1127 = vpack.c.b16 %v1111, %v1110
        %1144 = vmatprep.subr.bf16.mxu0 0
        %1145 = vmatpush1.bf16.msra.mxu0 %v1119
        %1146 = vmatprep.subr.bf16.mxu0 0
        %1147 = vmatpush1.bf16.msra.mxu0 %v1118
        %1148 = vmatprep.subr.bf16.mxu0 0
        %1149 = vmatpush1.bf16.msra.mxu0 %v1117
        %1150 = vmatprep.subr.bf16.mxu0 0
        %1151 = vmatpush1.bf16.msra.mxu0 %v1116
        %1152 = vmatprep.subr.bf16.mxu0 0
        %1153 = vmatpush1.bf16.msra.mxu0 %v1115
        %1154 = vmatprep.subr.bf16.mxu0 0
        %1155 = vmatpush1.bf16.msra.mxu0 %v1114
        %1156 = vmatprep.subr.bf16.mxu0 0
        %1157 = vmatpush1.bf16.msra.mxu0 %v1113
        %1158 = vmatprep.subr.bf16.mxu0 0
        %1159 = vmatpush1.bf16.msra.mxu0 %v1112
        %1160 = vmatprep.subr.bf16.mxu0 0
        %1161 = vmatpush2.bf16.msra.mxu0 %v1127
        %1162 = vmatprep.subr.bf16.mxu0 0
        %1163 = vmatpush2.bf16.msra.mxu0 %v1126
        %1164 = vmatprep.subr.bf16.mxu0 0
        %1165 = vmatpush2.bf16.msra.mxu0 %v1125
        %1166 = vmatprep.subr.bf16.mxu0 0
        %1167 = vmatpush2.bf16.msra.mxu0 %v1124
        %1168 = vmatprep.subr.bf16.mxu0 0
        %1169 = vmatpush2.bf16.msra.mxu0 %v1123
        %1170 = vmatprep.subr.bf16.mxu0 0
        %1171 = vmatpush2.bf16.msra.mxu0 %v1122
        %1172 = vmatprep.subr.bf16.mxu0 0
        %1173 = vmatpush2.bf16.msra.mxu0 %v1121
        %1174 = vmatprep.subr.bf16.mxu0 0
        %1175 = vmatpush2.bf16.msra.mxu0 %v1120
        %1176 = vmatprep.mubr.bf16.mxu0 %v921
        %1177 = vmatmul.mubr.bf16.gmra.mxu0 %v920
        %v1178 = vpop.f32.mrf.mxu0
        %v1179 = vadd.f32 0.0, %v1178
        %v1180 = vpop.f32.mrf.mxu0
        %v1181 = vpop.f32.mrf.mxu0
        %v1182 = vadd.f32 0.0, %v1181
        %v1183 = vpop.f32.mrf.mxu0
        %1184 = vmatprep.mubr.bf16.mxu0 %v923
        %1185 = vmatmul.mubr.bf16.gmra.mxu0 %v922
        %v1186 = vpop.f32.mrf.mxu0
        %v1187 = vadd.f32 0.0, %v1186
        %v1188 = vpop.f32.mrf.mxu0
        %v1189 = vpop.f32.mrf.mxu0
        %v1190 = vadd.f32 0.0, %v1189
        %v1191 = vpop.f32.mrf.mxu0
        %1192 = vmatprep.mubr.bf16.mxu0 %v925
        %1193 = vmatmul.mubr.bf16.gmra.mxu0 %v924
        %v1194 = vpop.f32.mrf.mxu0
        %v1195 = vadd.f32 0.0, %v1194
        %v1196 = vpop.f32.mrf.mxu0
        %v1197 = vpop.f32.mrf.mxu0
        %v1198 = vadd.f32 0.0, %v1197
        %v1199 = vpop.f32.mrf.mxu0
        %1200 = vmatprep.mubr.bf16.mxu0 %v927
        %1201 = vmatmul.mubr.bf16.gmra.mxu0 %v926
        %v1202 = vpop.f32.mrf.mxu0
        %v1203 = vadd.f32 0.0, %v1202
        %v1204 = vpop.f32.mrf.mxu0
        %v1205 = vpop.f32.mrf.mxu0
        %v1206 = vadd.f32 0.0, %v1205
        %v1207 = vpop.f32.mrf.mxu0
        %1208 = vmatprep.mubr.bf16.mxu0 %v929
        %1209 = vmatmul.mubr.bf16.gmra.mxu0 %v928
        %v1210 = vpop.f32.mrf.mxu0
        %v1211 = vadd.f32 0.0, %v1210
        %v1212 = vpop.f32.mrf.mxu0
        %v1213 = vpop.f32.mrf.mxu0
        %v1214 = vadd.f32 0.0, %v1213
        %v1215 = vpop.f32.mrf.mxu0
        %1216 = vmatprep.mubr.bf16.mxu0 %v931
        %1217 = vmatmul.mubr.bf16.gmra.mxu0 %v930
        %v1218 = vpop.f32.mrf.mxu0
        %v1219 = vadd.f32 0.0, %v1218
        %v1220 = vpop.f32.mrf.mxu0
        %v1221 = vpop.f32.mrf.mxu0
        %v1222 = vadd.f32 0.0, %v1221
        %v1223 = vpop.f32.mrf.mxu0
        %1224 = vmatprep.mubr.bf16.mxu0 %v933
        %1225 = vmatmul.mubr.bf16.gmra.mxu0 %v932
        %v1226 = vpop.f32.mrf.mxu0
        %v1227 = vadd.f32 0.0, %v1226
        %v1228 = vpop.f32.mrf.mxu0
        %v1229 = vpop.f32.mrf.mxu0
        %v1230 = vadd.f32 0.0, %v1229
        %v1231 = vpop.f32.mrf.mxu0
        %1232 = vmatprep.mubr.bf16.mxu0 %v935
        %1233 = vmatmul.mubr.bf16.gmra.mxu0 %v934
        %v1234 = vpop.f32.mrf.mxu0
        %v1235 = vadd.f32 0.0, %v1234
        %v1236 = vpop.f32.mrf.mxu0
        %v1237 = vpop.f32.mrf.mxu0
        %v1238 = vadd.f32 0.0, %v1237
        %v1239 = vpop.f32.mrf.mxu0
        %1240 = vmatprep.mubr.bf16.mxu0 %v937
        %1241 = vmatmul.mubr.bf16.gmra.mxu0 %v936
        %v1242 = vpop.f32.mrf.mxu0
        %v1243 = vadd.f32 0.0, %v1242
        %v1244 = vpop.f32.mrf.mxu0
        %v1245 = vpop.f32.mrf.mxu0
        %v1246 = vadd.f32 0.0, %v1245
        %v1247 = vpop.f32.mrf.mxu0
        %1248 = vmatprep.mubr.bf16.mxu0 %v939
        %1249 = vmatmul.mubr.bf16.gmra.mxu0 %v938
        %v1250 = vpop.f32.mrf.mxu0
        %v1251 = vadd.f32 0.0, %v1250
        %v1252 = vpop.f32.mrf.mxu0
        %v1253 = vpop.f32.mrf.mxu0
        %v1254 = vadd.f32 0.0, %v1253
        %v1255 = vpop.f32.mrf.mxu0
        %1256 = vmatprep.mubr.bf16.mxu0 %v941
        %1257 = vmatmul.mubr.bf16.gmra.mxu0 %v940
        %v1258 = vpop.f32.mrf.mxu0
        %v1259 = vadd.f32 0.0, %v1258
        %v1260 = vpop.f32.mrf.mxu0
        %v1261 = vpop.f32.mrf.mxu0
        %v1262 = vadd.f32 0.0, %v1261
        %v1263 = vpop.f32.mrf.mxu0
        %1264 = vmatprep.mubr.bf16.mxu0 %v943
        %1265 = vmatmul.mubr.bf16.gmra.mxu0 %v942
        %v1266 = vpop.f32.mrf.mxu0
        %v1267 = vadd.f32 0.0, %v1266
        %v1268 = vpop.f32.mrf.mxu0
        %v1269 = vpop.f32.mrf.mxu0
        %v1270 = vadd.f32 0.0, %v1269
        %v1271 = vpop.f32.mrf.mxu0
        %1272 = vmatprep.mubr.bf16.mxu0 %v945
        %1273 = vmatmul.mubr.bf16.gmra.mxu0 %v944
        %v1274 = vpop.f32.mrf.mxu0
        %v1275 = vadd.f32 0.0, %v1274
        %v1276 = vpop.f32.mrf.mxu0
        %v1277 = vpop.f32.mrf.mxu0
        %v1278 = vadd.f32 0.0, %v1277
        %v1279 = vpop.f32.mrf.mxu0
        %1280 = vmatprep.mubr.bf16.mxu0 %v947
        %1281 = vmatmul.mubr.bf16.gmra.mxu0 %v946
        %v1282 = vpop.f32.mrf.mxu0
        %v1283 = vadd.f32 0.0, %v1282
        %v1284 = vpop.f32.mrf.mxu0
        %v1285 = vpop.f32.mrf.mxu0
        %v1286 = vadd.f32 0.0, %v1285
        %v1287 = vpop.f32.mrf.mxu0
        %1288 = vmatprep.mubr.bf16.mxu0 %v949
        %1289 = vmatmul.mubr.bf16.gmra.mxu0 %v948
        %v1290 = vpop.f32.mrf.mxu0
        %v1291 = vadd.f32 0.0, %v1290
        %v1292 = vpop.f32.mrf.mxu0
        %v1293 = vpop.f32.mrf.mxu0
        %v1294 = vadd.f32 0.0, %v1293
        %v1295 = vpop.f32.mrf.mxu0
        %1296 = vmatprep.mubr.bf16.mxu0 %v951
        %1297 = vmatmul.mubr.bf16.gmra.mxu0 %v950
        %v1298 = vpop.f32.mrf.mxu0
        %v1299 = vadd.f32 0.0, %v1298
        %v1300 = vpop.f32.mrf.mxu0
        %v1301 = vpop.f32.mrf.mxu0
        %v1302 = vadd.f32 0.0, %v1301
        %v1303 = vpop.f32.mrf.mxu0
        %1304 = vmatprep.mubr.bf16.mxu0 %v953
        %1305 = vmatmul.mubr.bf16.gmra.mxu0 %v952
        %v1306 = vpop.f32.mrf.mxu0
        %v1307 = vadd.f32 0.0, %v1306
        %v1308 = vpop.f32.mrf.mxu0
        %v1309 = vpop.f32.mrf.mxu0
        %v1310 = vadd.f32 0.0, %v1309
        %v1311 = vpop.f32.mrf.mxu0
        %1312 = vmatprep.mubr.bf16.mxu0 %v955
        %1313 = vmatmul.mubr.bf16.gmra.mxu0 %v954
        %v1314 = vpop.f32.mrf.mxu0
        %v1315 = vadd.f32 0.0, %v1314
        %v1316 = vpop.f32.mrf.mxu0
        %v1317 = vpop.f32.mrf.mxu0
        %v1318 = vadd.f32 0.0, %v1317
        %v1319 = vpop.f32.mrf.mxu0
        %1320 = vmatprep.mubr.bf16.mxu0 %v957
        %1321 = vmatmul.mubr.bf16.gmra.mxu0 %v956
        %v1322 = vpop.f32.mrf.mxu0
        %v1323 = vadd.f32 0.0, %v1322
        %v1324 = vpop.f32.mrf.mxu0
        %v1325 = vpop.f32.mrf.mxu0
        %v1326 = vadd.f32 0.0, %v1325
        %v1327 = vpop.f32.mrf.mxu0
        %1328 = vmatprep.mubr.bf16.mxu0 %v959
        %1329 = vmatmul.mubr.bf16.gmra.mxu0 %v958
        %v1330 = vpop.f32.mrf.mxu0
        %v1331 = vadd.f32 0.0, %v1330
        %v1332 = vpop.f32.mrf.mxu0
        %v1333 = vpop.f32.mrf.mxu0
        %v1334 = vadd.f32 0.0, %v1333
        %v1335 = vpop.f32.mrf.mxu0
        %1336 = vmatprep.mubr.bf16.mxu0 %v961
        %1337 = vmatmul.mubr.bf16.gmra.mxu0 %v960
        %v1338 = vpop.f32.mrf.mxu0
        %v1339 = vadd.f32 0.0, %v1338
        %v1340 = vpop.f32.mrf.mxu0
        %v1341 = vpop.f32.mrf.mxu0
        %v1342 = vadd.f32 0.0, %v1341
        %v1343 = vpop.f32.mrf.mxu0
        %1344 = vmatprep.mubr.bf16.mxu0 %v963
        %1345 = vmatmul.mubr.bf16.gmra.mxu0 %v962
        %v1346 = vpop.f32.mrf.mxu0
        %v1347 = vadd.f32 0.0, %v1346
        %v1348 = vpop.f32.mrf.mxu0
        %v1349 = vpop.f32.mrf.mxu0
        %v1350 = vadd.f32 0.0, %v1349
        %v1351 = vpop.f32.mrf.mxu0
        %1352 = vmatprep.mubr.bf16.mxu0 %v965
        %1353 = vmatmul.mubr.bf16.gmra.mxu0 %v964
        %v1354 = vpop.f32.mrf.mxu0
        %v1355 = vadd.f32 0.0, %v1354
        %v1356 = vpop.f32.mrf.mxu0
        %v1357 = vpop.f32.mrf.mxu0
        %v1358 = vadd.f32 0.0, %v1357
        %v1359 = vpop.f32.mrf.mxu0
        %1360 = vmatprep.mubr.bf16.mxu0 %v967
        %1361 = vmatmul.mubr.bf16.gmra.mxu0 %v966
        %v1362 = vpop.f32.mrf.mxu0
        %v1363 = vadd.f32 0.0, %v1362
        %v1364 = vpop.f32.mrf.mxu0
        %v1365 = vpop.f32.mrf.mxu0
        %v1366 = vadd.f32 0.0, %v1365
        %v1367 = vpop.f32.mrf.mxu0
        %1368 = vmatprep.mubr.bf16.mxu0 %v969
        %1369 = vmatmul.mubr.bf16.gmra.mxu0 %v968
        %v1370 = vpop.f32.mrf.mxu0
        %v1371 = vadd.f32 0.0, %v1370
        %v1372 = vpop.f32.mrf.mxu0
        %v1373 = vpop.f32.mrf.mxu0
        %v1374 = vadd.f32 0.0, %v1373
        %v1375 = vpop.f32.mrf.mxu0
        %1376 = vmatprep.mubr.bf16.mxu0 %v971
        %1377 = vmatmul.mubr.bf16.gmra.mxu0 %v970
        %v1378 = vpop.f32.mrf.mxu0
        %v1379 = vadd.f32 0.0, %v1378
        %v1380 = vpop.f32.mrf.mxu0
        %v1381 = vpop.f32.mrf.mxu0
        %v1382 = vadd.f32 0.0, %v1381
        %v1383 = vpop.f32.mrf.mxu0
        %1384 = vmatprep.mubr.bf16.mxu0 %v973
        %1385 = vmatmul.mubr.bf16.gmra.mxu0 %v972
        %v1386 = vpop.f32.mrf.mxu0
        %v1387 = vadd.f32 0.0, %v1386
        %v1388 = vpop.f32.mrf.mxu0
        %v1389 = vpop.f32.mrf.mxu0
        %v1390 = vadd.f32 0.0, %v1389
        %v1391 = vpop.f32.mrf.mxu0
        %1392 = vmatprep.mubr.bf16.mxu0 %v975
        %1393 = vmatmul.mubr.bf16.gmra.mxu0 %v974
        %v1394 = vpop.f32.mrf.mxu0
        %v1395 = vadd.f32 0.0, %v1394
        %v1396 = vpop.f32.mrf.mxu0
        %v1397 = vpop.f32.mrf.mxu0
        %v1398 = vadd.f32 0.0, %v1397
        %v1399 = vpop.f32.mrf.mxu0
        %1400 = vmatprep.mubr.bf16.mxu0 %v977
        %1401 = vmatmul.mubr.bf16.gmra.mxu0 %v976
        %v1402 = vpop.f32.mrf.mxu0
        %v1403 = vadd.f32 0.0, %v1402
        %v1404 = vpop.f32.mrf.mxu0
        %v1405 = vpop.f32.mrf.mxu0
        %v1406 = vadd.f32 0.0, %v1405
        %v1407 = vpop.f32.mrf.mxu0
        %1408 = vmatprep.mubr.bf16.mxu0 %v979
        %1409 = vmatmul.mubr.bf16.gmra.mxu0 %v978
        %v1410 = vpop.f32.mrf.mxu0
        %v1411 = vadd.f32 0.0, %v1410
        %v1412 = vpop.f32.mrf.mxu0
        %v1413 = vpop.f32.mrf.mxu0
        %v1414 = vadd.f32 0.0, %v1413
        %v1415 = vpop.f32.mrf.mxu0
        %1416 = vmatprep.mubr.bf16.mxu0 %v981
        %1417 = vmatmul.mubr.bf16.gmra.mxu0 %v980
        %v1418 = vpop.f32.mrf.mxu0
        %v1419 = vadd.f32 0.0, %v1418
        %v1420 = vpop.f32.mrf.mxu0
        %v1421 = vpop.f32.mrf.mxu0
        %v1422 = vadd.f32 0.0, %v1421
        %v1423 = vpop.f32.mrf.mxu0
        %1424 = vmatprep.mubr.bf16.mxu0 %v983
        %1425 = vmatmul.mubr.bf16.gmra.mxu0 %v982
        %v1426 = vpop.f32.mrf.mxu0
        %v1427 = vadd.f32 0.0, %v1426
        %v1428 = vpop.f32.mrf.mxu0
        %v1429 = vpop.f32.mrf.mxu0
        %v1430 = vadd.f32 0.0, %v1429
        %v1431 = vpop.f32.mrf.mxu0
        %1432 = vdwg.mxu0
        %v1433 = vadd.f32 %v632, %v1179
        %v1434 = vadd.f32 %v633, %v1182
        %v1435 = vadd.f32 %v634, %v1187
        %v1436 = vadd.f32 %v635, %v1190
        %v1437 = vadd.f32 %v636, %v1195
        %v1438 = vadd.f32 %v637, %v1198
        %v1439 = vadd.f32 %v638, %v1203
        %v1440 = vadd.f32 %v639, %v1206
        %v1441 = vadd.f32 %v640, %v1211
        %v1442 = vadd.f32 %v641, %v1214
        %v1443 = vadd.f32 %v642, %v1219
        %v1444 = vadd.f32 %v643, %v1222
        %v1445 = vadd.f32 %v644, %v1227
        %v1446 = vadd.f32 %v645, %v1230
        %v1447 = vadd.f32 %v646, %v1235
        %v1448 = vadd.f32 %v647, %v1238
        %v1449 = vadd.f32 %v648, %v1243
        %v1450 = vadd.f32 %v649, %v1246
        %v1451 = vadd.f32 %v650, %v1251
        %v1452 = vadd.f32 %v651, %v1254
        %v1453 = vadd.f32 %v652, %v1259
        %v1454 = vadd.f32 %v653, %v1262
        %v1455 = vadd.f32 %v654, %v1267
        %v1456 = vadd.f32 %v655, %v1270
        %v1457 = vadd.f32 %v656, %v1275
        %v1458 = vadd.f32 %v657, %v1278
        %v1459 = vadd.f32 %v658, %v1283
        %v1460 = vadd.f32 %v659, %v1286
        %v1461 = vadd.f32 %v660, %v1291
        %v1462 = vadd.f32 %v661, %v1294
        %v1463 = vadd.f32 %v662, %v1299
        %v1464 = vadd.f32 %v663, %v1302
        %v1465 = vadd.f32 %v664, %v1307
        %v1466 = vadd.f32 %v665, %v1310
        %v1467 = vadd.f32 %v666, %v1315
        %v1468 = vadd.f32 %v667, %v1318
        %v1469 = vadd.f32 %v668, %v1323
        %v1470 = vadd.f32 %v669, %v1326
        %v1471 = vadd.f32 %v670, %v1331
        %v1472 = vadd.f32 %v671, %v1334
        %v1473 = vadd.f32 %v672, %v1339
        %v1474 = vadd.f32 %v673, %v1342
        %v1475 = vadd.f32 %v674, %v1347
        %v1476 = vadd.f32 %v675, %v1350
        %v1477 = vadd.f32 %v676, %v1355
        %v1478 = vadd.f32 %v677, %v1358
        %v1479 = vadd.f32 %v678, %v1363
        %v1480 = vadd.f32 %v679, %v1366
        %v1481 = vadd.f32 %v680, %v1371
        %v1482 = vadd.f32 %v681, %v1374
        %v1483 = vadd.f32 %v682, %v1379
        %v1484 = vadd.f32 %v683, %v1382
        %v1485 = vadd.f32 %v684, %v1387
        %v1486 = vadd.f32 %v685, %v1390
        %v1487 = vadd.f32 %v686, %v1395
        %v1488 = vadd.f32 %v687, %v1398
        %v1489 = vadd.f32 %v688, %v1403
        %v1490 = vadd.f32 %v689, %v1406
        %v1491 = vadd.f32 %v690, %v1411
        %v1492 = vadd.f32 %v691, %v1414
        %v1493 = vadd.f32 %v692, %v1419
        %v1494 = vadd.f32 %v693, %v1422
        %v1495 = vadd.f32 %v694, %v1427
        %v1496 = vadd.f32 %v695, %v1430
        %1497 = vst [vmem:[#allocation2] sm:$0xff] %v1433
        %1498 = vst [vmem:[#allocation2 + $0x8] sm:$0xff] %v1434
        %1499 = vst [vmem:[#allocation2 + $0x10] sm:$0xff] %v1435
        %1500 = vst [vmem:[#allocation2 + $0x18] sm:$0xff] %v1436
        %1501 = vst [vmem:[#allocation2 + $0x20] sm:$0xff] %v1437
        %1502 = vst [vmem:[#allocation2 + $0x28] sm:$0xff] %v1438
        %1503 = vst [vmem:[#allocation2 + $0x30] sm:$0xff] %v1439
        %1504 = vst [vmem:[#allocation2 + $0x38] sm:$0xff] %v1440
        %1505 = vst [vmem:[#allocation2 + $0x40] sm:$0xff] %v1441
        %1506 = vst [vmem:[#allocation2 + $0x48] sm:$0xff] %v1442
        %1507 = vst [vmem:[#allocation2 + $0x50] sm:$0xff] %v1443
        %1508 = vst [vmem:[#allocation2 + $0x58] sm:$0xff] %v1444
        %1509 = vst [vmem:[#allocation2 + $0x60] sm:$0xff] %v1445
        %1510 = vst [vmem:[#allocation2 + $0x68] sm:$0xff] %v1446
        %1511 = vst [vmem:[#allocation2 + $0x70] sm:$0xff] %v1447
        %1512 = vst [vmem:[#allocation2 + $0x78] sm:$0xff] %v1448
        %1513 = vst [vmem:[#allocation2 + $0x80] sm:$0xff] %v1449
        %1514 = vst [vmem:[#allocation2 + $0x88] sm:$0xff] %v1450
        %1515 = vst [vmem:[#allocation2 + $0x90] sm:$0xff] %v1451
        %1516 = vst [vmem:[#allocation2 + $0x98] sm:$0xff] %v1452
        %1517 = vst [vmem:[#allocation2 + $0xa0] sm:$0xff] %v1453
        %1518 = vst [vmem:[#allocation2 + $0xa8] sm:$0xff] %v1454
        %1519 = vst [vmem:[#allocation2 + $0xb0] sm:$0xff] %v1455
        %1520 = vst [vmem:[#allocation2 + $0xb8] sm:$0xff] %v1456
        %1521 = vst [vmem:[#allocation2 + $0xc0] sm:$0xff] %v1457
        %1522 = vst [vmem:[#allocation2 + $0xc8] sm:$0xff] %v1458
        %1523 = vst [vmem:[#allocation2 + $0xd0] sm:$0xff] %v1459
        %1524 = vst [vmem:[#allocation2 + $0xd8] sm:$0xff] %v1460
        %1525 = vst [vmem:[#allocation2 + $0xe0] sm:$0xff] %v1461
        %1526 = vst [vmem:[#allocation2 + $0xe8] sm:$0xff] %v1462
        %1527 = vst [vmem:[#allocation2 + $0xf0] sm:$0xff] %v1463
        %1528 = vst [vmem:[#allocation2 + $0xf8] sm:$0xff] %v1464
        %1529 = vst [vmem:[#allocation2 + $0x100] sm:$0xff] %v1465
        %1530 = vst [vmem:[#allocation2 + $0x108] sm:$0xff] %v1466
        %1531 = vst [vmem:[#allocation2 + $0x110] sm:$0xff] %v1467
        %1532 = vst [vmem:[#allocation2 + $0x118] sm:$0xff] %v1468
        %1533 = vst [vmem:[#allocation2 + $0x120] sm:$0xff] %v1469
        %1534 = vst [vmem:[#allocation2 + $0x128] sm:$0xff] %v1470
        %1535 = vst [vmem:[#allocation2 + $0x130] sm:$0xff] %v1471
        %1536 = vst [vmem:[#allocation2 + $0x138] sm:$0xff] %v1472
        %1537 = vst [vmem:[#allocation2 + $0x140] sm:$0xff] %v1473
        %1538 = vst [vmem:[#allocation2 + $0x148] sm:$0xff] %v1474
        %1539 = vst [vmem:[#allocation2 + $0x150] sm:$0xff] %v1475
        %1540 = vst [vmem:[#allocation2 + $0x158] sm:$0xff] %v1476
        %1541 = vst [vmem:[#allocation2 + $0x160] sm:$0xff] %v1477
        %1542 = vst [vmem:[#allocation2 + $0x168] sm:$0xff] %v1478
        %1543 = vst [vmem:[#allocation2 + $0x170] sm:$0xff] %v1479
        %1544 = vst [vmem:[#allocation2 + $0x178] sm:$0xff] %v1480
        %1545 = vst [vmem:[#allocation2 + $0x180] sm:$0xff] %v1481
        %1546 = vst [vmem:[#allocation2 + $0x188] sm:$0xff] %v1482
        %1547 = vst [vmem:[#allocation2 + $0x190] sm:$0xff] %v1483
        %1548 = vst [vmem:[#allocation2 + $0x198] sm:$0xff] %v1484
        %1549 = vst [vmem:[#allocation2 + $0x1a0] sm:$0xff] %v1485
        %1550 = vst [vmem:[#allocation2 + $0x1a8] sm:$0xff] %v1486
        %1551 = vst [vmem:[#allocation2 + $0x1b0] sm:$0xff] %v1487
        %1552 = vst [vmem:[#allocation2 + $0x1b8] sm:$0xff] %v1488
        %1553 = vst [vmem:[#allocation2 + $0x1c0] sm:$0xff] %v1489
        %1554 = vst [vmem:[#allocation2 + $0x1c8] sm:$0xff] %v1490
        %1555 = vst [vmem:[#allocation2 + $0x1d0] sm:$0xff] %v1491
        %1556 = vst [vmem:[#allocation2 + $0x1d8] sm:$0xff] %v1492
        %1557 = vst [vmem:[#allocation2 + $0x1e0] sm:$0xff] %v1493
        %1558 = vst [vmem:[#allocation2 + $0x1e8] sm:$0xff] %v1494
        %1559 = vst [vmem:[#allocation2 + $0x1f0] sm:$0xff] %v1495
        %1560 = vst [vmem:[#allocation2 + $0x1f8] sm:$0xff] %v1496
        %v1561 = vld [vmem:[#allocation3] sm:$0xff]
        %v1562 = vld [vmem:[#allocation3 + $0x8] sm:$0xff]
        %v1563 = vld [vmem:[#allocation3 + $0x10] sm:$0xff]
        %v1564 = vld [vmem:[#allocation3 + $0x18] sm:$0xff]
        %v1565 = vld [vmem:[#allocation3 + $0x20] sm:$0xff]
        %v1566 = vld [vmem:[#allocation3 + $0x28] sm:$0xff]
        %v1567 = vld [vmem:[#allocation3 + $0x30] sm:$0xff]
        %v1568 = vld [vmem:[#allocation3 + $0x38] sm:$0xff]
        %v1569 = vld [vmem:[#allocation3 + $0x40] sm:$0xff]
        %v1570 = vld [vmem:[#allocation3 + $0x48] sm:$0xff]
        %v1571 = vld [vmem:[#allocation3 + $0x50] sm:$0xff]
        %v1572 = vld [vmem:[#allocation3 + $0x58] sm:$0xff]
        %v1573 = vld [vmem:[#allocation3 + $0x60] sm:$0xff]
        %v1574 = vld [vmem:[#allocation3 + $0x68] sm:$0xff]
        %v1575 = vld [vmem:[#allocation3 + $0x70] sm:$0xff]
        %v1576 = vld [vmem:[#allocation3 + $0x78] sm:$0xff]
        %v1577 = vld [vmem:[#allocation3 + $0x80] sm:$0xff]
        %v1578 = vld [vmem:[#allocation3 + $0x88] sm:$0xff]
        %v1579 = vld [vmem:[#allocation3 + $0x90] sm:$0xff]
        %v1580 = vld [vmem:[#allocation3 + $0x98] sm:$0xff]
        %v1581 = vld [vmem:[#allocation3 + $0xa0] sm:$0xff]
        %v1582 = vld [vmem:[#allocation3 + $0xa8] sm:$0xff]
        %v1583 = vld [vmem:[#allocation3 + $0xb0] sm:$0xff]
        %v1584 = vld [vmem:[#allocation3 + $0xb8] sm:$0xff]
        %v1585 = vld [vmem:[#allocation3 + $0xc0] sm:$0xff]
        %v1586 = vld [vmem:[#allocation3 + $0xc8] sm:$0xff]
        %v1587 = vld [vmem:[#allocation3 + $0xd0] sm:$0xff]
        %v1588 = vld [vmem:[#allocation3 + $0xd8] sm:$0xff]
        %v1589 = vld [vmem:[#allocation3 + $0xe0] sm:$0xff]
        %v1590 = vld [vmem:[#allocation3 + $0xe8] sm:$0xff]
        %v1591 = vld [vmem:[#allocation3 + $0xf0] sm:$0xff]
        %v1592 = vld [vmem:[#allocation3 + $0xf8] sm:$0xff]
        %v1593 = vld [vmem:[#allocation3 + $0x100] sm:$0xff]
        %v1594 = vld [vmem:[#allocation3 + $0x108] sm:$0xff]
        %v1595 = vld [vmem:[#allocation3 + $0x110] sm:$0xff]
        %v1596 = vld [vmem:[#allocation3 + $0x118] sm:$0xff]
        %v1597 = vld [vmem:[#allocation3 + $0x120] sm:$0xff]
        %v1598 = vld [vmem:[#allocation3 + $0x128] sm:$0xff]
        %v1599 = vld [vmem:[#allocation3 + $0x130] sm:$0xff]
        %v1600 = vld [vmem:[#allocation3 + $0x138] sm:$0xff]
        %v1601 = vld [vmem:[#allocation3 + $0x140] sm:$0xff]
        %v1602 = vld [vmem:[#allocation3 + $0x148] sm:$0xff]
        %v1603 = vld [vmem:[#allocation3 + $0x150] sm:$0xff]
        %v1604 = vld [vmem:[#allocation3 + $0x158] sm:$0xff]
        %v1605 = vld [vmem:[#allocation3 + $0x160] sm:$0xff]
        %v1606 = vld [vmem:[#allocation3 + $0x168] sm:$0xff]
        %v1607 = vld [vmem:[#allocation3 + $0x170] sm:$0xff]
        %v1608 = vld [vmem:[#allocation3 + $0x178] sm:$0xff]
        %v1609 = vld [vmem:[#allocation3 + $0x180] sm:$0xff]
        %v1610 = vld [vmem:[#allocation3 + $0x188] sm:$0xff]
        %v1611 = vld [vmem:[#allocation3 + $0x190] sm:$0xff]
        %v1612 = vld [vmem:[#allocation3 + $0x198] sm:$0xff]
        %v1613 = vld [vmem:[#allocation3 + $0x1a0] sm:$0xff]
        %v1614 = vld [vmem:[#allocation3 + $0x1a8] sm:$0xff]
        %v1615 = vld [vmem:[#allocation3 + $0x1b0] sm:$0xff]
        %v1616 = vld [vmem:[#allocation3 + $0x1b8] sm:$0xff]
        %v1617 = vld [vmem:[#allocation3 + $0x1c0] sm:$0xff]
        %v1618 = vld [vmem:[#allocation3 + $0x1c8] sm:$0xff]
        %v1619 = vld [vmem:[#allocation3 + $0x1d0] sm:$0xff]
        %v1620 = vld [vmem:[#allocation3 + $0x1d8] sm:$0xff]
        %v1621 = vld [vmem:[#allocation3 + $0x1e0] sm:$0xff]
        %v1622 = vld [vmem:[#allocation3 + $0x1e8] sm:$0xff]
        %v1623 = vld [vmem:[#allocation3 + $0x1f0] sm:$0xff]
        %v1624 = vld [vmem:[#allocation3 + $0x1f8] sm:$0xff]
        %v1625 = vld [vmem:[#allocation9] sm:$0xf]
        %v1626 = vld [vmem:[#allocation9 + $0x4] sm:$0xf]
        %v1627 = vld [vmem:[#allocation9 + $0x8] sm:$0xf]
        %v1628 = vld [vmem:[#allocation9 + $0xc] sm:$0xf]
        %v1629 = vld [vmem:[#allocation9 + $0x10] sm:$0xf]
        %v1630 = vld [vmem:[#allocation9 + $0x14] sm:$0xf]
        %v1631 = vld [vmem:[#allocation9 + $0x18] sm:$0xf]
        %v1632 = vld [vmem:[#allocation9 + $0x1c] sm:$0xf]
        %v1633 = vld [vmem:[#allocation9 + $0x20] sm:$0xf]
        %v1634 = vld [vmem:[#allocation9 + $0x24] sm:$0xf]
        %v1635 = vld [vmem:[#allocation9 + $0x28] sm:$0xf]
        %v1636 = vld [vmem:[#allocation9 + $0x2c] sm:$0xf]
        %v1637 = vld [vmem:[#allocation9 + $0x30] sm:$0xf]
        %v1638 = vld [vmem:[#allocation9 + $0x34] sm:$0xf]
        %v1639 = vld [vmem:[#allocation9 + $0x38] sm:$0xf]
        %v1640 = vld [vmem:[#allocation9 + $0x3c] sm:$0xf]
        %v1641 = vld [vmem:[#allocation9 + $0x40] sm:$0xf]
        %v1642 = vld [vmem:[#allocation9 + $0x44] sm:$0xf]
        %v1643 = vld [vmem:[#allocation9 + $0x48] sm:$0xf]
        %v1644 = vld [vmem:[#allocation9 + $0x4c] sm:$0xf]
        %v1645 = vld [vmem:[#allocation9 + $0x50] sm:$0xf]
        %v1646 = vld [vmem:[#allocation9 + $0x54] sm:$0xf]
        %v1647 = vld [vmem:[#allocation9 + $0x58] sm:$0xf]
        %v1648 = vld [vmem:[#allocation9 + $0x5c] sm:$0xf]
        %v1649 = vld [vmem:[#allocation9 + $0x60] sm:$0xf]
        %v1650 = vld [vmem:[#allocation9 + $0x64] sm:$0xf]
        %v1651 = vld [vmem:[#allocation9 + $0x68] sm:$0xf]
        %v1652 = vld [vmem:[#allocation9 + $0x6c] sm:$0xf]
        %v1653 = vld [vmem:[#allocation9 + $0x70] sm:$0xf]
        %v1654 = vld [vmem:[#allocation9 + $0x74] sm:$0xf]
        %v1655 = vld [vmem:[#allocation9 + $0x78] sm:$0xf]
        %v1656 = vld [vmem:[#allocation9 + $0x7c] sm:$0xf]
        %v1689 = vunpack.c.l.b16 %v1625
        %v1690 = vunpack.c.l.b16 %v1626
        %v1691 = vunpack.c.l.b16 %v1627
        %v1692 = vunpack.c.l.b16 %v1628
        %v1693 = vunpack.c.l.b16 %v1629
        %v1694 = vunpack.c.l.b16 %v1630
        %v1695 = vunpack.c.l.b16 %v1631
        %v1696 = vunpack.c.l.b16 %v1632
        %v1697 = vunpack.c.l.b16 %v1633
        %v1698 = vunpack.c.l.b16 %v1634
        %v1699 = vunpack.c.l.b16 %v1635
        %v1700 = vunpack.c.l.b16 %v1636
        %v1701 = vunpack.c.l.b16 %v1637
        %v1702 = vunpack.c.l.b16 %v1638
        %v1703 = vunpack.c.l.b16 %v1639
        %v1704 = vunpack.c.l.b16 %v1640
        %v1705 = vunpack.c.l.b16 %v1641
        %v1706 = vunpack.c.l.b16 %v1642
        %v1707 = vunpack.c.l.b16 %v1643
        %v1708 = vunpack.c.l.b16 %v1644
        %v1709 = vunpack.c.l.b16 %v1645
        %v1710 = vunpack.c.l.b16 %v1646
        %v1711 = vunpack.c.l.b16 %v1647
        %v1712 = vunpack.c.l.b16 %v1648
        %v1713 = vunpack.c.l.b16 %v1649
        %v1714 = vunpack.c.l.b16 %v1650
        %v1715 = vunpack.c.l.b16 %v1651
        %v1716 = vunpack.c.l.b16 %v1652
        %v1717 = vunpack.c.l.b16 %v1653
        %v1718 = vunpack.c.l.b16 %v1654
        %v1719 = vunpack.c.l.b16 %v1655
        %v1720 = vunpack.c.l.b16 %v1656
        %v1721 = vpack.c.b16 %v1690, %v1689
        %v1722 = vpack.c.b16 %v1692, %v1691
        %v1723 = vpack.c.b16 %v1694, %v1693
        %v1724 = vpack.c.b16 %v1696, %v1695
        %v1725 = vpack.c.b16 %v1698, %v1697
        %v1726 = vpack.c.b16 %v1700, %v1699
        %v1727 = vpack.c.b16 %v1702, %v1701
        %v1728 = vpack.c.b16 %v1704, %v1703
        %v1729 = vpack.c.b16 %v1706, %v1705
        %v1730 = vpack.c.b16 %v1708, %v1707
        %v1731 = vpack.c.b16 %v1710, %v1709
        %v1732 = vpack.c.b16 %v1712, %v1711
        %v1733 = vpack.c.b16 %v1714, %v1713
        %v1734 = vpack.c.b16 %v1716, %v1715
        %v1735 = vpack.c.b16 %v1718, %v1717
        %v1736 = vpack.c.b16 %v1720, %v1719
        %1753 = vmatprep.subr.bf16.mxu0 0
        %1754 = vmatpush1.bf16.msra.mxu0 %v1728
        %1755 = vmatprep.subr.bf16.mxu0 0
        %1756 = vmatpush1.bf16.msra.mxu0 %v1727
        %1757 = vmatprep.subr.bf16.mxu0 0
        %1758 = vmatpush1.bf16.msra.mxu0 %v1726
        %1759 = vmatprep.subr.bf16.mxu0 0
        %1760 = vmatpush1.bf16.msra.mxu0 %v1725
        %1761 = vmatprep.subr.bf16.mxu0 0
        %1762 = vmatpush1.bf16.msra.mxu0 %v1724
        %1763 = vmatprep.subr.bf16.mxu0 0
        %1764 = vmatpush1.bf16.msra.mxu0 %v1723
        %1765 = vmatprep.subr.bf16.mxu0 0
        %1766 = vmatpush1.bf16.msra.mxu0 %v1722
        %1767 = vmatprep.subr.bf16.mxu0 0
        %1768 = vmatpush1.bf16.msra.mxu0 %v1721
        %1769 = vmatprep.subr.bf16.mxu0 0
        %1770 = vmatpush2.bf16.msra.mxu0 %v1736
        %1771 = vmatprep.subr.bf16.mxu0 0
        %1772 = vmatpush2.bf16.msra.mxu0 %v1735
        %1773 = vmatprep.subr.bf16.mxu0 0
        %1774 = vmatpush2.bf16.msra.mxu0 %v1734
        %1775 = vmatprep.subr.bf16.mxu0 0
        %1776 = vmatpush2.bf16.msra.mxu0 %v1733
        %1777 = vmatprep.subr.bf16.mxu0 0
        %1778 = vmatpush2.bf16.msra.mxu0 %v1732
        %1779 = vmatprep.subr.bf16.mxu0 0
        %1780 = vmatpush2.bf16.msra.mxu0 %v1731
        %1781 = vmatprep.subr.bf16.mxu0 0
        %1782 = vmatpush2.bf16.msra.mxu0 %v1730
        %1783 = vmatprep.subr.bf16.mxu0 0
        %1784 = vmatpush2.bf16.msra.mxu0 %v1729
        %1785 = vmatprep.mubr.bf16.mxu0 %v921
        %1786 = vmatmul.mubr.bf16.gmra.mxu0 %v920
        %v1787 = vpop.f32.mrf.mxu0
        %v1788 = vadd.f32 0.0, %v1787
        %v1789 = vpop.f32.mrf.mxu0
        %v1790 = vpop.f32.mrf.mxu0
        %v1791 = vadd.f32 0.0, %v1790
        %v1792 = vpop.f32.mrf.mxu0
        %1793 = vmatprep.mubr.bf16.mxu0 %v923
        %1794 = vmatmul.mubr.bf16.gmra.mxu0 %v922
        %v1795 = vpop.f32.mrf.mxu0
        %v1796 = vadd.f32 0.0, %v1795
        %v1797 = vpop.f32.mrf.mxu0
        %v1798 = vpop.f32.mrf.mxu0
        %v1799 = vadd.f32 0.0, %v1798
        %v1800 = vpop.f32.mrf.mxu0
        %1801 = vmatprep.mubr.bf16.mxu0 %v925
        %1802 = vmatmul.mubr.bf16.gmra.mxu0 %v924
        %v1803 = vpop.f32.mrf.mxu0
        %v1804 = vadd.f32 0.0, %v1803
        %v1805 = vpop.f32.mrf.mxu0
        %v1806 = vpop.f32.mrf.mxu0
        %v1807 = vadd.f32 0.0, %v1806
        %v1808 = vpop.f32.mrf.mxu0
        %1809 = vmatprep.mubr.bf16.mxu0 %v927
        %1810 = vmatmul.mubr.bf16.gmra.mxu0 %v926
        %v1811 = vpop.f32.mrf.mxu0
        %v1812 = vadd.f32 0.0, %v1811
        %v1813 = vpop.f32.mrf.mxu0
        %v1814 = vpop.f32.mrf.mxu0
        %v1815 = vadd.f32 0.0, %v1814
        %v1816 = vpop.f32.mrf.mxu0
        %1817 = vmatprep.mubr.bf16.mxu0 %v929
        %1818 = vmatmul.mubr.bf16.gmra.mxu0 %v928
        %v1819 = vpop.f32.mrf.mxu0
        %v1820 = vadd.f32 0.0, %v1819
        %v1821 = vpop.f32.mrf.mxu0
        %v1822 = vpop.f32.mrf.mxu0
        %v1823 = vadd.f32 0.0, %v1822
        %v1824 = vpop.f32.mrf.mxu0
        %1825 = vmatprep.mubr.bf16.mxu0 %v931
        %1826 = vmatmul.mubr.bf16.gmra.mxu0 %v930
        %v1827 = vpop.f32.mrf.mxu0
        %v1828 = vadd.f32 0.0, %v1827
        %v1829 = vpop.f32.mrf.mxu0
        %v1830 = vpop.f32.mrf.mxu0
        %v1831 = vadd.f32 0.0, %v1830
        %v1832 = vpop.f32.mrf.mxu0
        %1833 = vmatprep.mubr.bf16.mxu0 %v933
        %1834 = vmatmul.mubr.bf16.gmra.mxu0 %v932
        %v1835 = vpop.f32.mrf.mxu0
        %v1836 = vadd.f32 0.0, %v1835
        %v1837 = vpop.f32.mrf.mxu0
        %v1838 = vpop.f32.mrf.mxu0
        %v1839 = vadd.f32 0.0, %v1838
        %v1840 = vpop.f32.mrf.mxu0
        %1841 = vmatprep.mubr.bf16.mxu0 %v935
        %1842 = vmatmul.mubr.bf16.gmra.mxu0 %v934
        %v1843 = vpop.f32.mrf.mxu0
        %v1844 = vadd.f32 0.0, %v1843
        %v1845 = vpop.f32.mrf.mxu0
        %v1846 = vpop.f32.mrf.mxu0
        %v1847 = vadd.f32 0.0, %v1846
        %v1848 = vpop.f32.mrf.mxu0
        %1849 = vmatprep.mubr.bf16.mxu0 %v937
        %1850 = vmatmul.mubr.bf16.gmra.mxu0 %v936
        %v1851 = vpop.f32.mrf.mxu0
        %v1852 = vadd.f32 0.0, %v1851
        %v1853 = vpop.f32.mrf.mxu0
        %v1854 = vpop.f32.mrf.mxu0
        %v1855 = vadd.f32 0.0, %v1854
        %v1856 = vpop.f32.mrf.mxu0
        %1857 = vmatprep.mubr.bf16.mxu0 %v939
        %1858 = vmatmul.mubr.bf16.gmra.mxu0 %v938
        %v1859 = vpop.f32.mrf.mxu0
        %v1860 = vadd.f32 0.0, %v1859
        %v1861 = vpop.f32.mrf.mxu0
        %v1862 = vpop.f32.mrf.mxu0
        %v1863 = vadd.f32 0.0, %v1862
        %v1864 = vpop.f32.mrf.mxu0
        %1865 = vmatprep.mubr.bf16.mxu0 %v941
        %1866 = vmatmul.mubr.bf16.gmra.mxu0 %v940
        %v1867 = vpop.f32.mrf.mxu0
        %v1868 = vadd.f32 0.0, %v1867
        %v1869 = vpop.f32.mrf.mxu0
        %v1870 = vpop.f32.mrf.mxu0
        %v1871 = vadd.f32 0.0, %v1870
        %v1872 = vpop.f32.mrf.mxu0
        %1873 = vmatprep.mubr.bf16.mxu0 %v943
        %1874 = vmatmul.mubr.bf16.gmra.mxu0 %v942
        %v1875 = vpop.f32.mrf.mxu0
        %v1876 = vadd.f32 0.0, %v1875
        %v1877 = vpop.f32.mrf.mxu0
        %v1878 = vpop.f32.mrf.mxu0
        %v1879 = vadd.f32 0.0, %v1878
        %v1880 = vpop.f32.mrf.mxu0
        %1881 = vmatprep.mubr.bf16.mxu0 %v945
        %1882 = vmatmul.mubr.bf16.gmra.mxu0 %v944
        %v1883 = vpop.f32.mrf.mxu0
        %v1884 = vadd.f32 0.0, %v1883
        %v1885 = vpop.f32.mrf.mxu0
        %v1886 = vpop.f32.mrf.mxu0
        %v1887 = vadd.f32 0.0, %v1886
        %v1888 = vpop.f32.mrf.mxu0
        %1889 = vmatprep.mubr.bf16.mxu0 %v947
        %1890 = vmatmul.mubr.bf16.gmra.mxu0 %v946
        %v1891 = vpop.f32.mrf.mxu0
        %v1892 = vadd.f32 0.0, %v1891
        %v1893 = vpop.f32.mrf.mxu0
        %v1894 = vpop.f32.mrf.mxu0
        %v1895 = vadd.f32 0.0, %v1894
        %v1896 = vpop.f32.mrf.mxu0
        %1897 = vmatprep.mubr.bf16.mxu0 %v949
        %1898 = vmatmul.mubr.bf16.gmra.mxu0 %v948
        %v1899 = vpop.f32.mrf.mxu0
        %v1900 = vadd.f32 0.0, %v1899
        %v1901 = vpop.f32.mrf.mxu0
        %v1902 = vpop.f32.mrf.mxu0
        %v1903 = vadd.f32 0.0, %v1902
        %v1904 = vpop.f32.mrf.mxu0
        %1905 = vmatprep.mubr.bf16.mxu0 %v951
        %1906 = vmatmul.mubr.bf16.gmra.mxu0 %v950
        %v1907 = vpop.f32.mrf.mxu0
        %v1908 = vadd.f32 0.0, %v1907
        %v1909 = vpop.f32.mrf.mxu0
        %v1910 = vpop.f32.mrf.mxu0
        %v1911 = vadd.f32 0.0, %v1910
        %v1912 = vpop.f32.mrf.mxu0
        %1913 = vmatprep.mubr.bf16.mxu0 %v953
        %1914 = vmatmul.mubr.bf16.gmra.mxu0 %v952
        %v1915 = vpop.f32.mrf.mxu0
        %v1916 = vadd.f32 0.0, %v1915
        %v1917 = vpop.f32.mrf.mxu0
        %v1918 = vpop.f32.mrf.mxu0
        %v1919 = vadd.f32 0.0, %v1918
        %v1920 = vpop.f32.mrf.mxu0
        %1921 = vmatprep.mubr.bf16.mxu0 %v955
        %1922 = vmatmul.mubr.bf16.gmra.mxu0 %v954
        %v1923 = vpop.f32.mrf.mxu0
        %v1924 = vadd.f32 0.0, %v1923
        %v1925 = vpop.f32.mrf.mxu0
        %v1926 = vpop.f32.mrf.mxu0
        %v1927 = vadd.f32 0.0, %v1926
        %v1928 = vpop.f32.mrf.mxu0
        %1929 = vmatprep.mubr.bf16.mxu0 %v957
        %1930 = vmatmul.mubr.bf16.gmra.mxu0 %v956
        %v1931 = vpop.f32.mrf.mxu0
        %v1932 = vadd.f32 0.0, %v1931
        %v1933 = vpop.f32.mrf.mxu0
        %v1934 = vpop.f32.mrf.mxu0
        %v1935 = vadd.f32 0.0, %v1934
        %v1936 = vpop.f32.mrf.mxu0
        %1937 = vmatprep.mubr.bf16.mxu0 %v959
        %1938 = vmatmul.mubr.bf16.gmra.mxu0 %v958
        %v1939 = vpop.f32.mrf.mxu0
        %v1940 = vadd.f32 0.0, %v1939
        %v1941 = vpop.f32.mrf.mxu0
        %v1942 = vpop.f32.mrf.mxu0
        %v1943 = vadd.f32 0.0, %v1942
        %v1944 = vpop.f32.mrf.mxu0
        %1945 = vmatprep.mubr.bf16.mxu0 %v961
        %1946 = vmatmul.mubr.bf16.gmra.mxu0 %v960
        %v1947 = vpop.f32.mrf.mxu0
        %v1948 = vadd.f32 0.0, %v1947
        %v1949 = vpop.f32.mrf.mxu0
        %v1950 = vpop.f32.mrf.mxu0
        %v1951 = vadd.f32 0.0, %v1950
        %v1952 = vpop.f32.mrf.mxu0
        %1953 = vmatprep.mubr.bf16.mxu0 %v963
        %1954 = vmatmul.mubr.bf16.gmra.mxu0 %v962
        %v1955 = vpop.f32.mrf.mxu0
        %v1956 = vadd.f32 0.0, %v1955
        %v1957 = vpop.f32.mrf.mxu0
        %v1958 = vpop.f32.mrf.mxu0
        %v1959 = vadd.f32 0.0, %v1958
        %v1960 = vpop.f32.mrf.mxu0
        %1961 = vmatprep.mubr.bf16.mxu0 %v965
        %1962 = vmatmul.mubr.bf16.gmra.mxu0 %v964
        %v1963 = vpop.f32.mrf.mxu0
        %v1964 = vadd.f32 0.0, %v1963
        %v1965 = vpop.f32.mrf.mxu0
        %v1966 = vpop.f32.mrf.mxu0
        %v1967 = vadd.f32 0.0, %v1966
        %v1968 = vpop.f32.mrf.mxu0
        %1969 = vmatprep.mubr.bf16.mxu0 %v967
        %1970 = vmatmul.mubr.bf16.gmra.mxu0 %v966
        %v1971 = vpop.f32.mrf.mxu0
        %v1972 = vadd.f32 0.0, %v1971
        %v1973 = vpop.f32.mrf.mxu0
        %v1974 = vpop.f32.mrf.mxu0
        %v1975 = vadd.f32 0.0, %v1974
        %v1976 = vpop.f32.mrf.mxu0
        %1977 = vmatprep.mubr.bf16.mxu0 %v969
        %1978 = vmatmul.mubr.bf16.gmra.mxu0 %v968
        %v1979 = vpop.f32.mrf.mxu0
        %v1980 = vadd.f32 0.0, %v1979
        %v1981 = vpop.f32.mrf.mxu0
        %v1982 = vpop.f32.mrf.mxu0
        %v1983 = vadd.f32 0.0, %v1982
        %v1984 = vpop.f32.mrf.mxu0
        %1985 = vmatprep.mubr.bf16.mxu0 %v971
        %1986 = vmatmul.mubr.bf16.gmra.mxu0 %v970
        %v1987 = vpop.f32.mrf.mxu0
        %v1988 = vadd.f32 0.0, %v1987
        %v1989 = vpop.f32.mrf.mxu0
        %v1990 = vpop.f32.mrf.mxu0
        %v1991 = vadd.f32 0.0, %v1990
        %v1992 = vpop.f32.mrf.mxu0
        %1993 = vmatprep.mubr.bf16.mxu0 %v973
        %1994 = vmatmul.mubr.bf16.gmra.mxu0 %v972
        %v1995 = vpop.f32.mrf.mxu0
        %v1996 = vadd.f32 0.0, %v1995
        %v1997 = vpop.f32.mrf.mxu0
        %v1998 = vpop.f32.mrf.mxu0
        %v1999 = vadd.f32 0.0, %v1998
        %v2000 = vpop.f32.mrf.mxu0
        %2001 = vmatprep.mubr.bf16.mxu0 %v975
        %2002 = vmatmul.mubr.bf16.gmra.mxu0 %v974
        %v2003 = vpop.f32.mrf.mxu0
        %v2004 = vadd.f32 0.0, %v2003
        %v2005 = vpop.f32.mrf.mxu0
        %v2006 = vpop.f32.mrf.mxu0
        %v2007 = vadd.f32 0.0, %v2006
        %v2008 = vpop.f32.mrf.mxu0
        %2009 = vmatprep.mubr.bf16.mxu0 %v977
        %2010 = vmatmul.mubr.bf16.gmra.mxu0 %v976
        %v2011 = vpop.f32.mrf.mxu0
        %v2012 = vadd.f32 0.0, %v2011
        %v2013 = vpop.f32.mrf.mxu0
        %v2014 = vpop.f32.mrf.mxu0
        %v2015 = vadd.f32 0.0, %v2014
        %v2016 = vpop.f32.mrf.mxu0
        %2017 = vmatprep.mubr.bf16.mxu0 %v979
        %2018 = vmatmul.mubr.bf16.gmra.mxu0 %v978
        %v2019 = vpop.f32.mrf.mxu0
        %v2020 = vadd.f32 0.0, %v2019
        %v2021 = vpop.f32.mrf.mxu0
        %v2022 = vpop.f32.mrf.mxu0
        %v2023 = vadd.f32 0.0, %v2022
        %v2024 = vpop.f32.mrf.mxu0
        %2025 = vmatprep.mubr.bf16.mxu0 %v981
        %2026 = vmatmul.mubr.bf16.gmra.mxu0 %v980
        %v2027 = vpop.f32.mrf.mxu0
        %v2028 = vadd.f32 0.0, %v2027
        %v2029 = vpop.f32.mrf.mxu0
        %v2030 = vpop.f32.mrf.mxu0
        %v2031 = vadd.f32 0.0, %v2030
        %v2032 = vpop.f32.mrf.mxu0
        %2033 = vmatprep.mubr.bf16.mxu0 %v983
        %2034 = vmatmul.mubr.bf16.gmra.mxu0 %v982
        %v2035 = vpop.f32.mrf.mxu0
        %v2036 = vadd.f32 0.0, %v2035
        %v2037 = vpop.f32.mrf.mxu0
        %v2038 = vpop.f32.mrf.mxu0
        %v2039 = vadd.f32 0.0, %v2038
        %v2040 = vpop.f32.mrf.mxu0
        %2041 = vdwg.mxu0
        %v2042 = vadd.f32 %v1561, %v1788
        %v2043 = vadd.f32 %v1562, %v1791
        %v2044 = vadd.f32 %v1563, %v1796
        %v2045 = vadd.f32 %v1564, %v1799
        %v2046 = vadd.f32 %v1565, %v1804
        %v2047 = vadd.f32 %v1566, %v1807
        %v2048 = vadd.f32 %v1567, %v1812
        %v2049 = vadd.f32 %v1568, %v1815
        %v2050 = vadd.f32 %v1569, %v1820
        %v2051 = vadd.f32 %v1570, %v1823
        %v2052 = vadd.f32 %v1571, %v1828
        %v2053 = vadd.f32 %v1572, %v1831
        %v2054 = vadd.f32 %v1573, %v1836
        %v2055 = vadd.f32 %v1574, %v1839
        %v2056 = vadd.f32 %v1575, %v1844
        %v2057 = vadd.f32 %v1576, %v1847
        %v2058 = vadd.f32 %v1577, %v1852
        %v2059 = vadd.f32 %v1578, %v1855
        %v2060 = vadd.f32 %v1579, %v1860
        %v2061 = vadd.f32 %v1580, %v1863
        %v2062 = vadd.f32 %v1581, %v1868
        %v2063 = vadd.f32 %v1582, %v1871
        %v2064 = vadd.f32 %v1583, %v1876
        %v2065 = vadd.f32 %v1584, %v1879
        %v2066 = vadd.f32 %v1585, %v1884
        %v2067 = vadd.f32 %v1586, %v1887
        %v2068 = vadd.f32 %v1587, %v1892
        %v2069 = vadd.f32 %v1588, %v1895
        %v2070 = vadd.f32 %v1589, %v1900
        %v2071 = vadd.f32 %v1590, %v1903
        %v2072 = vadd.f32 %v1591, %v1908
        %v2073 = vadd.f32 %v1592, %v1911
        %v2074 = vadd.f32 %v1593, %v1916
        %v2075 = vadd.f32 %v1594, %v1919
        %v2076 = vadd.f32 %v1595, %v1924
        %v2077 = vadd.f32 %v1596, %v1927
        %v2078 = vadd.f32 %v1597, %v1932
        %v2079 = vadd.f32 %v1598, %v1935
        %v2080 = vadd.f32 %v1599, %v1940
        %v2081 = vadd.f32 %v1600, %v1943
        %v2082 = vadd.f32 %v1601, %v1948
        %v2083 = vadd.f32 %v1602, %v1951
        %v2084 = vadd.f32 %v1603, %v1956
        %v2085 = vadd.f32 %v1604, %v1959
        %v2086 = vadd.f32 %v1605, %v1964
        %v2087 = vadd.f32 %v1606, %v1967
        %v2088 = vadd.f32 %v1607, %v1972
        %v2089 = vadd.f32 %v1608, %v1975
        %v2090 = vadd.f32 %v1609, %v1980
        %v2091 = vadd.f32 %v1610, %v1983
        %v2092 = vadd.f32 %v1611, %v1988
        %v2093 = vadd.f32 %v1612, %v1991
        %v2094 = vadd.f32 %v1613, %v1996
        %v2095 = vadd.f32 %v1614, %v1999
        %v2096 = vadd.f32 %v1615, %v2004
        %v2097 = vadd.f32 %v1616, %v2007
        %v2098 = vadd.f32 %v1617, %v2012
        %v2099 = vadd.f32 %v1618, %v2015
        %v2100 = vadd.f32 %v1619, %v2020
        %v2101 = vadd.f32 %v1620, %v2023
        %v2102 = vadd.f32 %v1621, %v2028
        %v2103 = vadd.f32 %v1622, %v2031
        %v2104 = vadd.f32 %v1623, %v2036
        %v2105 = vadd.f32 %v1624, %v2039
        %2106 = vst [vmem:[#allocation3] sm:$0xff] %v2042
        %2107 = vst [vmem:[#allocation3 + $0x8] sm:$0xff] %v2043
        %2108 = vst [vmem:[#allocation3 + $0x10] sm:$0xff] %v2044
        %2109 = vst [vmem:[#allocation3 + $0x18] sm:$0xff] %v2045
        %2110 = vst [vmem:[#allocation3 + $0x20] sm:$0xff] %v2046
        %2111 = vst [vmem:[#allocation3 + $0x28] sm:$0xff] %v2047
        %2112 = vst [vmem:[#allocation3 + $0x30] sm:$0xff] %v2048
        %2113 = vst [vmem:[#allocation3 + $0x38] sm:$0xff] %v2049
        %2114 = vst [vmem:[#allocation3 + $0x40] sm:$0xff] %v2050
        %2115 = vst [vmem:[#allocation3 + $0x48] sm:$0xff] %v2051
        %2116 = vst [vmem:[#allocation3 + $0x50] sm:$0xff] %v2052
        %2117 = vst [vmem:[#allocation3 + $0x58] sm:$0xff] %v2053
        %2118 = vst [vmem:[#allocation3 + $0x60] sm:$0xff] %v2054
        %2119 = vst [vmem:[#allocation3 + $0x68] sm:$0xff] %v2055
        %2120 = vst [vmem:[#allocation3 + $0x70] sm:$0xff] %v2056
        %2121 = vst [vmem:[#allocation3 + $0x78] sm:$0xff] %v2057
        %2122 = vst [vmem:[#allocation3 + $0x80] sm:$0xff] %v2058
        %2123 = vst [vmem:[#allocation3 + $0x88] sm:$0xff] %v2059
        %2124 = vst [vmem:[#allocation3 + $0x90] sm:$0xff] %v2060
        %2125 = vst [vmem:[#allocation3 + $0x98] sm:$0xff] %v2061
        %2126 = vst [vmem:[#allocation3 + $0xa0] sm:$0xff] %v2062
        %2127 = vst [vmem:[#allocation3 + $0xa8] sm:$0xff] %v2063
        %2128 = vst [vmem:[#allocation3 + $0xb0] sm:$0xff] %v2064
        %2129 = vst [vmem:[#allocation3 + $0xb8] sm:$0xff] %v2065
        %2130 = vst [vmem:[#allocation3 + $0xc0] sm:$0xff] %v2066
        %2131 = vst [vmem:[#allocation3 + $0xc8] sm:$0xff] %v2067
        %2132 = vst [vmem:[#allocation3 + $0xd0] sm:$0xff] %v2068
        %2133 = vst [vmem:[#allocation3 + $0xd8] sm:$0xff] %v2069
        %2134 = vst [vmem:[#allocation3 + $0xe0] sm:$0xff] %v2070
        %2135 = vst [vmem:[#allocation3 + $0xe8] sm:$0xff] %v2071
        %2136 = vst [vmem:[#allocation3 + $0xf0] sm:$0xff] %v2072
        %2137 = vst [vmem:[#allocation3 + $0xf8] sm:$0xff] %v2073
        %2138 = vst [vmem:[#allocation3 + $0x100] sm:$0xff] %v2074
        %2139 = vst [vmem:[#allocation3 + $0x108] sm:$0xff] %v2075
        %2140 = vst [vmem:[#allocation3 + $0x110] sm:$0xff] %v2076
        %2141 = vst [vmem:[#allocation3 + $0x118] sm:$0xff] %v2077
        %2142 = vst [vmem:[#allocation3 + $0x120] sm:$0xff] %v2078
        %2143 = vst [vmem:[#allocation3 + $0x128] sm:$0xff] %v2079
        %2144 = vst [vmem:[#allocation3 + $0x130] sm:$0xff] %v2080
        %2145 = vst [vmem:[#allocation3 + $0x138] sm:$0xff] %v2081
        %2146 = vst [vmem:[#allocation3 + $0x140] sm:$0xff] %v2082
        %2147 = vst [vmem:[#allocation3 + $0x148] sm:$0xff] %v2083
        %2148 = vst [vmem:[#allocation3 + $0x150] sm:$0xff] %v2084
        %2149 = vst [vmem:[#allocation3 + $0x158] sm:$0xff] %v2085
        %2150 = vst [vmem:[#allocation3 + $0x160] sm:$0xff] %v2086
        %2151 = vst [vmem:[#allocation3 + $0x168] sm:$0xff] %v2087
        %2152 = vst [vmem:[#allocation3 + $0x170] sm:$0xff] %v2088
        %2153 = vst [vmem:[#allocation3 + $0x178] sm:$0xff] %v2089
        %2154 = vst [vmem:[#allocation3 + $0x180] sm:$0xff] %v2090
        %2155 = vst [vmem:[#allocation3 + $0x188] sm:$0xff] %v2091
        %2156 = vst [vmem:[#allocation3 + $0x190] sm:$0xff] %v2092
        %2157 = vst [vmem:[#allocation3 + $0x198] sm:$0xff] %v2093
        %2158 = vst [vmem:[#allocation3 + $0x1a0] sm:$0xff] %v2094
        %2159 = vst [vmem:[#allocation3 + $0x1a8] sm:$0xff] %v2095
        %2160 = vst [vmem:[#allocation3 + $0x1b0] sm:$0xff] %v2096
        %2161 = vst [vmem:[#allocation3 + $0x1b8] sm:$0xff] %v2097
        %2162 = vst [vmem:[#allocation3 + $0x1c0] sm:$0xff] %v2098
        %2163 = vst [vmem:[#allocation3 + $0x1c8] sm:$0xff] %v2099
        %2164 = vst [vmem:[#allocation3 + $0x1d0] sm:$0xff] %v2100
        %2165 = vst [vmem:[#allocation3 + $0x1d8] sm:$0xff] %v2101
        %2166 = vst [vmem:[#allocation3 + $0x1e0] sm:$0xff] %v2102
        %2167 = vst [vmem:[#allocation3 + $0x1e8] sm:$0xff] %v2103
        %2168 = vst [vmem:[#allocation3 + $0x1f0] sm:$0xff] %v2104
        %2169 = vst [vmem:[#allocation3 + $0x1f8] sm:$0xff] %v2105
        // Predicated region
        $region65: #{tpu_custom_call.1} parent=47 // pred_check
          %p2170 = pneg %p436
        $region66: #{tpu_custom_call.1} parent=47 // pred_check_branch
          %2172 = sbr.rel (%p2170) target = $region68
        $region67: #{tpu_custom_call.1} parent=47 // pred_region
          %v2173 = vld [vmem:[#allocation2] sm:$0xff]
          %v2174 = vld [vmem:[#allocation2 + $0x8] sm:$0xff]
          %v2175 = vld [vmem:[#allocation2 + $0x10] sm:$0xff]
          %v2176 = vld [vmem:[#allocation2 + $0x18] sm:$0xff]
          %v2177 = vld [vmem:[#allocation2 + $0x20] sm:$0xff]
          %v2178 = vld [vmem:[#allocation2 + $0x28] sm:$0xff]
          %v2179 = vld [vmem:[#allocation2 + $0x30] sm:$0xff]
          %v2180 = vld [vmem:[#allocation2 + $0x38] sm:$0xff]
          %v2181 = vld [vmem:[#allocation2 + $0x40] sm:$0xff]
          %v2182 = vld [vmem:[#allocation2 + $0x48] sm:$0xff]
          %v2183 = vld [vmem:[#allocation2 + $0x50] sm:$0xff]
          %v2184 = vld [vmem:[#allocation2 + $0x58] sm:$0xff]
          %v2185 = vld [vmem:[#allocation2 + $0x60] sm:$0xff]
          %v2186 = vld [vmem:[#allocation2 + $0x68] sm:$0xff]
          %v2187 = vld [vmem:[#allocation2 + $0x70] sm:$0xff]
          %v2188 = vld [vmem:[#allocation2 + $0x78] sm:$0xff]
          %v2189 = vld [vmem:[#allocation2 + $0x80] sm:$0xff]
          %v2190 = vld [vmem:[#allocation2 + $0x88] sm:$0xff]
          %v2191 = vld [vmem:[#allocation2 + $0x90] sm:$0xff]
          %v2192 = vld [vmem:[#allocation2 + $0x98] sm:$0xff]
          %v2193 = vld [vmem:[#allocation2 + $0xa0] sm:$0xff]
          %v2194 = vld [vmem:[#allocation2 + $0xa8] sm:$0xff]
          %v2195 = vld [vmem:[#allocation2 + $0xb0] sm:$0xff]
          %v2196 = vld [vmem:[#allocation2 + $0xb8] sm:$0xff]
          %v2197 = vld [vmem:[#allocation2 + $0xc0] sm:$0xff]
          %v2198 = vld [vmem:[#allocation2 + $0xc8] sm:$0xff]
          %v2199 = vld [vmem:[#allocation2 + $0xd0] sm:$0xff]
          %v2200 = vld [vmem:[#allocation2 + $0xd8] sm:$0xff]
          %v2201 = vld [vmem:[#allocation2 + $0xe0] sm:$0xff]
          %v2202 = vld [vmem:[#allocation2 + $0xe8] sm:$0xff]
          %v2203 = vld [vmem:[#allocation2 + $0xf0] sm:$0xff]
          %v2204 = vld [vmem:[#allocation2 + $0xf8] sm:$0xff]
          %v2205 = vld [vmem:[#allocation2 + $0x100] sm:$0xff]
          %v2206 = vld [vmem:[#allocation2 + $0x108] sm:$0xff]
          %v2207 = vld [vmem:[#allocation2 + $0x110] sm:$0xff]
          %v2208 = vld [vmem:[#allocation2 + $0x118] sm:$0xff]
          %v2209 = vld [vmem:[#allocation2 + $0x120] sm:$0xff]
          %v2210 = vld [vmem:[#allocation2 + $0x128] sm:$0xff]
          %v2211 = vld [vmem:[#allocation2 + $0x130] sm:$0xff]
          %v2212 = vld [vmem:[#allocation2 + $0x138] sm:$0xff]
          %v2213 = vld [vmem:[#allocation2 + $0x140] sm:$0xff]
          %v2214 = vld [vmem:[#allocation2 + $0x148] sm:$0xff]
          %v2215 = vld [vmem:[#allocation2 + $0x150] sm:$0xff]
          %v2216 = vld [vmem:[#allocation2 + $0x158] sm:$0xff]
          %v2217 = vld [vmem:[#allocation2 + $0x160] sm:$0xff]
          %v2218 = vld [vmem:[#allocation2 + $0x168] sm:$0xff]
          %v2219 = vld [vmem:[#allocation2 + $0x170] sm:$0xff]
          %v2220 = vld [vmem:[#allocation2 + $0x178] sm:$0xff]
          %v2221 = vld [vmem:[#allocation2 + $0x180] sm:$0xff]
          %v2222 = vld [vmem:[#allocation2 + $0x188] sm:$0xff]
          %v2223 = vld [vmem:[#allocation2 + $0x190] sm:$0xff]
          %v2224 = vld [vmem:[#allocation2 + $0x198] sm:$0xff]
          %v2225 = vld [vmem:[#allocation2 + $0x1a0] sm:$0xff]
          %v2226 = vld [vmem:[#allocation2 + $0x1a8] sm:$0xff]
          %v2227 = vld [vmem:[#allocation2 + $0x1b0] sm:$0xff]
          %v2228 = vld [vmem:[#allocation2 + $0x1b8] sm:$0xff]
          %v2229 = vld [vmem:[#allocation2 + $0x1c0] sm:$0xff]
          %v2230 = vld [vmem:[#allocation2 + $0x1c8] sm:$0xff]
          %v2231 = vld [vmem:[#allocation2 + $0x1d0] sm:$0xff]
          %v2232 = vld [vmem:[#allocation2 + $0x1d8] sm:$0xff]
          %v2233 = vld [vmem:[#allocation2 + $0x1e0] sm:$0xff]
          %v2234 = vld [vmem:[#allocation2 + $0x1e8] sm:$0xff]
          %v2235 = vld [vmem:[#allocation2 + $0x1f0] sm:$0xff]
          %v2236 = vld [vmem:[#allocation2 + $0x1f8] sm:$0xff]
          %v2237 = vld [vmem:[%s424] sm:$0x1]
          %v2239 = vlaneseq
          %v2240 = vshrl.u32 %v2239, 7
          %v2241 = vsub.s32 0, %v2240
          %v2242 = vrot.slane %v2237, %v2241
          %v2244 = vadd.f32 %v2173, %v2242
          %v2245 = vadd.f32 %v2174, %v2242
          %v2246 = vadd.f32 %v2175, %v2242
          %v2247 = vadd.f32 %v2176, %v2242
          %v2248 = vadd.f32 %v2177, %v2242
          %v2249 = vadd.f32 %v2178, %v2242
          %v2250 = vadd.f32 %v2179, %v2242
          %v2251 = vadd.f32 %v2180, %v2242
          %v2252 = vadd.f32 %v2181, %v2242
          %v2253 = vadd.f32 %v2182, %v2242
          %v2254 = vadd.f32 %v2183, %v2242
          %v2255 = vadd.f32 %v2184, %v2242
          %v2256 = vadd.f32 %v2185, %v2242
          %v2257 = vadd.f32 %v2186, %v2242
          %v2258 = vadd.f32 %v2187, %v2242
          %v2259 = vadd.f32 %v2188, %v2242
          %v2260 = vadd.f32 %v2189, %v2242
          %v2261 = vadd.f32 %v2190, %v2242
          %v2262 = vadd.f32 %v2191, %v2242
          %v2263 = vadd.f32 %v2192, %v2242
          %v2264 = vadd.f32 %v2193, %v2242
          %v2265 = vadd.f32 %v2194, %v2242
          %v2266 = vadd.f32 %v2195, %v2242
          %v2267 = vadd.f32 %v2196, %v2242
          %v2268 = vadd.f32 %v2197, %v2242
          %v2269 = vadd.f32 %v2198, %v2242
          %v2270 = vadd.f32 %v2199, %v2242
          %v2271 = vadd.f32 %v2200, %v2242
          %v2272 = vadd.f32 %v2201, %v2242
          %v2273 = vadd.f32 %v2202, %v2242
          %v2274 = vadd.f32 %v2203, %v2242
          %v2275 = vadd.f32 %v2204, %v2242
          %v2276 = vadd.f32 %v2205, %v2242
          %v2277 = vadd.f32 %v2206, %v2242
          %v2278 = vadd.f32 %v2207, %v2242
          %v2279 = vadd.f32 %v2208, %v2242
          %v2280 = vadd.f32 %v2209, %v2242
          %v2281 = vadd.f32 %v2210, %v2242
          %v2282 = vadd.f32 %v2211, %v2242
          %v2283 = vadd.f32 %v2212, %v2242
          %v2284 = vadd.f32 %v2213, %v2242
          %v2285 = vadd.f32 %v2214, %v2242
          %v2286 = vadd.f32 %v2215, %v2242
          %v2287 = vadd.f32 %v2216, %v2242
          %v2288 = vadd.f32 %v2217, %v2242
          %v2289 = vadd.f32 %v2218, %v2242
          %v2290 = vadd.f32 %v2219, %v2242
          %v2291 = vadd.f32 %v2220, %v2242
          %v2292 = vadd.f32 %v2221, %v2242
          %v2293 = vadd.f32 %v2222, %v2242
          %v2294 = vadd.f32 %v2223, %v2242
          %v2295 = vadd.f32 %v2224, %v2242
          %v2296 = vadd.f32 %v2225, %v2242
          %v2297 = vadd.f32 %v2226, %v2242
          %v2298 = vadd.f32 %v2227, %v2242
          %v2299 = vadd.f32 %v2228, %v2242
          %v2300 = vadd.f32 %v2229, %v2242
          %v2301 = vadd.f32 %v2230, %v2242
          %v2302 = vadd.f32 %v2231, %v2242
          %v2303 = vadd.f32 %v2232, %v2242
          %v2304 = vadd.f32 %v2233, %v2242
          %v2305 = vadd.f32 %v2234, %v2242
          %v2306 = vadd.f32 %v2235, %v2242
          %v2307 = vadd.f32 %v2236, %v2242
          %v2308 = vld [vmem:[#allocation3] sm:$0xff]
          %v2309 = vld [vmem:[#allocation3 + $0x8] sm:$0xff]
          %v2310 = vld [vmem:[#allocation3 + $0x10] sm:$0xff]
          %v2311 = vld [vmem:[#allocation3 + $0x18] sm:$0xff]
          %v2312 = vld [vmem:[#allocation3 + $0x20] sm:$0xff]
          %v2313 = vld [vmem:[#allocation3 + $0x28] sm:$0xff]
          %v2314 = vld [vmem:[#allocation3 + $0x30] sm:$0xff]
          %v2315 = vld [vmem:[#allocation3 + $0x38] sm:$0xff]
          %v2316 = vld [vmem:[#allocation3 + $0x40] sm:$0xff]
          %v2317 = vld [vmem:[#allocation3 + $0x48] sm:$0xff]
          %v2318 = vld [vmem:[#allocation3 + $0x50] sm:$0xff]
          %v2319 = vld [vmem:[#allocation3 + $0x58] sm:$0xff]
          %v2320 = vld [vmem:[#allocation3 + $0x60] sm:$0xff]
          %v2321 = vld [vmem:[#allocation3 + $0x68] sm:$0xff]
          %v2322 = vld [vmem:[#allocation3 + $0x70] sm:$0xff]
          %v2323 = vld [vmem:[#allocation3 + $0x78] sm:$0xff]
          %v2324 = vld [vmem:[#allocation3 + $0x80] sm:$0xff]
          %v2325 = vld [vmem:[#allocation3 + $0x88] sm:$0xff]
          %v2326 = vld [vmem:[#allocation3 + $0x90] sm:$0xff]
          %v2327 = vld [vmem:[#allocation3 + $0x98] sm:$0xff]
          %v2328 = vld [vmem:[#allocation3 + $0xa0] sm:$0xff]
          %v2329 = vld [vmem:[#allocation3 + $0xa8] sm:$0xff]
          %v2330 = vld [vmem:[#allocation3 + $0xb0] sm:$0xff]
          %v2331 = vld [vmem:[#allocation3 + $0xb8] sm:$0xff]
          %v2332 = vld [vmem:[#allocation3 + $0xc0] sm:$0xff]
          %v2333 = vld [vmem:[#allocation3 + $0xc8] sm:$0xff]
          %v2334 = vld [vmem:[#allocation3 + $0xd0] sm:$0xff]
          %v2335 = vld [vmem:[#allocation3 + $0xd8] sm:$0xff]
          %v2336 = vld [vmem:[#allocation3 + $0xe0] sm:$0xff]
          %v2337 = vld [vmem:[#allocation3 + $0xe8] sm:$0xff]
          %v2338 = vld [vmem:[#allocation3 + $0xf0] sm:$0xff]
          %v2339 = vld [vmem:[#allocation3 + $0xf8] sm:$0xff]
          %v2340 = vld [vmem:[#allocation3 + $0x100] sm:$0xff]
          %v2341 = vld [vmem:[#allocation3 + $0x108] sm:$0xff]
          %v2342 = vld [vmem:[#allocation3 + $0x110] sm:$0xff]
          %v2343 = vld [vmem:[#allocation3 + $0x118] sm:$0xff]
          %v2344 = vld [vmem:[#allocation3 + $0x120] sm:$0xff]
          %v2345 = vld [vmem:[#allocation3 + $0x128] sm:$0xff]
          %v2346 = vld [vmem:[#allocation3 + $0x130] sm:$0xff]
          %v2347 = vld [vmem:[#allocation3 + $0x138] sm:$0xff]
          %v2348 = vld [vmem:[#allocation3 + $0x140] sm:$0xff]
          %v2349 = vld [vmem:[#allocation3 + $0x148] sm:$0xff]
          %v2350 = vld [vmem:[#allocation3 + $0x150] sm:$0xff]
          %v2351 = vld [vmem:[#allocation3 + $0x158] sm:$0xff]
          %v2352 = vld [vmem:[#allocation3 + $0x160] sm:$0xff]
          %v2353 = vld [vmem:[#allocation3 + $0x168] sm:$0xff]
          %v2354 = vld [vmem:[#allocation3 + $0x170] sm:$0xff]
          %v2355 = vld [vmem:[#allocation3 + $0x178] sm:$0xff]
          %v2356 = vld [vmem:[#allocation3 + $0x180] sm:$0xff]
          %v2357 = vld [vmem:[#allocation3 + $0x188] sm:$0xff]
          %v2358 = vld [vmem:[#allocation3 + $0x190] sm:$0xff]
          %v2359 = vld [vmem:[#allocation3 + $0x198] sm:$0xff]
          %v2360 = vld [vmem:[#allocation3 + $0x1a0] sm:$0xff]
          %v2361 = vld [vmem:[#allocation3 + $0x1a8] sm:$0xff]
          %v2362 = vld [vmem:[#allocation3 + $0x1b0] sm:$0xff]
          %v2363 = vld [vmem:[#allocation3 + $0x1b8] sm:$0xff]
          %v2364 = vld [vmem:[#allocation3 + $0x1c0] sm:$0xff]
          %v2365 = vld [vmem:[#allocation3 + $0x1c8] sm:$0xff]
          %v2366 = vld [vmem:[#allocation3 + $0x1d0] sm:$0xff]
          %v2367 = vld [vmem:[#allocation3 + $0x1d8] sm:$0xff]
          %v2368 = vld [vmem:[#allocation3 + $0x1e0] sm:$0xff]
          %v2369 = vld [vmem:[#allocation3 + $0x1e8] sm:$0xff]
          %v2370 = vld [vmem:[#allocation3 + $0x1f0] sm:$0xff]
          %v2371 = vld [vmem:[#allocation3 + $0x1f8] sm:$0xff]
          %v2372 = vld [vmem:[%s427] sm:$0x1]
          %v2374 = vlaneseq
          %v2375 = vshrl.u32 %v2374, 7
          %v2376 = vsub.s32 0, %v2375
          %v2377 = vrot.slane %v2372, %v2376
          %v2379 = vadd.f32 %v2308, %v2377
          %v2380 = vadd.f32 %v2309, %v2377
          %v2381 = vadd.f32 %v2310, %v2377
          %v2382 = vadd.f32 %v2311, %v2377
          %v2383 = vadd.f32 %v2312, %v2377
          %v2384 = vadd.f32 %v2313, %v2377
          %v2385 = vadd.f32 %v2314, %v2377
          %v2386 = vadd.f32 %v2315, %v2377
          %v2387 = vadd.f32 %v2316, %v2377
          %v2388 = vadd.f32 %v2317, %v2377
          %v2389 = vadd.f32 %v2318, %v2377
          %v2390 = vadd.f32 %v2319, %v2377
          %v2391 = vadd.f32 %v2320, %v2377
          %v2392 = vadd.f32 %v2321, %v2377
          %v2393 = vadd.f32 %v2322, %v2377
          %v2394 = vadd.f32 %v2323, %v2377
          %v2395 = vadd.f32 %v2324, %v2377
          %v2396 = vadd.f32 %v2325, %v2377
          %v2397 = vadd.f32 %v2326, %v2377
          %v2398 = vadd.f32 %v2327, %v2377
          %v2399 = vadd.f32 %v2328, %v2377
          %v2400 = vadd.f32 %v2329, %v2377
          %v2401 = vadd.f32 %v2330, %v2377
          %v2402 = vadd.f32 %v2331, %v2377
          %v2403 = vadd.f32 %v2332, %v2377
          %v2404 = vadd.f32 %v2333, %v2377
          %v2405 = vadd.f32 %v2334, %v2377
          %v2406 = vadd.f32 %v2335, %v2377
          %v2407 = vadd.f32 %v2336, %v2377
          %v2408 = vadd.f32 %v2337, %v2377
          %v2409 = vadd.f32 %v2338, %v2377
          %v2410 = vadd.f32 %v2339, %v2377
          %v2411 = vadd.f32 %v2340, %v2377
          %v2412 = vadd.f32 %v2341, %v2377
          %v2413 = vadd.f32 %v2342, %v2377
          %v2414 = vadd.f32 %v2343, %v2377
          %v2415 = vadd.f32 %v2344, %v2377
          %v2416 = vadd.f32 %v2345, %v2377
          %v2417 = vadd.f32 %v2346, %v2377
          %v2418 = vadd.f32 %v2347, %v2377
          %v2419 = vadd.f32 %v2348, %v2377
          %v2420 = vadd.f32 %v2349, %v2377
          %v2421 = vadd.f32 %v2350, %v2377
          %v2422 = vadd.f32 %v2351, %v2377
          %v2423 = vadd.f32 %v2352, %v2377
          %v2424 = vadd.f32 %v2353, %v2377
          %v2425 = vadd.f32 %v2354, %v2377
          %v2426 = vadd.f32 %v2355, %v2377
          %v2427 = vadd.f32 %v2356, %v2377
          %v2428 = vadd.f32 %v2357, %v2377
          %v2429 = vadd.f32 %v2358, %v2377
          %v2430 = vadd.f32 %v2359, %v2377
          %v2431 = vadd.f32 %v2360, %v2377
          %v2432 = vadd.f32 %v2361, %v2377
          %v2433 = vadd.f32 %v2362, %v2377
          %v2434 = vadd.f32 %v2363, %v2377
          %v2435 = vadd.f32 %v2364, %v2377
          %v2436 = vadd.f32 %v2365, %v2377
          %v2437 = vadd.f32 %v2366, %v2377
          %v2438 = vadd.f32 %v2367, %v2377
          %v2439 = vadd.f32 %v2368, %v2377
          %v2440 = vadd.f32 %v2369, %v2377
          %v2441 = vadd.f32 %v2370, %v2377
          %v2442 = vadd.f32 %v2371, %v2377
          %v2443 = vxor.u32 %v2379, 2147483648
          %v2444 = vxor.u32 %v2380, 2147483648
          %v2445 = vxor.u32 %v2381, 2147483648
          %v2446 = vxor.u32 %v2382, 2147483648
          %v2447 = vxor.u32 %v2383, 2147483648
          %v2448 = vxor.u32 %v2384, 2147483648
          %v2449 = vxor.u32 %v2385, 2147483648
          %v2450 = vxor.u32 %v2386, 2147483648
          %v2451 = vxor.u32 %v2387, 2147483648
          %v2452 = vxor.u32 %v2388, 2147483648
          %v2453 = vxor.u32 %v2389, 2147483648
          %v2454 = vxor.u32 %v2390, 2147483648
          %v2455 = vxor.u32 %v2391, 2147483648
          %v2456 = vxor.u32 %v2392, 2147483648
          %v2457 = vxor.u32 %v2393, 2147483648
          %v2458 = vxor.u32 %v2394, 2147483648
          %v2459 = vxor.u32 %v2395, 2147483648
          %v2460 = vxor.u32 %v2396, 2147483648
          %v2461 = vxor.u32 %v2397, 2147483648
          %v2462 = vxor.u32 %v2398, 2147483648
          %v2463 = vxor.u32 %v2399, 2147483648
          %v2464 = vxor.u32 %v2400, 2147483648
          %v2465 = vxor.u32 %v2401, 2147483648
          %v2466 = vxor.u32 %v2402, 2147483648
          %v2467 = vxor.u32 %v2403, 2147483648
          %v2468 = vxor.u32 %v2404, 2147483648
          %v2469 = vxor.u32 %v2405, 2147483648
          %v2470 = vxor.u32 %v2406, 2147483648
          %v2471 = vxor.u32 %v2407, 2147483648
          %v2472 = vxor.u32 %v2408, 2147483648
          %v2473 = vxor.u32 %v2409, 2147483648
          %v2474 = vxor.u32 %v2410, 2147483648
          %v2475 = vxor.u32 %v2411, 2147483648
          %v2476 = vxor.u32 %v2412, 2147483648
          %v2477 = vxor.u32 %v2413, 2147483648
          %v2478 = vxor.u32 %v2414, 2147483648
          %v2479 = vxor.u32 %v2415, 2147483648
          %v2480 = vxor.u32 %v2416, 2147483648
          %v2481 = vxor.u32 %v2417, 2147483648
          %v2482 = vxor.u32 %v2418, 2147483648
          %v2483 = vxor.u32 %v2419, 2147483648
          %v2484 = vxor.u32 %v2420, 2147483648
          %v2485 = vxor.u32 %v2421, 2147483648
          %v2486 = vxor.u32 %v2422, 2147483648
          %v2487 = vxor.u32 %v2423, 2147483648
          %v2488 = vxor.u32 %v2424, 2147483648
          %v2489 = vxor.u32 %v2425, 2147483648
          %v2490 = vxor.u32 %v2426, 2147483648
          %v2491 = vxor.u32 %v2427, 2147483648
          %v2492 = vxor.u32 %v2428, 2147483648
          %v2493 = vxor.u32 %v2429, 2147483648
          %v2494 = vxor.u32 %v2430, 2147483648
          %v2495 = vxor.u32 %v2431, 2147483648
          %v2496 = vxor.u32 %v2432, 2147483648
          %v2497 = vxor.u32 %v2433, 2147483648
          %v2498 = vxor.u32 %v2434, 2147483648
          %v2499 = vxor.u32 %v2435, 2147483648
          %v2500 = vxor.u32 %v2436, 2147483648
          %v2501 = vxor.u32 %v2437, 2147483648
          %v2502 = vxor.u32 %v2438, 2147483648
          %v2503 = vxor.u32 %v2439, 2147483648
          %v2504 = vxor.u32 %v2440, 2147483648
          %v2505 = vxor.u32 %v2441, 2147483648
          %v2506 = vxor.u32 %v2442, 2147483648
          %v2507 = vmul.f32 %v2443, 1.442695
          %v2508 = vpow.pop %v2507
          %v2509 = vmul.f32 %v2444, 1.442695
          %v2510 = vpow.pop %v2509
          %v2511 = vmul.f32 %v2445, 1.442695
          %v2512 = vpow.pop %v2511
          %v2513 = vmul.f32 %v2446, 1.442695
          %v2514 = vpow.pop %v2513
          %v2515 = vmul.f32 %v2447, 1.442695
          %v2516 = vpow.pop %v2515
          %v2517 = vmul.f32 %v2448, 1.442695
          %v2518 = vpow.pop %v2517
          %v2519 = vmul.f32 %v2449, 1.442695
          %v2520 = vpow.pop %v2519
          %v2521 = vmul.f32 %v2450, 1.442695
          %v2522 = vpow.pop %v2521
          %v2523 = vmul.f32 %v2451, 1.442695
          %v2524 = vpow.pop %v2523
          %v2525 = vmul.f32 %v2452, 1.442695
          %v2526 = vpow.pop %v2525
          %v2527 = vmul.f32 %v2453, 1.442695
          %v2528 = vpow.pop %v2527
          %v2529 = vmul.f32 %v2454, 1.442695
          %v2530 = vpow.pop %v2529
          %v2531 = vmul.f32 %v2455, 1.442695
          %v2532 = vpow.pop %v2531
          %v2533 = vmul.f32 %v2456, 1.442695
          %v2534 = vpow.pop %v2533
          %v2535 = vmul.f32 %v2457, 1.442695
          %v2536 = vpow.pop %v2535
          %v2537 = vmul.f32 %v2458, 1.442695
          %v2538 = vpow.pop %v2537
          %v2539 = vmul.f32 %v2459, 1.442695
          %v2540 = vpow.pop %v2539
          %v2541 = vmul.f32 %v2460, 1.442695
          %v2542 = vpow.pop %v2541
          %v2543 = vmul.f32 %v2461, 1.442695
          %v2544 = vpow.pop %v2543
          %v2545 = vmul.f32 %v2462, 1.442695
          %v2546 = vpow.pop %v2545
          %v2547 = vmul.f32 %v2463, 1.442695
          %v2548 = vpow.pop %v2547
          %v2549 = vmul.f32 %v2464, 1.442695
          %v2550 = vpow.pop %v2549
          %v2551 = vmul.f32 %v2465, 1.442695
          %v2552 = vpow.pop %v2551
          %v2553 = vmul.f32 %v2466, 1.442695
          %v2554 = vpow.pop %v2553
          %v2555 = vmul.f32 %v2467, 1.442695
          %v2556 = vpow.pop %v2555
          %v2557 = vmul.f32 %v2468, 1.442695
          %v2558 = vpow.pop %v2557
          %v2559 = vmul.f32 %v2469, 1.442695
          %v2560 = vpow.pop %v2559
          %v2561 = vmul.f32 %v2470, 1.442695
          %v2562 = vpow.pop %v2561
          %v2563 = vmul.f32 %v2471, 1.442695
          %v2564 = vpow.pop %v2563
          %v2565 = vmul.f32 %v2472, 1.442695
          %v2566 = vpow.pop %v2565
          %v2567 = vmul.f32 %v2473, 1.442695
          %v2568 = vpow.pop %v2567
          %v2569 = vmul.f32 %v2474, 1.442695
          %v2570 = vpow.pop %v2569
          %v2571 = vmul.f32 %v2475, 1.442695
          %v2572 = vpow.pop %v2571
          %v2573 = vmul.f32 %v2476, 1.442695
          %v2574 = vpow.pop %v2573
          %v2575 = vmul.f32 %v2477, 1.442695
          %v2576 = vpow.pop %v2575
          %v2577 = vmul.f32 %v2478, 1.442695
          %v2578 = vpow.pop %v2577
          %v2579 = vmul.f32 %v2479, 1.442695
          %v2580 = vpow.pop %v2579
          %v2581 = vmul.f32 %v2480, 1.442695
          %v2582 = vpow.pop %v2581
          %v2583 = vmul.f32 %v2481, 1.442695
          %v2584 = vpow.pop %v2583
          %v2585 = vmul.f32 %v2482, 1.442695
          %v2586 = vpow.pop %v2585
          %v2587 = vmul.f32 %v2483, 1.442695
          %v2588 = vpow.pop %v2587
          %v2589 = vmul.f32 %v2484, 1.442695
          %v2590 = vpow.pop %v2589
          %v2591 = vmul.f32 %v2485, 1.442695
          %v2592 = vpow.pop %v2591
          %v2593 = vmul.f32 %v2486, 1.442695
          %v2594 = vpow.pop %v2593
          %v2595 = vmul.f32 %v2487, 1.442695
          %v2596 = vpow.pop %v2595
          %v2597 = vmul.f32 %v2488, 1.442695
          %v2598 = vpow.pop %v2597
          %v2599 = vmul.f32 %v2489, 1.442695
          %v2600 = vpow.pop %v2599
          %v2601 = vmul.f32 %v2490, 1.442695
          %v2602 = vpow.pop %v2601
          %v2603 = vmul.f32 %v2491, 1.442695
          %v2604 = vpow.pop %v2603
          %v2605 = vmul.f32 %v2492, 1.442695
          %v2606 = vpow.pop %v2605
          %v2607 = vmul.f32 %v2493, 1.442695
          %v2608 = vpow.pop %v2607
          %v2609 = vmul.f32 %v2494, 1.442695
          %v2610 = vpow.pop %v2609
          %v2611 = vmul.f32 %v2495, 1.442695
          %v2612 = vpow.pop %v2611
          %v2613 = vmul.f32 %v2496, 1.442695
          %v2614 = vpow.pop %v2613
          %v2615 = vmul.f32 %v2497, 1.442695
          %v2616 = vpow.pop %v2615
          %v2617 = vmul.f32 %v2498, 1.442695
          %v2618 = vpow.pop %v2617
          %v2619 = vmul.f32 %v2499, 1.442695
          %v2620 = vpow.pop %v2619
          %v2621 = vmul.f32 %v2500, 1.442695
          %v2622 = vpow.pop %v2621
          %v2623 = vmul.f32 %v2501, 1.442695
          %v2624 = vpow.pop %v2623
          %v2625 = vmul.f32 %v2502, 1.442695
          %v2626 = vpow.pop %v2625
          %v2627 = vmul.f32 %v2503, 1.442695
          %v2628 = vpow.pop %v2627
          %v2629 = vmul.f32 %v2504, 1.442695
          %v2630 = vpow.pop %v2629
          %v2631 = vmul.f32 %v2505, 1.442695
          %v2632 = vpow.pop %v2631
          %v2633 = vmul.f32 %v2506, 1.442695
          %v2634 = vpow.pop %v2633
          %v2635 = vadd.f32 %v2508, 1.0
          %v2636 = vadd.f32 %v2510, 1.0
          %v2637 = vadd.f32 %v2512, 1.0
          %v2638 = vadd.f32 %v2514, 1.0
          %v2639 = vadd.f32 %v2516, 1.0
          %v2640 = vadd.f32 %v2518, 1.0
          %v2641 = vadd.f32 %v2520, 1.0
          %v2642 = vadd.f32 %v2522, 1.0
          %v2643 = vadd.f32 %v2524, 1.0
          %v2644 = vadd.f32 %v2526, 1.0
          %v2645 = vadd.f32 %v2528, 1.0
          %v2646 = vadd.f32 %v2530, 1.0
          %v2647 = vadd.f32 %v2532, 1.0
          %v2648 = vadd.f32 %v2534, 1.0
          %v2649 = vadd.f32 %v2536, 1.0
          %v2650 = vadd.f32 %v2538, 1.0
          %v2651 = vadd.f32 %v2540, 1.0
          %v2652 = vadd.f32 %v2542, 1.0
          %v2653 = vadd.f32 %v2544, 1.0
          %v2654 = vadd.f32 %v2546, 1.0
          %v2655 = vadd.f32 %v2548, 1.0
          %v2656 = vadd.f32 %v2550, 1.0
          %v2657 = vadd.f32 %v2552, 1.0
          %v2658 = vadd.f32 %v2554, 1.0
          %v2659 = vadd.f32 %v2556, 1.0
          %v2660 = vadd.f32 %v2558, 1.0
          %v2661 = vadd.f32 %v2560, 1.0
          %v2662 = vadd.f32 %v2562, 1.0
          %v2663 = vadd.f32 %v2564, 1.0
          %v2664 = vadd.f32 %v2566, 1.0
          %v2665 = vadd.f32 %v2568, 1.0
          %v2666 = vadd.f32 %v2570, 1.0
          %v2667 = vadd.f32 %v2572, 1.0
          %v2668 = vadd.f32 %v2574, 1.0
          %v2669 = vadd.f32 %v2576, 1.0
          %v2670 = vadd.f32 %v2578, 1.0
          %v2671 = vadd.f32 %v2580, 1.0
          %v2672 = vadd.f32 %v2582, 1.0
          %v2673 = vadd.f32 %v2584, 1.0
          %v2674 = vadd.f32 %v2586, 1.0
          %v2675 = vadd.f32 %v2588, 1.0
          %v2676 = vadd.f32 %v2590, 1.0
          %v2677 = vadd.f32 %v2592, 1.0
          %v2678 = vadd.f32 %v2594, 1.0
          %v2679 = vadd.f32 %v2596, 1.0
          %v2680 = vadd.f32 %v2598, 1.0
          %v2681 = vadd.f32 %v2600, 1.0
          %v2682 = vadd.f32 %v2602, 1.0
          %v2683 = vadd.f32 %v2604, 1.0
          %v2684 = vadd.f32 %v2606, 1.0
          %v2685 = vadd.f32 %v2608, 1.0
          %v2686 = vadd.f32 %v2610, 1.0
          %v2687 = vadd.f32 %v2612, 1.0
          %v2688 = vadd.f32 %v2614, 1.0
          %v2689 = vadd.f32 %v2616, 1.0
          %v2690 = vadd.f32 %v2618, 1.0
          %v2691 = vadd.f32 %v2620, 1.0
          %v2692 = vadd.f32 %v2622, 1.0
          %v2693 = vadd.f32 %v2624, 1.0
          %v2694 = vadd.f32 %v2626, 1.0
          %v2695 = vadd.f32 %v2628, 1.0
          %v2696 = vadd.f32 %v2630, 1.0
          %v2697 = vadd.f32 %v2632, 1.0
          %v2698 = vadd.f32 %v2634, 1.0
          %v2699 = vrcp.pop %v2635
          %v2700 = vmul.f32 1.0, %v2699
          %v2701 = vrcp.pop %v2636
          %v2702 = vmul.f32 1.0, %v2701
          %v2703 = vrcp.pop %v2637
          %v2704 = vmul.f32 1.0, %v2703
          %v2705 = vrcp.pop %v2638
          %v2706 = vmul.f32 1.0, %v2705
          %v2707 = vrcp.pop %v2639
          %v2708 = vmul.f32 1.0, %v2707
          %v2709 = vrcp.pop %v2640
          %v2710 = vmul.f32 1.0, %v2709
          %v2711 = vrcp.pop %v2641
          %v2712 = vmul.f32 1.0, %v2711
          %v2713 = vrcp.pop %v2642
          %v2714 = vmul.f32 1.0, %v2713
          %v2715 = vrcp.pop %v2643
          %v2716 = vmul.f32 1.0, %v2715
          %v2717 = vrcp.pop %v2644
          %v2718 = vmul.f32 1.0, %v2717
          %v2719 = vrcp.pop %v2645
          %v2720 = vmul.f32 1.0, %v2719
          %v2721 = vrcp.pop %v2646
          %v2722 = vmul.f32 1.0, %v2721
          %v2723 = vrcp.pop %v2647
          %v2724 = vmul.f32 1.0, %v2723
          %v2725 = vrcp.pop %v2648
          %v2726 = vmul.f32 1.0, %v2725
          %v2727 = vrcp.pop %v2649
          %v2728 = vmul.f32 1.0, %v2727
          %v2729 = vrcp.pop %v2650
          %v2730 = vmul.f32 1.0, %v2729
          %v2731 = vrcp.pop %v2651
          %v2732 = vmul.f32 1.0, %v2731
          %v2733 = vrcp.pop %v2652
          %v2734 = vmul.f32 1.0, %v2733
          %v2735 = vrcp.pop %v2653
          %v2736 = vmul.f32 1.0, %v2735
          %v2737 = vrcp.pop %v2654
          %v2738 = vmul.f32 1.0, %v2737
          %v2739 = vrcp.pop %v2655
          %v2740 = vmul.f32 1.0, %v2739
          %v2741 = vrcp.pop %v2656
          %v2742 = vmul.f32 1.0, %v2741
          %v2743 = vrcp.pop %v2657
          %v2744 = vmul.f32 1.0, %v2743
          %v2745 = vrcp.pop %v2658
          %v2746 = vmul.f32 1.0, %v2745
          %v2747 = vrcp.pop %v2659
          %v2748 = vmul.f32 1.0, %v2747
          %v2749 = vrcp.pop %v2660
          %v2750 = vmul.f32 1.0, %v2749
          %v2751 = vrcp.pop %v2661
          %v2752 = vmul.f32 1.0, %v2751
          %v2753 = vrcp.pop %v2662
          %v2754 = vmul.f32 1.0, %v2753
          %v2755 = vrcp.pop %v2663
          %v2756 = vmul.f32 1.0, %v2755
          %v2757 = vrcp.pop %v2664
          %v2758 = vmul.f32 1.0, %v2757
          %v2759 = vrcp.pop %v2665
          %v2760 = vmul.f32 1.0, %v2759
          %v2761 = vrcp.pop %v2666
          %v2762 = vmul.f32 1.0, %v2761
          %v2763 = vrcp.pop %v2667
          %v2764 = vmul.f32 1.0, %v2763
          %v2765 = vrcp.pop %v2668
          %v2766 = vmul.f32 1.0, %v2765
          %v2767 = vrcp.pop %v2669
          %v2768 = vmul.f32 1.0, %v2767
          %v2769 = vrcp.pop %v2670
          %v2770 = vmul.f32 1.0, %v2769
          %v2771 = vrcp.pop %v2671
          %v2772 = vmul.f32 1.0, %v2771
          %v2773 = vrcp.pop %v2672
          %v2774 = vmul.f32 1.0, %v2773
          %v2775 = vrcp.pop %v2673
          %v2776 = vmul.f32 1.0, %v2775
          %v2777 = vrcp.pop %v2674
          %v2778 = vmul.f32 1.0, %v2777
          %v2779 = vrcp.pop %v2675
          %v2780 = vmul.f32 1.0, %v2779
          %v2781 = vrcp.pop %v2676
          %v2782 = vmul.f32 1.0, %v2781
          %v2783 = vrcp.pop %v2677
          %v2784 = vmul.f32 1.0, %v2783
          %v2785 = vrcp.pop %v2678
          %v2786 = vmul.f32 1.0, %v2785
          %v2787 = vrcp.pop %v2679
          %v2788 = vmul.f32 1.0, %v2787
          %v2789 = vrcp.pop %v2680
          %v2790 = vmul.f32 1.0, %v2789
          %v2791 = vrcp.pop %v2681
          %v2792 = vmul.f32 1.0, %v2791
          %v2793 = vrcp.pop %v2682
          %v2794 = vmul.f32 1.0, %v2793
          %v2795 = vrcp.pop %v2683
          %v2796 = vmul.f32 1.0, %v2795
          %v2797 = vrcp.pop %v2684
          %v2798 = vmul.f32 1.0, %v2797
          %v2799 = vrcp.pop %v2685
          %v2800 = vmul.f32 1.0, %v2799
          %v2801 = vrcp.pop %v2686
          %v2802 = vmul.f32 1.0, %v2801
          %v2803 = vrcp.pop %v2687
          %v2804 = vmul.f32 1.0, %v2803
          %v2805 = vrcp.pop %v2688
          %v2806 = vmul.f32 1.0, %v2805
          %v2807 = vrcp.pop %v2689
          %v2808 = vmul.f32 1.0, %v2807
          %v2809 = vrcp.pop %v2690
          %v2810 = vmul.f32 1.0, %v2809
          %v2811 = vrcp.pop %v2691
          %v2812 = vmul.f32 1.0, %v2811
          %v2813 = vrcp.pop %v2692
          %v2814 = vmul.f32 1.0, %v2813
          %v2815 = vrcp.pop %v2693
          %v2816 = vmul.f32 1.0, %v2815
          %v2817 = vrcp.pop %v2694
          %v2818 = vmul.f32 1.0, %v2817
          %v2819 = vrcp.pop %v2695
          %v2820 = vmul.f32 1.0, %v2819
          %v2821 = vrcp.pop %v2696
          %v2822 = vmul.f32 1.0, %v2821
          %v2823 = vrcp.pop %v2697
          %v2824 = vmul.f32 1.0, %v2823
          %v2825 = vrcp.pop %v2698
          %v2826 = vmul.f32 1.0, %v2825
          %v2827 = vmul.f32 %v2244, %v2700
          %v2828 = vmul.f32 %v2245, %v2702
          %v2829 = vmul.f32 %v2246, %v2704
          %v2830 = vmul.f32 %v2247, %v2706
          %v2831 = vmul.f32 %v2248, %v2708
          %v2832 = vmul.f32 %v2249, %v2710
          %v2833 = vmul.f32 %v2250, %v2712
          %v2834 = vmul.f32 %v2251, %v2714
          %v2835 = vmul.f32 %v2252, %v2716
          %v2836 = vmul.f32 %v2253, %v2718
          %v2837 = vmul.f32 %v2254, %v2720
          %v2838 = vmul.f32 %v2255, %v2722
          %v2839 = vmul.f32 %v2256, %v2724
          %v2840 = vmul.f32 %v2257, %v2726
          %v2841 = vmul.f32 %v2258, %v2728
          %v2842 = vmul.f32 %v2259, %v2730
          %v2843 = vmul.f32 %v2260, %v2732
          %v2844 = vmul.f32 %v2261, %v2734
          %v2845 = vmul.f32 %v2262, %v2736
          %v2846 = vmul.f32 %v2263, %v2738
          %v2847 = vmul.f32 %v2264, %v2740
          %v2848 = vmul.f32 %v2265, %v2742
          %v2849 = vmul.f32 %v2266, %v2744
          %v2850 = vmul.f32 %v2267, %v2746
          %v2851 = vmul.f32 %v2268, %v2748
          %v2852 = vmul.f32 %v2269, %v2750
          %v2853 = vmul.f32 %v2270, %v2752
          %v2854 = vmul.f32 %v2271, %v2754
          %v2855 = vmul.f32 %v2272, %v2756
          %v2856 = vmul.f32 %v2273, %v2758
          %v2857 = vmul.f32 %v2274, %v2760
          %v2858 = vmul.f32 %v2275, %v2762
          %v2859 = vmul.f32 %v2276, %v2764
          %v2860 = vmul.f32 %v2277, %v2766
          %v2861 = vmul.f32 %v2278, %v2768
          %v2862 = vmul.f32 %v2279, %v2770
          %v2863 = vmul.f32 %v2280, %v2772
          %v2864 = vmul.f32 %v2281, %v2774
          %v2865 = vmul.f32 %v2282, %v2776
          %v2866 = vmul.f32 %v2283, %v2778
          %v2867 = vmul.f32 %v2284, %v2780
          %v2868 = vmul.f32 %v2285, %v2782
          %v2869 = vmul.f32 %v2286, %v2784
          %v2870 = vmul.f32 %v2287, %v2786
          %v2871 = vmul.f32 %v2288, %v2788
          %v2872 = vmul.f32 %v2289, %v2790
          %v2873 = vmul.f32 %v2290, %v2792
          %v2874 = vmul.f32 %v2291, %v2794
          %v2875 = vmul.f32 %v2292, %v2796
          %v2876 = vmul.f32 %v2293, %v2798
          %v2877 = vmul.f32 %v2294, %v2800
          %v2878 = vmul.f32 %v2295, %v2802
          %v2879 = vmul.f32 %v2296, %v2804
          %v2880 = vmul.f32 %v2297, %v2806
          %v2881 = vmul.f32 %v2298, %v2808
          %v2882 = vmul.f32 %v2299, %v2810
          %v2883 = vmul.f32 %v2300, %v2812
          %v2884 = vmul.f32 %v2301, %v2814
          %v2885 = vmul.f32 %v2302, %v2816
          %v2886 = vmul.f32 %v2303, %v2818
          %v2887 = vmul.f32 %v2304, %v2820
          %v2888 = vmul.f32 %v2305, %v2822
          %v2889 = vmul.f32 %v2306, %v2824
          %v2890 = vmul.f32 %v2307, %v2826
          %v2891 = vld [vmem:[%s430] sm:$0x1]
          %v2893 = vlaneseq
          %v2894 = vshrl.u32 %v2893, 7
          %v2895 = vsub.s32 0, %v2894
          %v2896 = vrot.slane %v2891, %v2895
          %v2898 = vmul.f32 %v2827, %v2896
          %v2899 = vmul.f32 %v2828, %v2896
          %v2900 = vmul.f32 %v2829, %v2896
          %v2901 = vmul.f32 %v2830, %v2896
          %v2902 = vmul.f32 %v2831, %v2896
          %v2903 = vmul.f32 %v2832, %v2896
          %v2904 = vmul.f32 %v2833, %v2896
          %v2905 = vmul.f32 %v2834, %v2896
          %v2906 = vmul.f32 %v2835, %v2896
          %v2907 = vmul.f32 %v2836, %v2896
          %v2908 = vmul.f32 %v2837, %v2896
          %v2909 = vmul.f32 %v2838, %v2896
          %v2910 = vmul.f32 %v2839, %v2896
          %v2911 = vmul.f32 %v2840, %v2896
          %v2912 = vmul.f32 %v2841, %v2896
          %v2913 = vmul.f32 %v2842, %v2896
          %v2914 = vmul.f32 %v2843, %v2896
          %v2915 = vmul.f32 %v2844, %v2896
          %v2916 = vmul.f32 %v2845, %v2896
          %v2917 = vmul.f32 %v2846, %v2896
          %v2918 = vmul.f32 %v2847, %v2896
          %v2919 = vmul.f32 %v2848, %v2896
          %v2920 = vmul.f32 %v2849, %v2896
          %v2921 = vmul.f32 %v2850, %v2896
          %v2922 = vmul.f32 %v2851, %v2896
          %v2923 = vmul.f32 %v2852, %v2896
          %v2924 = vmul.f32 %v2853, %v2896
          %v2925 = vmul.f32 %v2854, %v2896
          %v2926 = vmul.f32 %v2855, %v2896
          %v2927 = vmul.f32 %v2856, %v2896
          %v2928 = vmul.f32 %v2857, %v2896
          %v2929 = vmul.f32 %v2858, %v2896
          %v2930 = vmul.f32 %v2859, %v2896
          %v2931 = vmul.f32 %v2860, %v2896
          %v2932 = vmul.f32 %v2861, %v2896
          %v2933 = vmul.f32 %v2862, %v2896
          %v2934 = vmul.f32 %v2863, %v2896
          %v2935 = vmul.f32 %v2864, %v2896
          %v2936 = vmul.f32 %v2865, %v2896
          %v2937 = vmul.f32 %v2866, %v2896
          %v2938 = vmul.f32 %v2867, %v2896
          %v2939 = vmul.f32 %v2868, %v2896
          %v2940 = vmul.f32 %v2869, %v2896
          %v2941 = vmul.f32 %v2870, %v2896
          %v2942 = vmul.f32 %v2871, %v2896
          %v2943 = vmul.f32 %v2872, %v2896
          %v2944 = vmul.f32 %v2873, %v2896
          %v2945 = vmul.f32 %v2874, %v2896
          %v2946 = vmul.f32 %v2875, %v2896
          %v2947 = vmul.f32 %v2876, %v2896
          %v2948 = vmul.f32 %v2877, %v2896
          %v2949 = vmul.f32 %v2878, %v2896
          %v2950 = vmul.f32 %v2879, %v2896
          %v2951 = vmul.f32 %v2880, %v2896
          %v2952 = vmul.f32 %v2881, %v2896
          %v2953 = vmul.f32 %v2882, %v2896
          %v2954 = vmul.f32 %v2883, %v2896
          %v2955 = vmul.f32 %v2884, %v2896
          %v2956 = vmul.f32 %v2885, %v2896
          %v2957 = vmul.f32 %v2886, %v2896
          %v2958 = vmul.f32 %v2887, %v2896
          %v2959 = vmul.f32 %v2888, %v2896
          %v2960 = vmul.f32 %v2889, %v2896
          %v2961 = vmul.f32 %v2890, %v2896
          %v2962 = vld [vmem:[%s433] sm:$0x1]
          %v2964 = vlaneseq
          %v2965 = vshrl.u32 %v2964, 7
          %v2966 = vsub.s32 0, %v2965
          %v2967 = vrot.slane %v2962, %v2966
          %v2969 = vadd.f32 %v2898, %v2967
          %v2970 = vadd.f32 %v2899, %v2967
          %v2971 = vadd.f32 %v2900, %v2967
          %v2972 = vadd.f32 %v2901, %v2967
          %v2973 = vadd.f32 %v2902, %v2967
          %v2974 = vadd.f32 %v2903, %v2967
          %v2975 = vadd.f32 %v2904, %v2967
          %v2976 = vadd.f32 %v2905, %v2967
          %v2977 = vadd.f32 %v2906, %v2967
          %v2978 = vadd.f32 %v2907, %v2967
          %v2979 = vadd.f32 %v2908, %v2967
          %v2980 = vadd.f32 %v2909, %v2967
          %v2981 = vadd.f32 %v2910, %v2967
          %v2982 = vadd.f32 %v2911, %v2967
          %v2983 = vadd.f32 %v2912, %v2967
          %v2984 = vadd.f32 %v2913, %v2967
          %v2985 = vadd.f32 %v2914, %v2967
          %v2986 = vadd.f32 %v2915, %v2967
          %v2987 = vadd.f32 %v2916, %v2967
          %v2988 = vadd.f32 %v2917, %v2967
          %v2989 = vadd.f32 %v2918, %v2967
          %v2990 = vadd.f32 %v2919, %v2967
          %v2991 = vadd.f32 %v2920, %v2967
          %v2992 = vadd.f32 %v2921, %v2967
          %v2993 = vadd.f32 %v2922, %v2967
          %v2994 = vadd.f32 %v2923, %v2967
          %v2995 = vadd.f32 %v2924, %v2967
          %v2996 = vadd.f32 %v2925, %v2967
          %v2997 = vadd.f32 %v2926, %v2967
          %v2998 = vadd.f32 %v2927, %v2967
          %v2999 = vadd.f32 %v2928, %v2967
          %v3000 = vadd.f32 %v2929, %v2967
          %v3001 = vadd.f32 %v2930, %v2967
          %v3002 = vadd.f32 %v2931, %v2967
          %v3003 = vadd.f32 %v2932, %v2967
          %v3004 = vadd.f32 %v2933, %v2967
          %v3005 = vadd.f32 %v2934, %v2967
          %v3006 = vadd.f32 %v2935, %v2967
          %v3007 = vadd.f32 %v2936, %v2967
          %v3008 = vadd.f32 %v2937, %v2967
          %v3009 = vadd.f32 %v2938, %v2967
          %v3010 = vadd.f32 %v2939, %v2967
          %v3011 = vadd.f32 %v2940, %v2967
          %v3012 = vadd.f32 %v2941, %v2967
          %v3013 = vadd.f32 %v2942, %v2967
          %v3014 = vadd.f32 %v2943, %v2967
          %v3015 = vadd.f32 %v2944, %v2967
          %v3016 = vadd.f32 %v2945, %v2967
          %v3017 = vadd.f32 %v2946, %v2967
          %v3018 = vadd.f32 %v2947, %v2967
          %v3019 = vadd.f32 %v2948, %v2967
          %v3020 = vadd.f32 %v2949, %v2967
          %v3021 = vadd.f32 %v2950, %v2967
          %v3022 = vadd.f32 %v2951, %v2967
          %v3023 = vadd.f32 %v2952, %v2967
          %v3024 = vadd.f32 %v2953, %v2967
          %v3025 = vadd.f32 %v2954, %v2967
          %v3026 = vadd.f32 %v2955, %v2967
          %v3027 = vadd.f32 %v2956, %v2967
          %v3028 = vadd.f32 %v2957, %v2967
          %v3029 = vadd.f32 %v2958, %v2967
          %v3030 = vadd.f32 %v2959, %v2967
          %v3031 = vadd.f32 %v2960, %v2967
          %v3032 = vadd.f32 %v2961, %v2967
          %v3033 = vxor.u32 %v2969, 2147483648
          %v3034 = vxor.u32 %v2970, 2147483648
          %v3035 = vxor.u32 %v2971, 2147483648
          %v3036 = vxor.u32 %v2972, 2147483648
          %v3037 = vxor.u32 %v2973, 2147483648
          %v3038 = vxor.u32 %v2974, 2147483648
          %v3039 = vxor.u32 %v2975, 2147483648
          %v3040 = vxor.u32 %v2976, 2147483648
          %v3041 = vxor.u32 %v2977, 2147483648
          %v3042 = vxor.u32 %v2978, 2147483648
          %v3043 = vxor.u32 %v2979, 2147483648
          %v3044 = vxor.u32 %v2980, 2147483648
          %v3045 = vxor.u32 %v2981, 2147483648
          %v3046 = vxor.u32 %v2982, 2147483648
          %v3047 = vxor.u32 %v2983, 2147483648
          %v3048 = vxor.u32 %v2984, 2147483648
          %v3049 = vxor.u32 %v2985, 2147483648
          %v3050 = vxor.u32 %v2986, 2147483648
          %v3051 = vxor.u32 %v2987, 2147483648
          %v3052 = vxor.u32 %v2988, 2147483648
          %v3053 = vxor.u32 %v2989, 2147483648
          %v3054 = vxor.u32 %v2990, 2147483648
          %v3055 = vxor.u32 %v2991, 2147483648
          %v3056 = vxor.u32 %v2992, 2147483648
          %v3057 = vxor.u32 %v2993, 2147483648
          %v3058 = vxor.u32 %v2994, 2147483648
          %v3059 = vxor.u32 %v2995, 2147483648
          %v3060 = vxor.u32 %v2996, 2147483648
          %v3061 = vxor.u32 %v2997, 2147483648
          %v3062 = vxor.u32 %v2998, 2147483648
          %v3063 = vxor.u32 %v2999, 2147483648
          %v3064 = vxor.u32 %v3000, 2147483648
          %v3065 = vxor.u32 %v3001, 2147483648
          %v3066 = vxor.u32 %v3002, 2147483648
          %v3067 = vxor.u32 %v3003, 2147483648
          %v3068 = vxor.u32 %v3004, 2147483648
          %v3069 = vxor.u32 %v3005, 2147483648
          %v3070 = vxor.u32 %v3006, 2147483648
          %v3071 = vxor.u32 %v3007, 2147483648
          %v3072 = vxor.u32 %v3008, 2147483648
          %v3073 = vxor.u32 %v3009, 2147483648
          %v3074 = vxor.u32 %v3010, 2147483648
          %v3075 = vxor.u32 %v3011, 2147483648
          %v3076 = vxor.u32 %v3012, 2147483648
          %v3077 = vxor.u32 %v3013, 2147483648
          %v3078 = vxor.u32 %v3014, 2147483648
          %v3079 = vxor.u32 %v3015, 2147483648
          %v3080 = vxor.u32 %v3016, 2147483648
          %v3081 = vxor.u32 %v3017, 2147483648
          %v3082 = vxor.u32 %v3018, 2147483648
          %v3083 = vxor.u32 %v3019, 2147483648
          %v3084 = vxor.u32 %v3020, 2147483648
          %v3085 = vxor.u32 %v3021, 2147483648
          %v3086 = vxor.u32 %v3022, 2147483648
          %v3087 = vxor.u32 %v3023, 2147483648
          %v3088 = vxor.u32 %v3024, 2147483648
          %v3089 = vxor.u32 %v3025, 2147483648
          %v3090 = vxor.u32 %v3026, 2147483648
          %v3091 = vxor.u32 %v3027, 2147483648
          %v3092 = vxor.u32 %v3028, 2147483648
          %v3093 = vxor.u32 %v3029, 2147483648
          %v3094 = vxor.u32 %v3030, 2147483648
          %v3095 = vxor.u32 %v3031, 2147483648
          %v3096 = vxor.u32 %v3032, 2147483648
          %v3097 = vmul.f32 %v3033, 1.442695
          %v3098 = vpow.pop %v3097
          %v3099 = vmul.f32 %v3034, 1.442695
          %v3100 = vpow.pop %v3099
          %v3101 = vmul.f32 %v3035, 1.442695
          %v3102 = vpow.pop %v3101
          %v3103 = vmul.f32 %v3036, 1.442695
          %v3104 = vpow.pop %v3103
          %v3105 = vmul.f32 %v3037, 1.442695
          %v3106 = vpow.pop %v3105
          %v3107 = vmul.f32 %v3038, 1.442695
          %v3108 = vpow.pop %v3107
          %v3109 = vmul.f32 %v3039, 1.442695
          %v3110 = vpow.pop %v3109
          %v3111 = vmul.f32 %v3040, 1.442695
          %v3112 = vpow.pop %v3111
          %v3113 = vmul.f32 %v3041, 1.442695
          %v3114 = vpow.pop %v3113
          %v3115 = vmul.f32 %v3042, 1.442695
          %v3116 = vpow.pop %v3115
          %v3117 = vmul.f32 %v3043, 1.442695
          %v3118 = vpow.pop %v3117
          %v3119 = vmul.f32 %v3044, 1.442695
          %v3120 = vpow.pop %v3119
          %v3121 = vmul.f32 %v3045, 1.442695
          %v3122 = vpow.pop %v3121
          %v3123 = vmul.f32 %v3046, 1.442695
          %v3124 = vpow.pop %v3123
          %v3125 = vmul.f32 %v3047, 1.442695
          %v3126 = vpow.pop %v3125
          %v3127 = vmul.f32 %v3048, 1.442695
          %v3128 = vpow.pop %v3127
          %v3129 = vmul.f32 %v3049, 1.442695
          %v3130 = vpow.pop %v3129
          %v3131 = vmul.f32 %v3050, 1.442695
          %v3132 = vpow.pop %v3131
          %v3133 = vmul.f32 %v3051, 1.442695
          %v3134 = vpow.pop %v3133
          %v3135 = vmul.f32 %v3052, 1.442695
          %v3136 = vpow.pop %v3135
          %v3137 = vmul.f32 %v3053, 1.442695
          %v3138 = vpow.pop %v3137
          %v3139 = vmul.f32 %v3054, 1.442695
          %v3140 = vpow.pop %v3139
          %v3141 = vmul.f32 %v3055, 1.442695
          %v3142 = vpow.pop %v3141
          %v3143 = vmul.f32 %v3056, 1.442695
          %v3144 = vpow.pop %v3143
          %v3145 = vmul.f32 %v3057, 1.442695
          %v3146 = vpow.pop %v3145
          %v3147 = vmul.f32 %v3058, 1.442695
          %v3148 = vpow.pop %v3147
          %v3149 = vmul.f32 %v3059, 1.442695
          %v3150 = vpow.pop %v3149
          %v3151 = vmul.f32 %v3060, 1.442695
          %v3152 = vpow.pop %v3151
          %v3153 = vmul.f32 %v3061, 1.442695
          %v3154 = vpow.pop %v3153
          %v3155 = vmul.f32 %v3062, 1.442695
          %v3156 = vpow.pop %v3155
          %v3157 = vmul.f32 %v3063, 1.442695
          %v3158 = vpow.pop %v3157
          %v3159 = vmul.f32 %v3064, 1.442695
          %v3160 = vpow.pop %v3159
          %v3161 = vmul.f32 %v3065, 1.442695
          %v3162 = vpow.pop %v3161
          %v3163 = vmul.f32 %v3066, 1.442695
          %v3164 = vpow.pop %v3163
          %v3165 = vmul.f32 %v3067, 1.442695
          %v3166 = vpow.pop %v3165
          %v3167 = vmul.f32 %v3068, 1.442695
          %v3168 = vpow.pop %v3167
          %v3169 = vmul.f32 %v3069, 1.442695
          %v3170 = vpow.pop %v3169
          %v3171 = vmul.f32 %v3070, 1.442695
          %v3172 = vpow.pop %v3171
          %v3173 = vmul.f32 %v3071, 1.442695
          %v3174 = vpow.pop %v3173
          %v3175 = vmul.f32 %v3072, 1.442695
          %v3176 = vpow.pop %v3175
          %v3177 = vmul.f32 %v3073, 1.442695
          %v3178 = vpow.pop %v3177
          %v3179 = vmul.f32 %v3074, 1.442695
          %v3180 = vpow.pop %v3179
          %v3181 = vmul.f32 %v3075, 1.442695
          %v3182 = vpow.pop %v3181
          %v3183 = vmul.f32 %v3076, 1.442695
          %v3184 = vpow.pop %v3183
          %v3185 = vmul.f32 %v3077, 1.442695
          %v3186 = vpow.pop %v3185
          %v3187 = vmul.f32 %v3078, 1.442695
          %v3188 = vpow.pop %v3187
          %v3189 = vmul.f32 %v3079, 1.442695
          %v3190 = vpow.pop %v3189
          %v3191 = vmul.f32 %v3080, 1.442695
          %v3192 = vpow.pop %v3191
          %v3193 = vmul.f32 %v3081, 1.442695
          %v3194 = vpow.pop %v3193
          %v3195 = vmul.f32 %v3082, 1.442695
          %v3196 = vpow.pop %v3195
          %v3197 = vmul.f32 %v3083, 1.442695
          %v3198 = vpow.pop %v3197
          %v3199 = vmul.f32 %v3084, 1.442695
          %v3200 = vpow.pop %v3199
          %v3201 = vmul.f32 %v3085, 1.442695
          %v3202 = vpow.pop %v3201
          %v3203 = vmul.f32 %v3086, 1.442695
          %v3204 = vpow.pop %v3203
          %v3205 = vmul.f32 %v3087, 1.442695
          %v3206 = vpow.pop %v3205
          %v3207 = vmul.f32 %v3088, 1.442695
          %v3208 = vpow.pop %v3207
          %v3209 = vmul.f32 %v3089, 1.442695
          %v3210 = vpow.pop %v3209
          %v3211 = vmul.f32 %v3090, 1.442695
          %v3212 = vpow.pop %v3211
          %v3213 = vmul.f32 %v3091, 1.442695
          %v3214 = vpow.pop %v3213
          %v3215 = vmul.f32 %v3092, 1.442695
          %v3216 = vpow.pop %v3215
          %v3217 = vmul.f32 %v3093, 1.442695
          %v3218 = vpow.pop %v3217
          %v3219 = vmul.f32 %v3094, 1.442695
          %v3220 = vpow.pop %v3219
          %v3221 = vmul.f32 %v3095, 1.442695
          %v3222 = vpow.pop %v3221
          %v3223 = vmul.f32 %v3096, 1.442695
          %v3224 = vpow.pop %v3223
          %v3225 = vadd.f32 %v3098, 1.0
          %v3226 = vadd.f32 %v3100, 1.0
          %v3227 = vadd.f32 %v3102, 1.0
          %v3228 = vadd.f32 %v3104, 1.0
          %v3229 = vadd.f32 %v3106, 1.0
          %v3230 = vadd.f32 %v3108, 1.0
          %v3231 = vadd.f32 %v3110, 1.0
          %v3232 = vadd.f32 %v3112, 1.0
          %v3233 = vadd.f32 %v3114, 1.0
          %v3234 = vadd.f32 %v3116, 1.0
          %v3235 = vadd.f32 %v3118, 1.0
          %v3236 = vadd.f32 %v3120, 1.0
          %v3237 = vadd.f32 %v3122, 1.0
          %v3238 = vadd.f32 %v3124, 1.0
          %v3239 = vadd.f32 %v3126, 1.0
          %v3240 = vadd.f32 %v3128, 1.0
          %v3241 = vadd.f32 %v3130, 1.0
          %v3242 = vadd.f32 %v3132, 1.0
          %v3243 = vadd.f32 %v3134, 1.0
          %v3244 = vadd.f32 %v3136, 1.0
          %v3245 = vadd.f32 %v3138, 1.0
          %v3246 = vadd.f32 %v3140, 1.0
          %v3247 = vadd.f32 %v3142, 1.0
          %v3248 = vadd.f32 %v3144, 1.0
          %v3249 = vadd.f32 %v3146, 1.0
          %v3250 = vadd.f32 %v3148, 1.0
          %v3251 = vadd.f32 %v3150, 1.0
          %v3252 = vadd.f32 %v3152, 1.0
          %v3253 = vadd.f32 %v3154, 1.0
          %v3254 = vadd.f32 %v3156, 1.0
          %v3255 = vadd.f32 %v3158, 1.0
          %v3256 = vadd.f32 %v3160, 1.0
          %v3257 = vadd.f32 %v3162, 1.0
          %v3258 = vadd.f32 %v3164, 1.0
          %v3259 = vadd.f32 %v3166, 1.0
          %v3260 = vadd.f32 %v3168, 1.0
          %v3261 = vadd.f32 %v3170, 1.0
          %v3262 = vadd.f32 %v3172, 1.0
          %v3263 = vadd.f32 %v3174, 1.0
          %v3264 = vadd.f32 %v3176, 1.0
          %v3265 = vadd.f32 %v3178, 1.0
          %v3266 = vadd.f32 %v3180, 1.0
          %v3267 = vadd.f32 %v3182, 1.0
          %v3268 = vadd.f32 %v3184, 1.0
          %v3269 = vadd.f32 %v3186, 1.0
          %v3270 = vadd.f32 %v3188, 1.0
          %v3271 = vadd.f32 %v3190, 1.0
          %v3272 = vadd.f32 %v3192, 1.0
          %v3273 = vadd.f32 %v3194, 1.0
          %v3274 = vadd.f32 %v3196, 1.0
          %v3275 = vadd.f32 %v3198, 1.0
          %v3276 = vadd.f32 %v3200, 1.0
          %v3277 = vadd.f32 %v3202, 1.0
          %v3278 = vadd.f32 %v3204, 1.0
          %v3279 = vadd.f32 %v3206, 1.0
          %v3280 = vadd.f32 %v3208, 1.0
          %v3281 = vadd.f32 %v3210, 1.0
          %v3282 = vadd.f32 %v3212, 1.0
          %v3283 = vadd.f32 %v3214, 1.0
          %v3284 = vadd.f32 %v3216, 1.0
          %v3285 = vadd.f32 %v3218, 1.0
          %v3286 = vadd.f32 %v3220, 1.0
          %v3287 = vadd.f32 %v3222, 1.0
          %v3288 = vadd.f32 %v3224, 1.0
          %v3289 = vrcp.pop %v3225
          %v3290 = vmul.f32 1.0, %v3289
          %v3291 = vrcp.pop %v3226
          %v3292 = vmul.f32 1.0, %v3291
          %v3293 = vrcp.pop %v3227
          %v3294 = vmul.f32 1.0, %v3293
          %v3295 = vrcp.pop %v3228
          %v3296 = vmul.f32 1.0, %v3295
          %v3297 = vrcp.pop %v3229
          %v3298 = vmul.f32 1.0, %v3297
          %v3299 = vrcp.pop %v3230
          %v3300 = vmul.f32 1.0, %v3299
          %v3301 = vrcp.pop %v3231
          %v3302 = vmul.f32 1.0, %v3301
          %v3303 = vrcp.pop %v3232
          %v3304 = vmul.f32 1.0, %v3303
          %v3305 = vrcp.pop %v3233
          %v3306 = vmul.f32 1.0, %v3305
          %v3307 = vrcp.pop %v3234
          %v3308 = vmul.f32 1.0, %v3307
          %v3309 = vrcp.pop %v3235
          %v3310 = vmul.f32 1.0, %v3309
          %v3311 = vrcp.pop %v3236
          %v3312 = vmul.f32 1.0, %v3311
          %v3313 = vrcp.pop %v3237
          %v3314 = vmul.f32 1.0, %v3313
          %v3315 = vrcp.pop %v3238
          %v3316 = vmul.f32 1.0, %v3315
          %v3317 = vrcp.pop %v3239
          %v3318 = vmul.f32 1.0, %v3317
          %v3319 = vrcp.pop %v3240
          %v3320 = vmul.f32 1.0, %v3319
          %v3321 = vrcp.pop %v3241
          %v3322 = vmul.f32 1.0, %v3321
          %v3323 = vrcp.pop %v3242
          %v3324 = vmul.f32 1.0, %v3323
          %v3325 = vrcp.pop %v3243
          %v3326 = vmul.f32 1.0, %v3325
          %v3327 = vrcp.pop %v3244
          %v3328 = vmul.f32 1.0, %v3327
          %v3329 = vrcp.pop %v3245
          %v3330 = vmul.f32 1.0, %v3329
          %v3331 = vrcp.pop %v3246
          %v3332 = vmul.f32 1.0, %v3331
          %v3333 = vrcp.pop %v3247
          %v3334 = vmul.f32 1.0, %v3333
          %v3335 = vrcp.pop %v3248
          %v3336 = vmul.f32 1.0, %v3335
          %v3337 = vrcp.pop %v3249
          %v3338 = vmul.f32 1.0, %v3337
          %v3339 = vrcp.pop %v3250
          %v3340 = vmul.f32 1.0, %v3339
          %v3341 = vrcp.pop %v3251
          %v3342 = vmul.f32 1.0, %v3341
          %v3343 = vrcp.pop %v3252
          %v3344 = vmul.f32 1.0, %v3343
          %v3345 = vrcp.pop %v3253
          %v3346 = vmul.f32 1.0, %v3345
          %v3347 = vrcp.pop %v3254
          %v3348 = vmul.f32 1.0, %v3347
          %v3349 = vrcp.pop %v3255
          %v3350 = vmul.f32 1.0, %v3349
          %v3351 = vrcp.pop %v3256
          %v3352 = vmul.f32 1.0, %v3351
          %v3353 = vrcp.pop %v3257
          %v3354 = vmul.f32 1.0, %v3353
          %v3355 = vrcp.pop %v3258
          %v3356 = vmul.f32 1.0, %v3355
          %v3357 = vrcp.pop %v3259
          %v3358 = vmul.f32 1.0, %v3357
          %v3359 = vrcp.pop %v3260
          %v3360 = vmul.f32 1.0, %v3359
          %v3361 = vrcp.pop %v3261
          %v3362 = vmul.f32 1.0, %v3361
          %v3363 = vrcp.pop %v3262
          %v3364 = vmul.f32 1.0, %v3363
          %v3365 = vrcp.pop %v3263
          %v3366 = vmul.f32 1.0, %v3365
          %v3367 = vrcp.pop %v3264
          %v3368 = vmul.f32 1.0, %v3367
          %v3369 = vrcp.pop %v3265
          %v3370 = vmul.f32 1.0, %v3369
          %v3371 = vrcp.pop %v3266
          %v3372 = vmul.f32 1.0, %v3371
          %v3373 = vrcp.pop %v3267
          %v3374 = vmul.f32 1.0, %v3373
          %v3375 = vrcp.pop %v3268
          %v3376 = vmul.f32 1.0, %v3375
          %v3377 = vrcp.pop %v3269
          %v3378 = vmul.f32 1.0, %v3377
          %v3379 = vrcp.pop %v3270
          %v3380 = vmul.f32 1.0, %v3379
          %v3381 = vrcp.pop %v3271
          %v3382 = vmul.f32 1.0, %v3381
          %v3383 = vrcp.pop %v3272
          %v3384 = vmul.f32 1.0, %v3383
          %v3385 = vrcp.pop %v3273
          %v3386 = vmul.f32 1.0, %v3385
          %v3387 = vrcp.pop %v3274
          %v3388 = vmul.f32 1.0, %v3387
          %v3389 = vrcp.pop %v3275
          %v3390 = vmul.f32 1.0, %v3389
          %v3391 = vrcp.pop %v3276
          %v3392 = vmul.f32 1.0, %v3391
          %v3393 = vrcp.pop %v3277
          %v3394 = vmul.f32 1.0, %v3393
          %v3395 = vrcp.pop %v3278
          %v3396 = vmul.f32 1.0, %v3395
          %v3397 = vrcp.pop %v3279
          %v3398 = vmul.f32 1.0, %v3397
          %v3399 = vrcp.pop %v3280
          %v3400 = vmul.f32 1.0, %v3399
          %v3401 = vrcp.pop %v3281
          %v3402 = vmul.f32 1.0, %v3401
          %v3403 = vrcp.pop %v3282
          %v3404 = vmul.f32 1.0, %v3403
          %v3405 = vrcp.pop %v3283
          %v3406 = vmul.f32 1.0, %v3405
          %v3407 = vrcp.pop %v3284
          %v3408 = vmul.f32 1.0, %v3407
          %v3409 = vrcp.pop %v3285
          %v3410 = vmul.f32 1.0, %v3409
          %v3411 = vrcp.pop %v3286
          %v3412 = vmul.f32 1.0, %v3411
          %v3413 = vrcp.pop %v3287
          %v3414 = vmul.f32 1.0, %v3413
          %v3415 = vrcp.pop %v3288
          %v3416 = vmul.f32 1.0, %v3415
          %v3417 = vmul.f32 %v2969, %v3290
          %v3418 = vmul.f32 %v2970, %v3292
          %v3419 = vmul.f32 %v2971, %v3294
          %v3420 = vmul.f32 %v2972, %v3296
          %v3421 = vmul.f32 %v2973, %v3298
          %v3422 = vmul.f32 %v2974, %v3300
          %v3423 = vmul.f32 %v2975, %v3302
          %v3424 = vmul.f32 %v2976, %v3304
          %v3425 = vmul.f32 %v2977, %v3306
          %v3426 = vmul.f32 %v2978, %v3308
          %v3427 = vmul.f32 %v2979, %v3310
          %v3428 = vmul.f32 %v2980, %v3312
          %v3429 = vmul.f32 %v2981, %v3314
          %v3430 = vmul.f32 %v2982, %v3316
          %v3431 = vmul.f32 %v2983, %v3318
          %v3432 = vmul.f32 %v2984, %v3320
          %v3433 = vmul.f32 %v2985, %v3322
          %v3434 = vmul.f32 %v2986, %v3324
          %v3435 = vmul.f32 %v2987, %v3326
          %v3436 = vmul.f32 %v2988, %v3328
          %v3437 = vmul.f32 %v2989, %v3330
          %v3438 = vmul.f32 %v2990, %v3332
          %v3439 = vmul.f32 %v2991, %v3334
          %v3440 = vmul.f32 %v2992, %v3336
          %v3441 = vmul.f32 %v2993, %v3338
          %v3442 = vmul.f32 %v2994, %v3340
          %v3443 = vmul.f32 %v2995, %v3342
          %v3444 = vmul.f32 %v2996, %v3344
          %v3445 = vmul.f32 %v2997, %v3346
          %v3446 = vmul.f32 %v2998, %v3348
          %v3447 = vmul.f32 %v2999, %v3350
          %v3448 = vmul.f32 %v3000, %v3352
          %v3449 = vmul.f32 %v3001, %v3354
          %v3450 = vmul.f32 %v3002, %v3356
          %v3451 = vmul.f32 %v3003, %v3358
          %v3452 = vmul.f32 %v3004, %v3360
          %v3453 = vmul.f32 %v3005, %v3362
          %v3454 = vmul.f32 %v3006, %v3364
          %v3455 = vmul.f32 %v3007, %v3366
          %v3456 = vmul.f32 %v3008, %v3368
          %v3457 = vmul.f32 %v3009, %v3370
          %v3458 = vmul.f32 %v3010, %v3372
          %v3459 = vmul.f32 %v3011, %v3374
          %v3460 = vmul.f32 %v3012, %v3376
          %v3461 = vmul.f32 %v3013, %v3378
          %v3462 = vmul.f32 %v3014, %v3380
          %v3463 = vmul.f32 %v3015, %v3382
          %v3464 = vmul.f32 %v3016, %v3384
          %v3465 = vmul.f32 %v3017, %v3386
          %v3466 = vmul.f32 %v3018, %v3388
          %v3467 = vmul.f32 %v3019, %v3390
          %v3468 = vmul.f32 %v3020, %v3392
          %v3469 = vmul.f32 %v3021, %v3394
          %v3470 = vmul.f32 %v3022, %v3396
          %v3471 = vmul.f32 %v3023, %v3398
          %v3472 = vmul.f32 %v3024, %v3400
          %v3473 = vmul.f32 %v3025, %v3402
          %v3474 = vmul.f32 %v3026, %v3404
          %v3475 = vmul.f32 %v3027, %v3406
          %v3476 = vmul.f32 %v3028, %v3408
          %v3477 = vmul.f32 %v3029, %v3410
          %v3478 = vmul.f32 %v3030, %v3412
          %v3479 = vmul.f32 %v3031, %v3414
          %v3480 = vmul.f32 %v3032, %v3416
          %3481 = vst [vmem:[%s417] sm:$0xff] %v3417
          %3482 = vst [vmem:[%s417 + $0x8] sm:$0xff] %v3418
          %3483 = vst [vmem:[%s417 + $0x10] sm:$0xff] %v3419
          %3484 = vst [vmem:[%s417 + $0x18] sm:$0xff] %v3420
          %3485 = vst [vmem:[%s417 + $0x20] sm:$0xff] %v3421
          %3486 = vst [vmem:[%s417 + $0x28] sm:$0xff] %v3422
          %3487 = vst [vmem:[%s417 + $0x30] sm:$0xff] %v3423
          %3488 = vst [vmem:[%s417 + $0x38] sm:$0xff] %v3424
          %3489 = vst [vmem:[%s417 + $0x40] sm:$0xff] %v3425
          %3490 = vst [vmem:[%s417 + $0x48] sm:$0xff] %v3426
          %3491 = vst [vmem:[%s417 + $0x50] sm:$0xff] %v3427
          %3492 = vst [vmem:[%s417 + $0x58] sm:$0xff] %v3428
          %3493 = vst [vmem:[%s417 + $0x60] sm:$0xff] %v3429
          %3494 = vst [vmem:[%s417 + $0x68] sm:$0xff] %v3430
          %3495 = vst [vmem:[%s417 + $0x70] sm:$0xff] %v3431
          %3496 = vst [vmem:[%s417 + $0x78] sm:$0xff] %v3432
          %3497 = vst [vmem:[%s417 + $0x80] sm:$0xff] %v3433
          %3498 = vst [vmem:[%s417 + $0x88] sm:$0xff] %v3434
          %3499 = vst [vmem:[%s417 + $0x90] sm:$0xff] %v3435
          %3500 = vst [vmem:[%s417 + $0x98] sm:$0xff] %v3436
          %3501 = vst [vmem:[%s417 + $0xa0] sm:$0xff] %v3437
          %3502 = vst [vmem:[%s417 + $0xa8] sm:$0xff] %v3438
          %3503 = vst [vmem:[%s417 + $0xb0] sm:$0xff] %v3439
          %3504 = vst [vmem:[%s417 + $0xb8] sm:$0xff] %v3440
          %3505 = vst [vmem:[%s417 + $0xc0] sm:$0xff] %v3441
          %3506 = vst [vmem:[%s417 + $0xc8] sm:$0xff] %v3442
          %3507 = vst [vmem:[%s417 + $0xd0] sm:$0xff] %v3443
          %3508 = vst [vmem:[%s417 + $0xd8] sm:$0xff] %v3444
          %3509 = vst [vmem:[%s417 + $0xe0] sm:$0xff] %v3445
          %3510 = vst [vmem:[%s417 + $0xe8] sm:$0xff] %v3446
          %3511 = vst [vmem:[%s417 + $0xf0] sm:$0xff] %v3447
          %3512 = vst [vmem:[%s417 + $0xf8] sm:$0xff] %v3448
          %3513 = vst [vmem:[%s417 + $0x100] sm:$0xff] %v3449
          %3514 = vst [vmem:[%s417 + $0x108] sm:$0xff] %v3450
          %3515 = vst [vmem:[%s417 + $0x110] sm:$0xff] %v3451
          %3516 = vst [vmem:[%s417 + $0x118] sm:$0xff] %v3452
          %3517 = vst [vmem:[%s417 + $0x120] sm:$0xff] %v3453
          %3518 = vst [vmem:[%s417 + $0x128] sm:$0xff] %v3454
          %3519 = vst [vmem:[%s417 + $0x130] sm:$0xff] %v3455
          %3520 = vst [vmem:[%s417 + $0x138] sm:$0xff] %v3456
          %3521 = vst [vmem:[%s417 + $0x140] sm:$0xff] %v3457
          %3522 = vst [vmem:[%s417 + $0x148] sm:$0xff] %v3458
          %3523 = vst [vmem:[%s417 + $0x150] sm:$0xff] %v3459
          %3524 = vst [vmem:[%s417 + $0x158] sm:$0xff] %v3460
          %3525 = vst [vmem:[%s417 + $0x160] sm:$0xff] %v3461
          %3526 = vst [vmem:[%s417 + $0x168] sm:$0xff] %v3462
          %3527 = vst [vmem:[%s417 + $0x170] sm:$0xff] %v3463
          %3528 = vst [vmem:[%s417 + $0x178] sm:$0xff] %v3464
          %3529 = vst [vmem:[%s417 + $0x180] sm:$0xff] %v3465
          %3530 = vst [vmem:[%s417 + $0x188] sm:$0xff] %v3466
          %3531 = vst [vmem:[%s417 + $0x190] sm:$0xff] %v3467
          %3532 = vst [vmem:[%s417 + $0x198] sm:$0xff] %v3468
          %3533 = vst [vmem:[%s417 + $0x1a0] sm:$0xff] %v3469
          %3534 = vst [vmem:[%s417 + $0x1a8] sm:$0xff] %v3470
          %3535 = vst [vmem:[%s417 + $0x1b0] sm:$0xff] %v3471
          %3536 = vst [vmem:[%s417 + $0x1b8] sm:$0xff] %v3472
          %3537 = vst [vmem:[%s417 + $0x1c0] sm:$0xff] %v3473
          %3538 = vst [vmem:[%s417 + $0x1c8] sm:$0xff] %v3474
          %3539 = vst [vmem:[%s417 + $0x1d0] sm:$0xff] %v3475
          %3540 = vst [vmem:[%s417 + $0x1d8] sm:$0xff] %v3476
          %3541 = vst [vmem:[%s417 + $0x1e0] sm:$0xff] %v3477
          %3542 = vst [vmem:[%s417 + $0x1e8] sm:$0xff] %v3478
          %3543 = vst [vmem:[%s417 + $0x1f0] sm:$0xff] %v3479
          %3544 = vst [vmem:[%s417 + $0x1f8] sm:$0xff] %v3480
        $region68: #{tpu_custom_call.1} parent=47 // pred_fallthru
          _
        %s3545 = sand.u32 %s242, 1
        %s3546 = scalar_lea.sflag [#allocation6], %s3545
        %s3547 = sand.u32 %s242, 1
        %s3548 = smul.addr %s3547, 512
        %s3549 = scalar_lea.vmem [#allocation10], %s3548
        // Predicated region
        $region69: #{tpu_custom_call.1} parent=47 // pred_check
          %p3550 = pneg %p252
        $region70: #{tpu_custom_call.1} parent=47 // pred_check_branch
          %3552 = sbr.rel (%p3550) target = $region72
        $region71: #{tpu_custom_call.1} parent=47 // pred_region
          %s3553 = smul.u32 64, %s30
          %s3555 = ssub.s32 8192, 8192
          %3556 = vsyncadd %s3546, %s3555
          %s3557 = sadd.s32 %s31, %s3553
          %s3558 = smul.addr %s3557, 128
          %s3559 = scalar_lea.hbm %s7, %s3558
          %s3560 = sshll.u32 %s3549, 4
          %s3561 = int_to_ptr.vmem [resolvable:$true] %s3560
          %3566 = dma.vmem_to_hbm [thread:$0]  %s3561, 8192, %s3559, %s3546, 128, 128, 8
        $region72: #{tpu_custom_call.1} parent=47 // pred_fallthru
          _
      $region48: #{tpu_custom_call.1} parent=5 // pred_fallthru
        _
      %p3567 = scmp.le.s32.totalorder 2, %s20
      // Predicated region
      $region73: #{tpu_custom_call.1} parent=5 // pred_check
        %p3568 = pneg %p3567
      $region74: #{tpu_custom_call.1} parent=5 // pred_check_branch
        %3570 = sbr.rel (%p3568) target = $region76
      $region75: #{tpu_custom_call.1} parent=5 // pred_region
        %s3571 = ssub.s32 %s20, 2
        // Predicated region
        $region77: #{tpu_custom_call.1} parent=75 // pred_check
          %p3572 = pneg %p258
        $region78: #{tpu_custom_call.1} parent=75 // pred_check_branch
          %3574 = sbr.rel (%p3572) target = $region80
        $region79: #{tpu_custom_call.1} parent=75 // pred_region
          %s3575 = sand.u32 %s243, 1
          %s3576 = scalar_lea.sflag [#allocation6], %s3575
          %s3577 = sand.u32 %s243, 1
          %s3578 = smul.addr %s3577, 512
          %s3579 = scalar_lea.vmem [#allocation10], %s3578
          %3580 = dma.done %s3576, 8192
        $region80: #{tpu_custom_call.1} parent=75 // pred_fallthru
          _
      $region76: #{tpu_custom_call.1} parent=5 // pred_fallthru
        _
    $region6: #{tpu_custom_call.1} parent=1 // loop_footer
      %s24 = sadd.s32 1, %s20
    $region7: #{tpu_custom_call.1} parent=1 // loop_footer_branch
      %19 = sbr.rel target = $region3
    $region8: #{tpu_custom_call.1} parent=1 // loop_exit
      _
    %3581 = vsyncpa [#allocation5], 1
    %s3582 = scalar_lea.sflag [#allocation5], 1
    %3583 = vsyncpa %s3582, 1
    %3584 = vsyncpa [#allocation8], 1
    %3585 = vsyncpa [#allocation6], 1
    %s3586 = scalar_lea.sflag [#allocation6], 1
    %3587 = vsyncpa %s3586, 1

</llo_original>
